<compile_context>
chip_gen: v6e
topology: v6e:2x2x1
jax: 0.10.0
libtpu: 0.0.40
codegen_flags: <defaults>
</compile_context>

<pallas_src>
import functools

import jax
import jax.numpy as jnp
from jax.experimental import pallas as pl
from jax.experimental.pallas import tpu as pltpu

EPS = 1e-5  # torch.nn.GroupNorm default eps


def _round_up(a, b):
    return (a + b - 1) // b * b


# ----------------------------------------------------------------------------
# In-kernel GroupNorm(1, D) over rows of z: 2 reductions + 4 full-width VPU
# passes; rsqrt sits on the EUP slot.  Padded feature columns of z are exactly
# zero, so reducing over the padded width while dividing by the true D is exact.
# ----------------------------------------------------------------------------
def _groupnorm(z, gamma, beta, d_true):
    inv_d = 1.0 / d_true
    mean = jnp.sum(z, axis=-1, keepdims=True) * inv_d            # (tm, 1)
    msq = jnp.sum(z * z, axis=-1, keepdims=True) * inv_d          # (tm, 1)
    var = jnp.maximum(msq - mean * mean, 0.0)
    rstd = jax.lax.rsqrt(var + EPS)                                # EUP
    mr = mean * rstd                                               # (tm, 1)
    return (z * rstd - mr) * gamma + beta                          # 4 VPU passes


def _lrb_trans_kernel(x_ref, wcat_ref, w2_ref, gb_ref, out_ref, *,
                      out_p, d_true, mxu_dtype):
    """in_dim != out_dim: trans = Linear(in, out, bias=False) + GroupNorm(1, out)."""
    x = x_ref[...]                                   # (tm, in_p), already mxu dtype
    gb = gb_ref[...]                                 # (8, out_p) f32 packed gamma/beta

    # One fused MXU pass covers linear1 and trans.0 (they share x).
    z = jnp.dot(x, wcat_ref[...], preferred_element_type=jnp.float32)  # (tm, 2*out_p)
    z1 = z[:, :out_p]                                # lane-aligned (out_p % 128 == 0)
    zt = z[:, out_p:]

    feat = jnp.maximum(_groupnorm(z1, gb[0:1], gb[1:2], d_true), 0.0)
    z2 = jnp.dot(feat.astype(mxu_dtype), w2_ref[...],
                 preferred_element_type=jnp.float32)
    main = _groupnorm(z2, gb[2:3], gb[3:4], d_true)
    res = _groupnorm(zt, gb[4:5], gb[5:6], d_true)

    out_ref[...] = jnp.maximum(main + res, 0.0).astype(out_ref.dtype)


def _lrb_identity_kernel(x_ref, w1_ref, w2_ref, gb_ref, out_ref, *,
                         d_true, mxu_dtype):
    """in_dim == out_dim: trans = Identity (residual uses original-precision x)."""
    x = x_ref[...]                                   # original dtype (f32) for residual
    gb = gb_ref[...]

    z1 = jnp.dot(x.astype(mxu_dtype), w1_ref[...],
                 preferred_element_type=jnp.float32)
    feat = jnp.maximum(_groupnorm(z1, gb[0:1], gb[1:2], d_true), 0.0)
    z2 = jnp.dot(feat.astype(mxu_dtype), w2_ref[...],
                 preferred_element_type=jnp.float32)
    main = _groupnorm(z2, gb[2:3], gb[3:4], d_true)

    out_ref[...] = jnp.maximum(main + x.astype(jnp.float32), 0.0).astype(out_ref.dtype)


# ----------------------------------------------------------------------------
# One-time parameter preparation (outside the per-call jitted path):
# transpose to (in, out), pad to lane-dense 128-multiples, fuse W1||Wt along
# the output axis, pack all gamma/beta rows into one (8, out_p) operand.
# ----------------------------------------------------------------------------
def prepare_params(params, *, use_bf16=True):
    has_trans = "trans.0.weight" in params
    w1 = params["linear1.weight"]                     # (out, in)  PyTorch layout
    w2 = params["linear2.weight"]                     # (out, out)
    out_dim, in_dim = w1.shape
    in_p = _round_up(in_dim, 128)
    out_p = _round_up(out_dim, 128)
    wdtype = jnp.bfloat16 if use_bf16 else jnp.float32

    def pad_wT(w, rows, cols):
        wt = w.T                                      # (in, out) for row-major x @ W
        return jnp.pad(wt, ((0, rows - wt.shape[0]), (0, cols - wt.shape[1])))

    def pad_vec(v):                                   # zero pad => padded cols stay 0
        v = v.reshape(-1).astype(jnp.float32)
        return jnp.pad(v, (0, out_p - v.shape[0]))

    w2p = pad_wT(w2, out_p, out_p).astype(wdtype)
    gb_rows = [pad_vec(params["norm1.weight"]), pad_vec(params["norm1.bias"]),
               pad_vec(params["norm2.weight"]), pad_vec(params["norm2.bias"])]
    if has_trans:
        w1p = pad_wT(w1, in_p, out_p)
        wtp = pad_wT(params["trans.0.weight"], in_p, out_p)
        w_x = jnp.concatenate([w1p, wtp], axis=1).astype(wdtype)   # (in_p, 2*out_p)
        gb_rows += [pad_vec(params["trans.1.weight"]),
                    pad_vec(params["trans.1.bias"])]
    else:
        w_x = pad_wT(w1, in_p, out_p).astype(wdtype)                # (in_p, out_p)
        gb_rows += [jnp.zeros((out_p,), jnp.float32)] * 2
    gb_rows += [jnp.zeros((out_p,), jnp.float32)] * (8 - len(gb_rows))
    gb = jnp.stack(gb_rows)                                         # (8, out_p)

    meta = dict(has_trans=has_trans, in_dim=in_dim, out_dim=out_dim,
                in_p=in_p, out_p=out_p, use_bf16=use_bf16)
    return (w_x, w2p, gb), meta


# ----------------------------------------------------------------------------
# Jitted kernel launch.
# ----------------------------------------------------------------------------
@functools.partial(
    jax.jit,
    static_argnames=("has_trans", "in_dim", "out_dim", "in_p", "out_p",
                     "use_bf16", "tm", "single_buffer_weights"))
def _lrb_call(x, w_x, w2p, gb, *, has_trans, in_dim, out_dim, in_p, out_p,
              use_bf16, tm, single_buffer_weights):
    M = x.shape[0]
    out_dtype = x.dtype
    mxu_dtype = jnp.bfloat16 if use_bf16 else jnp.float32

    # Row tile: large by default (amortize ~0.35us/step + fill the MXU), but
    # capped so the grid has >=2 steps when M allows (v7x megacore sharding).
    M8 = _round_up(max(M, 1), 8)
    tm_cap = max(8, _round_up(pl.cdiv(M8, 2), 8))
    tm_eff = max(8, min(_round_up(tm, 8), tm_cap))
    Mp = _round_up(M, tm_eff)
    grid = (Mp // tm_eff,)

    # Pad rows to Mp and features to lane-dense in_p (padded rows/cols are zero
    # and sliced off afterwards; padded GN columns stay exactly zero).
    x_in = x
    if Mp != M or in_p != in_dim:
        x_in = jnp.pad(x, ((0, Mp - M), (0, in_p - in_dim)))
    if has_trans and x_in.dtype != mxu_dtype:
        # trans branch never needs x at full precision inside the kernel.
        x_in = x_in.astype(mxu_dtype)

    row_in = pl.BlockSpec((tm_eff, in_p), lambda i: (i, 0))
    row_out = pl.BlockSpec((tm_eff, out_p), lambda i: (i, 0))

    def resident(arr):
        # Grid-invariant operand: full block.  Single pipeline buffer when
        # supported (halves resident-weight VMEM; matters on v7x's 64 MiB).
        if single_buffer_weights:
            return pl.BlockSpec(arr.shape, lambda i: (0, 0),
                                pipeline_mode=pl.Buffered(1))
        return pl.BlockSpec(arr.shape, lambda i: (0, 0))

    operands = (x_in, w_x, w2p, gb)
    in_specs = [row_in, resident(w_x), resident(w2p), resident(gb)]

    if has_trans:
        kernel = functools.partial(_lrb_trans_kernel, out_p=out_p,
                                   d_true=out_dim, mxu_dtype=mxu_dtype)
    else:
        kernel = functools.partial(_lrb_identity_kernel,
                                   d_true=out_dim, mxu_dtype=mxu_dtype)

    # VMEM budget: resident weights (x1 or x2 buffers) + double-buffered x/out
    # tiles + ~50% headroom, clamped to ~75% of physical VMEM so the same code
    # respects v7x (64 MiB) and exploits v5e/v6e (128 MiB).
    wbuf = 1 if single_buffer_weights else 2
    weight_bytes = wbuf * sum(a.size * a.dtype.itemsize for a in (w_x, w2p, gb))
    io_bytes = 2 * tm_eff * (in_p * x_in.dtype.itemsize
                             + out_p * jnp.dtype(out_dtype).itemsize)
    try:
        phys_vmem = pltpu.get_tpu_info().vmem_capacity_bytes
    except Exception:
        phys_vmem = 64 << 20  # conservative (v7x per-core)
    vmem_limit = int(min(max(int(1.5 * (weight_bytes + io_bytes)), 16 << 20),
                         int(0.75 * phys_vmem)))

    out = pl.pallas_call(
        kernel,
        out_shape=jax.ShapeDtypeStruct((Mp, out_p), out_dtype),
        grid_spec=pltpu.PrefetchScalarGridSpec(
            num_scalar_prefetch=0,
            grid=grid,
            in_specs=in_specs,
            out_specs=row_out,
        ),
        compiler_params=pltpu.CompilerParams(
            dimension_semantics=("parallel",),   # shard rows across TCs on v7x
            vmem_limit_bytes=vmem_limit,
        ),
    )(*operands)

    if Mp != M or out_p != out_dim:
        out = out[:M, :out_dim]
    return out


def linear_residual_block(x, params, *, tm=512, use_bf16=True):
    """x: (M, in_dim) rows -> (M, out_dim).  params: PyTorch-style state dict."""
    operands, meta = prepare_params(params, use_bf16=use_bf16)
    try:
        return _lrb_call(x, *operands, tm=tm, single_buffer_weights=True, **meta)
    except Exception:
        # If this JAX build rejects pipeline_mode=pl.Buffered(1), fall back to
        # default double-buffered resident weights (correct, more VMEM).
        return _lrb_call(x, *operands, tm=tm, single_buffer_weights=False, **meta)


# ----------------------------------------------------------------------------
# Synthetic parameters + pure-JAX references for verification.
# ----------------------------------------------------------------------------
def init_params(key, in_dim, out_dim):
    ks = jax.random.split(key, 7)
    p = {
        "linear1.weight": jax.random.normal(ks[0], (out_dim, in_dim), jnp.float32)
                          / jnp.sqrt(in_dim),
        "norm1.weight": 1.0 + 0.1 * jax.random.normal(ks[1], (out_dim,), jnp.float32),
        "norm1.bias": 0.05 * jax.random.normal(ks[2], (out_dim,), jnp.float32),
        "linear2.weight": jax.random.normal(ks[3], (out_dim, out_dim), jnp.float32)
                          / jnp.sqrt(out_dim),
        "norm2.weight": 1.0 + 0.1 * jax.random.normal(ks[4], (out_dim,), jnp.float32),
        "norm2.bias": 0.05 * jax.random.normal(ks[5], (out_dim,), jnp.float32),
    }
    if in_dim != out_dim:
        p["trans.0.weight"] = (jax.random.normal(ks[6], (out_dim, in_dim), jnp.float32)
                               / jnp.sqrt(in_dim))
        p["trans.1.weight"] = jnp.ones((out_dim,), jnp.float32)
        p["trans.1.bias"] = jnp.zeros((out_dim,), jnp.float32)
    return p


def _gn_ref(z, gamma, beta):
    m = z.mean(-1, keepdims=True)
    v = ((z - m) ** 2).mean(-1, keepdims=True)
    return (z - m) / jnp.sqrt(v + EPS) * gamma + beta


def reference_jax(x, params, matmul_dtype=None):
    """Pure-JAX reference mirroring the PyTorch forward.
    matmul_dtype=jnp.bfloat16 reproduces the kernel's bf16 MXU inputs."""
    cast = (lambda a: a.astype(matmul_dtype)) if matmul_dtype is not None else (lambda a: a)

    def lin(a, w):  # nn.Linear(bias=False): a @ W.T, f32 accumulation
        return jnp.dot(cast(a), cast(w).T, preferred_element_type=jnp.float32)

    feat = jnp.maximum(_gn_ref(lin(x, params["linear1.weight"]),
                               params["norm1.weight"], params["norm1.bias"]), 0.0)
    feat = _gn_ref(lin(feat, params["linear2.weight"]),
                   params["norm2.weight"], params["norm2.bias"])
    if "trans.0.weight" in params:
        trans = _gn_ref(lin(x, params["trans.0.weight"]),
                        params["trans.1.weight"], params["trans.1.bias"])
    else:
        trans = x
    return jnp.maximum(feat + trans, 0.0)


if __name__ == "__main__":
    key = jax.random.PRNGKey(0)
    k1, k2, k3, k4, k5, k6 = jax.random.split(key, 6)

    def check(x, params, label):
        out = jax.block_until_ready(linear_residual_block(x, params))
        ref_bf16 = reference_jax(x, params, matmul_dtype=jnp.bfloat16)
        ref_f32 = reference_jax(x, params)
        assert out.shape == ref_f32.shape, f"{label}: shape mismatch"
        assert jnp.allclose(out, ref_bf16, atol=2e-3, rtol=2e-3), \
            f"{label}: mismatch vs bf16-matched reference"
        assert jnp.allclose(out, ref_f32, atol=1e-1, rtol=1e-1), \
            f"{label}: drifted from f32 reference"

    # Case 1: in_dim != out_dim (trans = Linear + GroupNorm).  Ragged row count
    # exercises row padding, in_dim=64 exercises K padding to 128, and the
    # tm clamp yields a 2-step parallel grid.
    x1 = jax.random.normal(k1, (250, 64), jnp.float32)
    check(x1, init_params(k2, 64, 128), "trans")

    # Case 2: in_dim == out_dim (trans = Identity); residual add in f32.
    x2 = jax.random.normal(k3, (256, 128), jnp.float32)
    check(x2, init_params(k4, 128, 128), "identity")

    # Case 3: non-128-multiple dims exercise lane padding of in_dim/out_dim.
    x3 = jax.random.normal(k5, (64, 48), jnp.float32)
    check(x3, init_params(k6, 48, 96), "trans-padded")

    print("KERNEL_OK")
</pallas_src>

<mosaic_0001>
module attributes {stable_mosaic.version = 11 : i64} {
  func.func @_lrb_trans_kernel(%arg0: i32, %arg1: memref<128x128xbf16, #tpu.memory_space<vmem>>, %arg2: memref<128x256xbf16, #tpu.memory_space<vmem>>, %arg3: memref<128x128xbf16, #tpu.memory_space<vmem>>, %arg4: memref<8x128xf32, #tpu.memory_space<vmem>>, %arg5: memref<128x128xf32, #tpu.memory_space<vmem>>) attributes {dimension_semantics = [#tpu.dimension_semantics<parallel>], iteration_bounds = array<i64: 2>, scalar_prefetch = 0 : i64, scratch_operands = 0 : i64, tpu.core_type = #tpu.core_type<tc>, window_params = [{transform_indices = @transform_0, window_bounds = array<i64: 128, 128>}, {pipeline_mode = #tpu.pipeline_mode<synchronous>, transform_indices = @transform_1, window_bounds = array<i64: 128, 256>}, {pipeline_mode = #tpu.pipeline_mode<synchronous>, transform_indices = @transform_2, window_bounds = array<i64: 128, 128>}, {pipeline_mode = #tpu.pipeline_mode<synchronous>, transform_indices = @transform_3, window_bounds = array<i64: 8, 128>}, {transform_indices = @transform_4, window_bounds = array<i64: 128, 128>}]} {
    %c0 = arith.constant 0 : index
    %c0_0 = arith.constant 0 : index
    %0 = vector.load %arg1[%c0, %c0_0] : memref<128x128xbf16, #tpu.memory_space<vmem>>, vector<128x128xbf16>
    %c0_1 = arith.constant 0 : index
    %c0_2 = arith.constant 0 : index
    %1 = vector.load %arg4[%c0_1, %c0_2] : memref<8x128xf32, #tpu.memory_space<vmem>>, vector<8x128xf32>
    %c0_3 = arith.constant 0 : index
    %c0_4 = arith.constant 0 : index
    %2 = vector.load %arg2[%c0_3, %c0_4] : memref<128x256xbf16, #tpu.memory_space<vmem>>, vector<128x256xbf16>
    %cst = arith.constant dense<0.000000e+00> : vector<128x256xf32>
    %3 = tpu.matmul %0, %2, %cst {dimension_numbers = #tpu.dot_dimension_numbers<[1], [0], [0], [1], [0, 0, 1, 1], [], []>} : vector<128x128xbf16>, vector<128x256xbf16>, vector<128x256xf32> -> vector<128x256xf32>
    %4 = vector.extract_strided_slice %3 {offsets = [0, 0], sizes = [128, 128], strides = [1, 1]} : vector<128x256xf32> to vector<128x128xf32>
    %5 = vector.extract_strided_slice %3 {offsets = [0, 128], sizes = [128, 128], strides = [1, 1]} : vector<128x256xf32> to vector<128x128xf32>
    %6 = vector.extract_strided_slice %1 {offsets = [0, 0], sizes = [1, 128], strides = [1, 1]} : vector<8x128xf32> to vector<1x128xf32>
    %7 = vector.extract_strided_slice %1 {offsets = [1, 0], sizes = [1, 128], strides = [1, 1]} : vector<8x128xf32> to vector<1x128xf32>
    %cst_5 = arith.constant dense<0.000000e+00> : vector<128xf32>
    %8 = vector.multi_reduction <add>, %4, %cst_5 [1] : vector<128x128xf32> to vector<128xf32>
    %9 = vector.shape_cast %8 : vector<128xf32> to vector<128x1xf32>
    %cst_6 = arith.constant 7.812500e-03 : f32
    %10 = vector.broadcast %cst_6 : f32 to vector<128x1xf32>
    %11 = arith.mulf %9, %10 : vector<128x1xf32>
    %12 = arith.mulf %4, %4 : vector<128x128xf32>
    %cst_7 = arith.constant dense<0.000000e+00> : vector<128xf32>
    %13 = vector.multi_reduction <add>, %12, %cst_7 [1] : vector<128x128xf32> to vector<128xf32>
    %14 = vector.shape_cast %13 : vector<128xf32> to vector<128x1xf32>
    %cst_8 = arith.constant 7.812500e-03 : f32
    %15 = vector.broadcast %cst_8 : f32 to vector<128x1xf32>
    %16 = arith.mulf %14, %15 : vector<128x1xf32>
    %17 = arith.mulf %11, %11 : vector<128x1xf32>
    %18 = arith.subf %16, %17 : vector<128x1xf32>
    %cst_9 = arith.constant 0.000000e+00 : f32
    %19 = vector.broadcast %cst_9 : f32 to vector<128x1xf32>
    %20 = arith.maximumf %18, %19 : vector<128x1xf32>
    %cst_10 = arith.constant 9.99999974E-6 : f32
    %21 = vector.broadcast %cst_10 : f32 to vector<128x1xf32>
    %22 = arith.addf %20, %21 : vector<128x1xf32>
    %23 = math.rsqrt %22 : vector<128x1xf32>
    %24 = arith.mulf %11, %23 : vector<128x1xf32>
    %25 = vector.broadcast %23 : vector<128x1xf32> to vector<128x128xf32>
    %26 = arith.mulf %4, %25 : vector<128x128xf32>
    %27 = vector.broadcast %24 : vector<128x1xf32> to vector<128x128xf32>
    %28 = arith.subf %26, %27 : vector<128x128xf32>
    %29 = vector.broadcast %6 : vector<1x128xf32> to vector<128x128xf32>
    %30 = arith.mulf %28, %29 : vector<128x128xf32>
    %31 = vector.broadcast %7 : vector<1x128xf32> to vector<128x128xf32>
    %32 = arith.addf %30, %31 : vector<128x128xf32>
    %cst_11 = arith.constant 0.000000e+00 : f32
    %33 = vector.broadcast %cst_11 : f32 to vector<128x128xf32>
    %34 = arith.maximumf %32, %33 : vector<128x128xf32>
    %35 = arith.truncf %34 : vector<128x128xf32> to vector<128x128xbf16>
    %c0_12 = arith.constant 0 : index
    %c0_13 = arith.constant 0 : index
    %36 = vector.load %arg3[%c0_12, %c0_13] : memref<128x128xbf16, #tpu.memory_space<vmem>>, vector<128x128xbf16>
    %cst_14 = arith.constant dense<0.000000e+00> : vector<128x128xf32>
    %37 = tpu.matmul %35, %36, %cst_14 {dimension_numbers = #tpu.dot_dimension_numbers<[1], [0], [0], [1], [0, 0, 1, 1], [], []>} : vector<128x128xbf16>, vector<128x128xbf16>, vector<128x128xf32> -> vector<128x128xf32>
    %38 = vector.extract_strided_slice %1 {offsets = [2, 0], sizes = [1, 128], strides = [1, 1]} : vector<8x128xf32> to vector<1x128xf32>
    %39 = vector.extract_strided_slice %1 {offsets = [3, 0], sizes = [1, 128], strides = [1, 1]} : vector<8x128xf32> to vector<1x128xf32>
    %cst_15 = arith.constant dense<0.000000e+00> : vector<128xf32>
    %40 = vector.multi_reduction <add>, %37, %cst_15 [1] : vector<128x128xf32> to vector<128xf32>
    %41 = vector.shape_cast %40 : vector<128xf32> to vector<128x1xf32>
    %cst_16 = arith.constant 7.812500e-03 : f32
    %42 = vector.broadcast %cst_16 : f32 to vector<128x1xf32>
    %43 = arith.mulf %41, %42 : vector<128x1xf32>
    %44 = arith.mulf %37, %37 : vector<128x128xf32>
    %cst_17 = arith.constant dense<0.000000e+00> : vector<128xf32>
    %45 = vector.multi_reduction <add>, %44, %cst_17 [1] : vector<128x128xf32> to vector<128xf32>
    %46 = vector.shape_cast %45 : vector<128xf32> to vector<128x1xf32>
    %cst_18 = arith.constant 7.812500e-03 : f32
    %47 = vector.broadcast %cst_18 : f32 to vector<128x1xf32>
    %48 = arith.mulf %46, %47 : vector<128x1xf32>
    %49 = arith.mulf %43, %43 : vector<128x1xf32>
    %50 = arith.subf %48, %49 : vector<128x1xf32>
    %cst_19 = arith.constant 0.000000e+00 : f32
    %51 = vector.broadcast %cst_19 : f32 to vector<128x1xf32>
    %52 = arith.maximumf %50, %51 : vector<128x1xf32>
    %cst_20 = arith.constant 9.99999974E-6 : f32
    %53 = vector.broadcast %cst_20 : f32 to vector<128x1xf32>
    %54 = arith.addf %52, %53 : vector<128x1xf32>
    %55 = math.rsqrt %54 : vector<128x1xf32>
    %56 = arith.mulf %43, %55 : vector<128x1xf32>
    %57 = vector.broadcast %55 : vector<128x1xf32> to vector<128x128xf32>
    %58 = arith.mulf %37, %57 : vector<128x128xf32>
    %59 = vector.broadcast %56 : vector<128x1xf32> to vector<128x128xf32>
    %60 = arith.subf %58, %59 : vector<128x128xf32>
    %61 = vector.broadcast %38 : vector<1x128xf32> to vector<128x128xf32>
    %62 = arith.mulf %60, %61 : vector<128x128xf32>
    %63 = vector.broadcast %39 : vector<1x128xf32> to vector<128x128xf32>
    %64 = arith.addf %62, %63 : vector<128x128xf32>
    %65 = vector.extract_strided_slice %1 {offsets = [4, 0], sizes = [1, 128], strides = [1, 1]} : vector<8x128xf32> to vector<1x128xf32>
    %66 = vector.extract_strided_slice %1 {offsets = [5, 0], sizes = [1, 128], strides = [1, 1]} : vector<8x128xf32> to vector<1x128xf32>
    %cst_21 = arith.constant dense<0.000000e+00> : vector<128xf32>
    %67 = vector.multi_reduction <add>, %5, %cst_21 [1] : vector<128x128xf32> to vector<128xf32>
    %68 = vector.shape_cast %67 : vector<128xf32> to vector<128x1xf32>
    %cst_22 = arith.constant 7.812500e-03 : f32
    %69 = vector.broadcast %cst_22 : f32 to vector<128x1xf32>
    %70 = arith.mulf %68, %69 : vector<128x1xf32>
    %71 = arith.mulf %5, %5 : vector<128x128xf32>
    %cst_23 = arith.constant dense<0.000000e+00> : vector<128xf32>
    %72 = vector.multi_reduction <add>, %71, %cst_23 [1] : vector<128x128xf32> to vector<128xf32>
    %73 = vector.shape_cast %72 : vector<128xf32> to vector<128x1xf32>
    %cst_24 = arith.constant 7.812500e-03 : f32
    %74 = vector.broadcast %cst_24 : f32 to vector<128x1xf32>
    %75 = arith.mulf %73, %74 : vector<128x1xf32>
    %76 = arith.mulf %70, %70 : vector<128x1xf32>
    %77 = arith.subf %75, %76 : vector<128x1xf32>
    %cst_25 = arith.constant 0.000000e+00 : f32
    %78 = vector.broadcast %cst_25 : f32 to vector<128x1xf32>
    %79 = arith.maximumf %77, %78 : vector<128x1xf32>
    %cst_26 = arith.constant 9.99999974E-6 : f32
    %80 = vector.broadcast %cst_26 : f32 to vector<128x1xf32>
    %81 = arith.addf %79, %80 : vector<128x1xf32>
    %82 = math.rsqrt %81 : vector<128x1xf32>
    %83 = arith.mulf %70, %82 : vector<128x1xf32>
    %84 = vector.broadcast %82 : vector<128x1xf32> to vector<128x128xf32>
    %85 = arith.mulf %5, %84 : vector<128x128xf32>
    %86 = vector.broadcast %83 : vector<128x1xf32> to vector<128x128xf32>
    %87 = arith.subf %85, %86 : vector<128x128xf32>
    %88 = vector.broadcast %65 : vector<1x128xf32> to vector<128x128xf32>
    %89 = arith.mulf %87, %88 : vector<128x128xf32>
    %90 = vector.broadcast %66 : vector<1x128xf32> to vector<128x128xf32>
    %91 = arith.addf %89, %90 : vector<128x128xf32>
    %92 = arith.addf %64, %91 : vector<128x128xf32>
    %cst_27 = arith.constant 0.000000e+00 : f32
    %93 = vector.broadcast %cst_27 : f32 to vector<128x128xf32>
    %94 = arith.maximumf %92, %93 : vector<128x128xf32>
    %c0_28 = arith.constant 0 : index
    %c0_29 = arith.constant 0 : index
    %95 = vector.load %arg5[%c0_28, %c0_29] : memref<128x128xf32, #tpu.memory_space<vmem>>, vector<128x128xf32>
    tpu.vector_store %arg5[%c0_28, %c0_29], %94 {strides = array<i32>} : memref<128x128xf32, #tpu.memory_space<vmem>>, vector<128x128xf32>,
    return
  }
  func.func @transform_0(%arg0: i32) -> (i32, i32) {
    %c0_i32 = arith.constant 0 : i32
    %c0_i32_0 = arith.constant 0 : i32
    return %arg0, %c0_i32 : i32, i32
  }
  func.func @transform_1(%arg0: i32) -> (i32, i32) {
    %c0_i32 = arith.constant 0 : i32
    %c0_i32_0 = arith.constant 0 : i32
    %c0_i32_1 = arith.constant 0 : i32
    return %c0_i32, %c0_i32_0 : i32, i32
  }
  func.func @transform_2(%arg0: i32) -> (i32, i32) {
    %c0_i32 = arith.constant 0 : i32
    %c0_i32_0 = arith.constant 0 : i32
    %c0_i32_1 = arith.constant 0 : i32
    return %c0_i32, %c0_i32_0 : i32, i32
  }
  func.func @transform_3(%arg0: i32) -> (i32, i32) {
    %c0_i32 = arith.constant 0 : i32
    %c0_i32_0 = arith.constant 0 : i32
    %c0_i32_1 = arith.constant 0 : i32
    return %c0_i32, %c0_i32_0 : i32, i32
  }
  func.func @transform_4(%arg0: i32) -> (i32, i32) {
    %c0_i32 = arith.constant 0 : i32
    %c0_i32_0 = arith.constant 0 : i32
    return %arg0, %c0_i32 : i32, i32
  }
}

module attributes {stable_mosaic.version = 11 : i64} {
  func.func @_lrb_trans_kernel(%arg0: i32, %arg1: memref<128x128xbf16, #tpu.memory_space<vmem>>, %arg2: memref<128x256xbf16, #tpu.memory_space<vmem>>, %arg3: memref<128x128xbf16, #tpu.memory_space<vmem>>, %arg4: memref<8x128xf32, #tpu.memory_space<vmem>>, %arg5: memref<128x128xf32, #tpu.memory_space<vmem>>) attributes {dimension_semantics = [#tpu.dimension_semantics<parallel>], iteration_bounds = array<i64: 2>, scalar_prefetch = 0 : i64, scratch_operands = 0 : i64, tpu.core_type = #tpu.core_type<tc>, window_params = [{transform_indices = @transform_0, window_bounds = array<i64: 128, 128>}, {pipeline_mode = #tpu.pipeline_mode<synchronous>, transform_indices = @transform_1, window_bounds = array<i64: 128, 256>}, {pipeline_mode = #tpu.pipeline_mode<synchronous>, transform_indices = @transform_2, window_bounds = array<i64: 128, 128>}, {pipeline_mode = #tpu.pipeline_mode<synchronous>, transform_indices = @transform_3, window_bounds = array<i64: 8, 128>}, {transform_indices = @transform_4, window_bounds = array<i64: 128, 128>}]} {
    %c0 = arith.constant 0 : index
    %c0_0 = arith.constant 0 : index
    %0 = vector.load %arg1[%c0, %c0_0] : memref<128x128xbf16, #tpu.memory_space<vmem>>, vector<128x128xbf16>
    %c0_1 = arith.constant 0 : index
    %c0_2 = arith.constant 0 : index
    %1 = vector.load %arg4[%c0_1, %c0_2] : memref<8x128xf32, #tpu.memory_space<vmem>>, vector<8x128xf32>
    %c0_3 = arith.constant 0 : index
    %c0_4 = arith.constant 0 : index
    %2 = vector.load %arg2[%c0_3, %c0_4] : memref<128x256xbf16, #tpu.memory_space<vmem>>, vector<128x256xbf16>
    %cst = arith.constant dense<0.000000e+00> : vector<128x256xf32>
    %3 = tpu.matmul %0, %2, %cst {dimension_numbers = #tpu.dot_dimension_numbers<[1], [0], [0], [1], [0, 0, 1, 1], [], []>} : vector<128x128xbf16>, vector<128x256xbf16>, vector<128x256xf32> -> vector<128x256xf32>
    %4 = vector.extract_strided_slice %3 {offsets = [0, 0], sizes = [128, 128], strides = [1, 1]} : vector<128x256xf32> to vector<128x128xf32>
    %5 = vector.extract_strided_slice %3 {offsets = [0, 128], sizes = [128, 128], strides = [1, 1]} : vector<128x256xf32> to vector<128x128xf32>
    %6 = vector.extract_strided_slice %1 {offsets = [0, 0], sizes = [1, 128], strides = [1, 1]} : vector<8x128xf32> to vector<1x128xf32>
    %7 = vector.extract_strided_slice %1 {offsets = [1, 0], sizes = [1, 128], strides = [1, 1]} : vector<8x128xf32> to vector<1x128xf32>
    %cst_5 = arith.constant dense<0.000000e+00> : vector<128xf32>
    %8 = vector.multi_reduction <add>, %4, %cst_5 [1] : vector<128x128xf32> to vector<128xf32>
    %9 = vector.shape_cast %8 : vector<128xf32> to vector<128x1xf32>
    %cst_6 = arith.constant 7.812500e-03 : f32
    %10 = vector.broadcast %cst_6 : f32 to vector<128x1xf32>
    %11 = arith.mulf %9, %10 : vector<128x1xf32>
    %12 = arith.mulf %4, %4 : vector<128x128xf32>
    %cst_7 = arith.constant dense<0.000000e+00> : vector<128xf32>
    %13 = vector.multi_reduction <add>, %12, %cst_7 [1] : vector<128x128xf32> to vector<128xf32>
    %14 = vector.shape_cast %13 : vector<128xf32> to vector<128x1xf32>
    %cst_8 = arith.constant 7.812500e-03 : f32
    %15 = vector.broadcast %cst_8 : f32 to vector<128x1xf32>
    %16 = arith.mulf %14, %15 : vector<128x1xf32>
    %17 = arith.mulf %11, %11 : vector<128x1xf32>
    %18 = arith.subf %16, %17 : vector<128x1xf32>
    %cst_9 = arith.constant 0.000000e+00 : f32
    %19 = vector.broadcast %cst_9 : f32 to vector<128x1xf32>
    %20 = arith.maximumf %18, %19 : vector<128x1xf32>
    %cst_10 = arith.constant 9.99999974E-6 : f32
    %21 = vector.broadcast %cst_10 : f32 to vector<128x1xf32>
    %22 = arith.addf %20, %21 : vector<128x1xf32>
    %23 = math.rsqrt %22 : vector<128x1xf32>
    %24 = arith.mulf %11, %23 : vector<128x1xf32>
    %25 = vector.broadcast %23 : vector<128x1xf32> to vector<128x128xf32>
    %26 = arith.mulf %4, %25 : vector<128x128xf32>
    %27 = vector.broadcast %24 : vector<128x1xf32> to vector<128x128xf32>
    %28 = arith.subf %26, %27 : vector<128x128xf32>
    %29 = vector.broadcast %6 : vector<1x128xf32> to vector<128x128xf32>
    %30 = arith.mulf %28, %29 : vector<128x128xf32>
    %31 = vector.broadcast %7 : vector<1x128xf32> to vector<128x128xf32>
    %32 = arith.addf %30, %31 : vector<128x128xf32>
    %cst_11 = arith.constant 0.000000e+00 : f32
    %33 = vector.broadcast %cst_11 : f32 to vector<128x128xf32>
    %34 = arith.maximumf %32, %33 : vector<128x128xf32>
    %35 = arith.truncf %34 : vector<128x128xf32> to vector<128x128xbf16>
    %c0_12 = arith.constant 0 : index
    %c0_13 = arith.constant 0 : index
    %36 = vector.load %arg3[%c0_12, %c0_13] : memref<128x128xbf16, #tpu.memory_space<vmem>>, vector<128x128xbf16>
    %cst_14 = arith.constant dense<0.000000e+00> : vector<128x128xf32>
    %37 = tpu.matmul %35, %36, %cst_14 {dimension_numbers = #tpu.dot_dimension_numbers<[1], [0], [0], [1], [0, 0, 1, 1], [], []>} : vector<128x128xbf16>, vector<128x128xbf16>, vector<128x128xf32> -> vector<128x128xf32>
    %38 = vector.extract_strided_slice %1 {offsets = [2, 0], sizes = [1, 128], strides = [1, 1]} : vector<8x128xf32> to vector<1x128xf32>
    %39 = vector.extract_strided_slice %1 {offsets = [3, 0], sizes = [1, 128], strides = [1, 1]} : vector<8x128xf32> to vector<1x128xf32>
    %cst_15 = arith.constant dense<0.000000e+00> : vector<128xf32>
    %40 = vector.multi_reduction <add>, %37, %cst_15 [1] : vector<128x128xf32> to vector<128xf32>
    %41 = vector.shape_cast %40 : vector<128xf32> to vector<128x1xf32>
    %cst_16 = arith.constant 7.812500e-03 : f32
    %42 = vector.broadcast %cst_16 : f32 to vector<128x1xf32>
    %43 = arith.mulf %41, %42 : vector<128x1xf32>
    %44 = arith.mulf %37, %37 : vector<128x128xf32>
    %cst_17 = arith.constant dense<0.000000e+00> : vector<128xf32>
    %45 = vector.multi_reduction <add>, %44, %cst_17 [1] : vector<128x128xf32> to vector<128xf32>
    %46 = vector.shape_cast %45 : vector<128xf32> to vector<128x1xf32>
    %cst_18 = arith.constant 7.812500e-03 : f32
    %47 = vector.broadcast %cst_18 : f32 to vector<128x1xf32>
    %48 = arith.mulf %46, %47 : vector<128x1xf32>
    %49 = arith.mulf %43, %43 : vector<128x1xf32>
    %50 = arith.subf %48, %49 : vector<128x1xf32>
    %cst_19 = arith.constant 0.000000e+00 : f32
    %51 = vector.broadcast %cst_19 : f32 to vector<128x1xf32>
    %52 = arith.maximumf %50, %51 : vector<128x1xf32>
    %cst_20 = arith.constant 9.99999974E-6 : f32
    %53 = vector.broadcast %cst_20 : f32 to vector<128x1xf32>
    %54 = arith.addf %52, %53 : vector<128x1xf32>
    %55 = math.rsqrt %54 : vector<128x1xf32>
    %56 = arith.mulf %43, %55 : vector<128x1xf32>
    %57 = vector.broadcast %55 : vector<128x1xf32> to vector<128x128xf32>
    %58 = arith.mulf %37, %57 : vector<128x128xf32>
    %59 = vector.broadcast %56 : vector<128x1xf32> to vector<128x128xf32>
    %60 = arith.subf %58, %59 : vector<128x128xf32>
    %61 = vector.broadcast %38 : vector<1x128xf32> to vector<128x128xf32>
    %62 = arith.mulf %60, %61 : vector<128x128xf32>
    %63 = vector.broadcast %39 : vector<1x128xf32> to vector<128x128xf32>
    %64 = arith.addf %62, %63 : vector<128x128xf32>
    %65 = vector.extract_strided_slice %1 {offsets = [4, 0], sizes = [1, 128], strides = [1, 1]} : vector<8x128xf32> to vector<1x128xf32>
    %66 = vector.extract_strided_slice %1 {offsets = [5, 0], sizes = [1, 128], strides = [1, 1]} : vector<8x128xf32> to vector<1x128xf32>
    %cst_21 = arith.constant dense<0.000000e+00> : vector<128xf32>
    %67 = vector.multi_reduction <add>, %5, %cst_21 [1] : vector<128x128xf32> to vector<128xf32>
    %68 = vector.shape_cast %67 : vector<128xf32> to vector<128x1xf32>
    %cst_22 = arith.constant 7.812500e-03 : f32
    %69 = vector.broadcast %cst_22 : f32 to vector<128x1xf32>
    %70 = arith.mulf %68, %69 : vector<128x1xf32>
    %71 = arith.mulf %5, %5 : vector<128x128xf32>
    %cst_23 = arith.constant dense<0.000000e+00> : vector<128xf32>
    %72 = vector.multi_reduction <add>, %71, %cst_23 [1] : vector<128x128xf32> to vector<128xf32>
    %73 = vector.shape_cast %72 : vector<128xf32> to vector<128x1xf32>
    %cst_24 = arith.constant 7.812500e-03 : f32
    %74 = vector.broadcast %cst_24 : f32 to vector<128x1xf32>
    %75 = arith.mulf %73, %74 : vector<128x1xf32>
    %76 = arith.mulf %70, %70 : vector<128x1xf32>
    %77 = arith.subf %75, %76 : vector<128x1xf32>
    %cst_25 = arith.constant 0.000000e+00 : f32
    %78 = vector.broadcast %cst_25 : f32 to vector<128x1xf32>
    %79 = arith.maximumf %77, %78 : vector<128x1xf32>
    %cst_26 = arith.constant 9.99999974E-6 : f32
    %80 = vector.broadcast %cst_26 : f32 to vector<128x1xf32>
    %81 = arith.addf %79, %80 : vector<128x1xf32>
    %82 = math.rsqrt %81 : vector<128x1xf32>
    %83 = arith.mulf %70, %82 : vector<128x1xf32>
    %84 = vector.broadcast %82 : vector<128x1xf32> to vector<128x128xf32>
    %85 = arith.mulf %5, %84 : vector<128x128xf32>
    %86 = vector.broadcast %83 : vector<128x1xf32> to vector<128x128xf32>
    %87 = arith.subf %85, %86 : vector<128x128xf32>
    %88 = vector.broadcast %65 : vector<1x128xf32> to vector<128x128xf32>
    %89 = arith.mulf %87, %88 : vector<128x128xf32>
    %90 = vector.broadcast %66 : vector<1x128xf32> to vector<128x128xf32>
    %91 = arith.addf %89, %90 : vector<128x128xf32>
    %92 = arith.addf %64, %91 : vector<128x128xf32>
    %cst_27 = arith.constant 0.000000e+00 : f32
    %93 = vector.broadcast %cst_27 : f32 to vector<128x128xf32>
    %94 = arith.maximumf %92, %93 : vector<128x128xf32>
    %c0_28 = arith.constant 0 : index
    %c0_29 = arith.constant 0 : index
    %95 = vector.load %arg5[%c0_28, %c0_29] : memref<128x128xf32, #tpu.memory_space<vmem>>, vector<128x128xf32>
    tpu.vector_store %arg5[%c0_28, %c0_29], %94 {strides = array<i32>} : memref<128x128xf32, #tpu.memory_space<vmem>>, vector<128x128xf32>,
    return
  }
  func.func @transform_0(%arg0: i32) -> (i32, i32) {
    %c0_i32 = arith.constant 0 : i32
    %c0_i32_0 = arith.constant 0 : i32
    return %arg0, %c0_i32 : i32, i32
  }
  func.func @transform_1(%arg0: i32) -> (i32, i32) {
    %c0_i32 = arith.constant 0 : i32
    %c0_i32_0 = arith.constant 0 : i32
    %c0_i32_1 = arith.constant 0 : i32
    return %c0_i32, %c0_i32_0 : i32, i32
  }
  func.func @transform_2(%arg0: i32) -> (i32, i32) {
    %c0_i32 = arith.constant 0 : i32
    %c0_i32_0 = arith.constant 0 : i32
    %c0_i32_1 = arith.constant 0 : i32
    return %c0_i32, %c0_i32_0 : i32, i32
  }
  func.func @transform_3(%arg0: i32) -> (i32, i32) {
    %c0_i32 = arith.constant 0 : i32
    %c0_i32_0 = arith.constant 0 : i32
    %c0_i32_1 = arith.constant 0 : i32
    return %c0_i32, %c0_i32_0 : i32, i32
  }
  func.func @transform_4(%arg0: i32) -> (i32, i32) {
    %c0_i32 = arith.constant 0 : i32
    %c0_i32_0 = arith.constant 0 : i32
    return %arg0, %c0_i32 : i32, i32
  }
}

</mosaic_0001>

<llo_original>
// kernel: _lrb_call.1
$region0: #{_lrb_call.1}
  #allocation0 [shape = 'u32[]', space=smem, size = 0x4, offset = 0x4, fixed_abs, tag = 'smem constant byte address 0x4 - core index']
  #allocation1 [shape = 'u32[144,128]{1,0:T(1,128)}', space=vmem, size = 0x12000, scoped, tag = 'internal scratch']
  %s0 = inlined_call_operand.vmem [shape: bf16[256,128], index: 0, kind: input, shape index: {}]
  %s1 = inlined_call_operand.vmem [shape: bf16[128,256], index: 1, kind: input, shape index: {}]
  %s2 = inlined_call_operand.vmem [shape: bf16[128,128], index: 2, kind: input, shape index: {}]
  %s3 = inlined_call_operand.vmem [shape: f32[8,128], index: 3, kind: input, shape index: {}]
  %s4 = inlined_call_operand.hbm [shape: f32[256,128], index: 4, kind: output, shape index: {}]
  %s5 = sld [smem:[#allocation0]]
  $region49: #{_lrb_call.1} parent=0
    _
  %s7 = ssub.s32 1, %s5
  %s8 = scalar_select 0, %s7, %s5
  $region1: #{_lrb_call.1} parent=0
    #allocation2 [shape = 'u8[131072]{0}', space=vmem, size = 0x20000, scoped, tag = 'output window, operand 0']
    #allocation3 [shape = 's32[2]{0}', space=sflag, size = 0x8, scoped, tag = 'scoped memory for _lrb_call.1']
    %9 = vsyncpa [#allocation3], 0
    %s10 = scalar_lea.sflag [#allocation3], 1
    %11 = vsyncpa %s10, 0
    loop: start=0, step=1, limit=4
    $region2: #{_lrb_call.1} parent=1 // loop_pre_header
      _
    $region3: #{_lrb_call.1} parent=1 // loop_header
      %s13 = sphi 0, %s17
      %p14 = scmp.ge.s32.totalorder %s13, 4
      %s23 = sphi 0, %s25
      %s26 = sphi 0, %s23
      %s27 = sphi 0, %s26
      %s43 = sphi 0, %s27
      %s47 = sphi 0, %s47
      %s49 = sphi 0, %s47
      %s50 = sphi 0, %s49
      %s64 = sphi 0, %s50
      %s68 = sphi 0, %s68
      %s70 = sphi 0, %s68
      %s71 = sphi 0, %s70
      %s85 = sphi 0, %s71
      %s89 = sphi 0, %s89
      %s91 = sphi 0, %s89
      %s92 = sphi 0, %s91
      %s106 = sphi 0, %s92
      %s112 = sphi 0, %s114
      %s115 = sphi 0, %s112
      %s116 = sphi 0, %s115
      %s132 = sphi 0, %s116
    $region4: #{_lrb_call.1} parent=1 // loop_header_branch
      %16 = sbr.rel (%p14) target = $region8
    $region5: #{_lrb_call.1} parent=1 // loop_body
      %s18 = ssub.s32 %s13, 1
      %s19 = ssub.s32 %s13, 2
      %s20 = sadd.s32 %s13, 1
      %s21 = ssub.s32 %s13, %s20
      %p22 = scmp.eq.s32.totalorder %s21, 0
      %s24 = sadd.s32 %s23, 1
      %s25 = scalar_select %p22, %s23, %s24
      %p28 = pneg %p22
      %p29 = scmp.eq.s32.totalorder %s13, 1
      %p30 = por %p28, %p29
      %p31 = scmp.ne.s32.totalorder %s23, %s26
      %p32 = scmp.eq.s32.totalorder %s13, 0
      %p33 = por %p31, %p32
      %p34 = scmp.ne.s32.totalorder %s23, %s26
      %p35 = scmp.eq.s32.totalorder %s18, 1
      %p36 = por %p34, %p35
      %p37 = scmp.ne.s32.totalorder %s26, %s27
      %p38 = scmp.eq.s32.totalorder %s18, 0
      %p39 = por %p37, %p38
      %p40 = scmp.ne.s32.totalorder %s26, %s27
      %p41 = scmp.eq.s32.totalorder %s19, 1
      %p42 = por %p40, %p41
      %p44 = scmp.ne.s32.totalorder %s27, %s43
      %p45 = scmp.eq.s32.totalorder %s19, 0
      %p46 = por %p44, %p45
      %s48 = sadd.s32 %s47, 1
      %p51 = scmp.eq.s32.totalorder %s13, 1
      %p52 = scmp.ne.s32.totalorder %s47, %s49
      %p53 = scmp.eq.s32.totalorder %s13, 0
      %p54 = por %p52, %p53
      %p55 = scmp.ne.s32.totalorder %s47, %s49
      %p56 = scmp.eq.s32.totalorder %s18, 1
      %p57 = por %p55, %p56
      %p58 = scmp.ne.s32.totalorder %s49, %s50
      %p59 = scmp.eq.s32.totalorder %s18, 0
      %p60 = por %p58, %p59
      %p61 = scmp.ne.s32.totalorder %s49, %s50
      %p62 = scmp.eq.s32.totalorder %s19, 1
      %p63 = por %p61, %p62
      %p65 = scmp.ne.s32.totalorder %s50, %s64
      %p66 = scmp.eq.s32.totalorder %s19, 0
      %p67 = por %p65, %p66
      %s69 = sadd.s32 %s68, 1
      %p72 = scmp.eq.s32.totalorder %s13, 1
      %p73 = scmp.ne.s32.totalorder %s68, %s70
      %p74 = scmp.eq.s32.totalorder %s13, 0
      %p75 = por %p73, %p74
      %p76 = scmp.ne.s32.totalorder %s68, %s70
      %p77 = scmp.eq.s32.totalorder %s18, 1
      %p78 = por %p76, %p77
      %p79 = scmp.ne.s32.totalorder %s70, %s71
      %p80 = scmp.eq.s32.totalorder %s18, 0
      %p81 = por %p79, %p80
      %p82 = scmp.ne.s32.totalorder %s70, %s71
      %p83 = scmp.eq.s32.totalorder %s19, 1
      %p84 = por %p82, %p83
      %p86 = scmp.ne.s32.totalorder %s71, %s85
      %p87 = scmp.eq.s32.totalorder %s19, 0
      %p88 = por %p86, %p87
      %s90 = sadd.s32 %s89, 1
      %p93 = scmp.eq.s32.totalorder %s13, 1
      %p94 = scmp.ne.s32.totalorder %s89, %s91
      %p95 = scmp.eq.s32.totalorder %s13, 0
      %p96 = por %p94, %p95
      %p97 = scmp.ne.s32.totalorder %s89, %s91
      %p98 = scmp.eq.s32.totalorder %s18, 1
      %p99 = por %p97, %p98
      %p100 = scmp.ne.s32.totalorder %s91, %s92
      %p101 = scmp.eq.s32.totalorder %s18, 0
      %p102 = por %p100, %p101
      %p103 = scmp.ne.s32.totalorder %s91, %s92
      %p104 = scmp.eq.s32.totalorder %s19, 1
      %p105 = por %p103, %p104
      %p107 = scmp.ne.s32.totalorder %s92, %s106
      %p108 = scmp.eq.s32.totalorder %s19, 0
      %p109 = por %p107, %p108
      %s110 = ssub.s32 %s13, %s20
      %p111 = scmp.eq.s32.totalorder %s110, 0
      %s113 = sadd.s32 %s112, 1
      %s114 = scalar_select %p111, %s112, %s113
      %p117 = pneg %p111
      %p118 = scmp.eq.s32.totalorder %s13, 1
      %p119 = por %p117, %p118
      %p120 = scmp.ne.s32.totalorder %s112, %s115
      %p121 = scmp.eq.s32.totalorder %s13, 0
      %p122 = por %p120, %p121
      %p123 = scmp.ne.s32.totalorder %s112, %s115
      %p124 = scmp.eq.s32.totalorder %s18, 1
      %p125 = por %p123, %p124
      %p126 = scmp.ne.s32.totalorder %s115, %s116
      %p127 = scmp.eq.s32.totalorder %s18, 0
      %p128 = por %p126, %p127
      %p129 = scmp.ne.s32.totalorder %s115, %s116
      %p130 = scmp.eq.s32.totalorder %s19, 1
      %p131 = por %p129, %p130
      %p133 = scmp.ne.s32.totalorder %s116, %s132
      %p134 = scmp.eq.s32.totalorder %s19, 0
      %p135 = por %p133, %p134
      %p136 = scmp.le.s32.totalorder 1, %s13
      %p137 = scmp.lt.s32.totalorder %s13, 3
      %p138 = pnand %p136, %p137
      %p139 = pneg %p138
      // Predicated region
      $region9: #{_lrb_call.1} parent=5 // pred_check
        _
      $region10: #{_lrb_call.1} parent=5 // pred_check_branch
        %141 = sbr.rel (%p138) target = $region12
      $region11: #{_lrb_call.1} parent=5 // pred_region
        %s142 = ssub.s32 %s13, 1
        // Predicated region
        $region13: #{_lrb_call.1} parent=11 // pred_check
          %p143 = pneg %p60
        $region14: #{_lrb_call.1} parent=11 // pred_check_branch
          %145 = sbr.rel (%p143) target = $region16
        $region15: #{_lrb_call.1} parent=11 // pred_region
          _
        $region16: #{_lrb_call.1} parent=11 // pred_fallthru
          _
        // Predicated region
        $region17: #{_lrb_call.1} parent=11 // pred_check
          %p146 = pneg %p81
        $region18: #{_lrb_call.1} parent=11 // pred_check_branch
          %148 = sbr.rel (%p146) target = $region20
        $region19: #{_lrb_call.1} parent=11 // pred_region
          _
        $region20: #{_lrb_call.1} parent=11 // pred_fallthru
          _
        // Predicated region
        $region21: #{_lrb_call.1} parent=11 // pred_check
          %p149 = pneg %p102
        $region22: #{_lrb_call.1} parent=11 // pred_check_branch
          %151 = sbr.rel (%p149) target = $region24
        $region23: #{_lrb_call.1} parent=11 // pred_region
          _
        $region24: #{_lrb_call.1} parent=11 // pred_fallthru
          _
      $region12: #{_lrb_call.1} parent=5 // pred_fallthru
        _
      %p152 = scmp.lt.s32.totalorder %s13, 2
      // Predicated region
      $region25: #{_lrb_call.1} parent=5 // pred_check
        %p153 = pneg %p152
      $region26: #{_lrb_call.1} parent=5 // pred_check_branch
        %155 = sbr.rel (%p153) target = $region28
      $region27: #{_lrb_call.1} parent=5 // pred_region
        // Predicated region
        $region29: #{_lrb_call.1} parent=27 // pred_check
          %p156 = pneg %p33
        $region30: #{_lrb_call.1} parent=27 // pred_check_branch
          %158 = sbr.rel (%p156) target = $region32
        $region31: #{_lrb_call.1} parent=27 // pred_region
          %s159 = smul.u32 16, %s13
          %p160 = scmp.lt.s32.totalorder %s159, 31
          %s161 = scalar_select %p160, %s159, 31
          %s162 = smul.addr %s161, 4
          %s163 = scalar_lea.vmem %s0, %s162
          %s164 = smul.u32 16, %s13
        $region32: #{_lrb_call.1} parent=27 // pred_fallthru
          _
      $region28: #{_lrb_call.1} parent=5 // pred_fallthru
        _
      %p165 = scmp.le.s32.totalorder 1, %s13
      %p166 = scmp.lt.s32.totalorder %s13, 3
      %p167 = pnand %p165, %p166
      %p168 = pneg %p167
      // Predicated region
      $region33: #{_lrb_call.1} parent=5 // pred_check
        _
      $region34: #{_lrb_call.1} parent=5 // pred_check_branch
        %170 = sbr.rel (%p167) target = $region36
      $region35: #{_lrb_call.1} parent=5 // pred_region
        %s171 = ssub.s32 %s13, 1
        %s172 = smul.u32 16, %s18
        %p173 = scmp.lt.s32.totalorder %s172, 31
        %s174 = scalar_select %p173, %s172, 31
        %s175 = smul.addr %s174, 4
        %s176 = scalar_lea.vmem %s0, %s175
        %p177 = pneg %p39
        %p178 = pneg %p36
        %p179 = pneg %p60
        %p180 = pneg %p57
        %p181 = pneg %p81
        %p182 = pneg %p78
        %p183 = pneg %p102
        %p184 = pneg %p99
        %p185 = pneg %p128
        %p186 = pneg %p125
        %s187 = sand.u32 %s115, 1
        %s188 = scalar_lea.sflag [#allocation3], %s187
        %s189 = sand.u32 %s115, 1
        %s190 = smul.addr %s189, 128
        %s191 = scalar_lea.vmem [#allocation2], %s190
        %s192 = smul.u32 16, %s18
        %p193 = scmp.lt.s32.totalorder %s192, 31
        %s194 = scalar_select %p193, %s192, 31
        %s195 = smul.addr %s194, 4
        %s196 = scalar_lea.vmem %s0, %s195
        %s197 = smul.u32 16, %s18
        %s198 = smul.u32 16, %s18
        %v200 = vld [vmem:[%s196] sm:$0xf]
        %v201 = vld [vmem:[%s196 + $0x4] sm:$0xf]
        %v202 = vld [vmem:[%s196 + $0x8] sm:$0xf]
        %v203 = vld [vmem:[%s196 + $0xc] sm:$0xf]
        %v204 = vld [vmem:[%s196 + $0x10] sm:$0xf]
        %v205 = vld [vmem:[%s196 + $0x14] sm:$0xf]
        %v206 = vld [vmem:[%s196 + $0x18] sm:$0xf]
        %v207 = vld [vmem:[%s196 + $0x1c] sm:$0xf]
        %v208 = vld [vmem:[%s196 + $0x20] sm:$0xf]
        %v209 = vld [vmem:[%s196 + $0x24] sm:$0xf]
        %v210 = vld [vmem:[%s196 + $0x28] sm:$0xf]
        %v211 = vld [vmem:[%s196 + $0x2c] sm:$0xf]
        %v212 = vld [vmem:[%s196 + $0x30] sm:$0xf]
        %v213 = vld [vmem:[%s196 + $0x34] sm:$0xf]
        %v214 = vld [vmem:[%s196 + $0x38] sm:$0xf]
        %v215 = vld [vmem:[%s196 + $0x3c] sm:$0xf]
        %v216 = vld [vmem:[%s3] sm:$0xff]
        %v217 = vld [vmem:[%s1] sm:$0xff]
        %v218 = vld [vmem:[%s1 + $0x8] sm:$0xff]
        %v219 = vld [vmem:[%s1 + $0x10] sm:$0xff]
        %v220 = vld [vmem:[%s1 + $0x18] sm:$0xff]
        %v221 = vld [vmem:[%s1 + $0x20] sm:$0xff]
        %v222 = vld [vmem:[%s1 + $0x28] sm:$0xff]
        %v223 = vld [vmem:[%s1 + $0x30] sm:$0xff]
        %v224 = vld [vmem:[%s1 + $0x38] sm:$0xff]
        %v225 = vld [vmem:[%s1 + $0x40] sm:$0xff]
        %v226 = vld [vmem:[%s1 + $0x48] sm:$0xff]
        %v227 = vld [vmem:[%s1 + $0x50] sm:$0xff]
        %v228 = vld [vmem:[%s1 + $0x58] sm:$0xff]
        %v229 = vld [vmem:[%s1 + $0x60] sm:$0xff]
        %v230 = vld [vmem:[%s1 + $0x68] sm:$0xff]
        %v231 = vld [vmem:[%s1 + $0x70] sm:$0xff]
        %v232 = vld [vmem:[%s1 + $0x78] sm:$0xff]
        %v249 = vunpack.c.l.b16 %v200
        %v250 = vunpack.c.l.b16 %v201
        %v251 = vunpack.c.l.b16 %v202
        %v252 = vunpack.c.l.b16 %v203
        %v253 = vunpack.c.l.b16 %v204
        %v254 = vunpack.c.l.b16 %v205
        %v255 = vunpack.c.l.b16 %v206
        %v256 = vunpack.c.l.b16 %v207
        %v257 = vunpack.c.l.b16 %v208
        %v258 = vunpack.c.l.b16 %v209
        %v259 = vunpack.c.l.b16 %v210
        %v260 = vunpack.c.l.b16 %v211
        %v261 = vunpack.c.l.b16 %v212
        %v262 = vunpack.c.l.b16 %v213
        %v263 = vunpack.c.l.b16 %v214
        %v264 = vunpack.c.l.b16 %v215
        %v265 = vpack.c.b16 %v250, %v249
        %v266 = vpack.c.b16 %v252, %v251
        %v267 = vpack.c.b16 %v254, %v253
        %v268 = vpack.c.b16 %v256, %v255
        %v269 = vpack.c.b16 %v258, %v257
        %v270 = vpack.c.b16 %v260, %v259
        %v271 = vpack.c.b16 %v262, %v261
        %v272 = vpack.c.b16 %v264, %v263
        %v297 = vunpack.c.l.b16 %v217
        %v298 = vunpack.c.h.b16 %v217
        %v299 = vunpack.c.l.b16 %v218
        %v300 = vunpack.c.h.b16 %v218
        %v301 = vunpack.c.l.b16 %v219
        %v302 = vunpack.c.h.b16 %v219
        %v303 = vunpack.c.l.b16 %v220
        %v304 = vunpack.c.h.b16 %v220
        %v305 = vunpack.c.l.b16 %v221
        %v306 = vunpack.c.h.b16 %v221
        %v307 = vunpack.c.l.b16 %v222
        %v308 = vunpack.c.h.b16 %v222
        %v309 = vunpack.c.l.b16 %v223
        %v310 = vunpack.c.h.b16 %v223
        %v311 = vunpack.c.l.b16 %v224
        %v312 = vunpack.c.h.b16 %v224
        %v313 = vunpack.c.l.b16 %v225
        %v314 = vunpack.c.h.b16 %v225
        %v315 = vunpack.c.l.b16 %v226
        %v316 = vunpack.c.h.b16 %v226
        %v317 = vunpack.c.l.b16 %v227
        %v318 = vunpack.c.h.b16 %v227
        %v319 = vunpack.c.l.b16 %v228
        %v320 = vunpack.c.h.b16 %v228
        %v321 = vunpack.c.l.b16 %v229
        %v322 = vunpack.c.h.b16 %v229
        %v323 = vunpack.c.l.b16 %v230
        %v324 = vunpack.c.h.b16 %v230
        %v325 = vunpack.c.l.b16 %v231
        %v326 = vunpack.c.h.b16 %v231
        %v327 = vunpack.c.l.b16 %v232
        %v328 = vunpack.c.h.b16 %v232
        %v329 = vpack.c.b16 %v299, %v297
        %v330 = vpack.c.b16 %v300, %v298
        %v331 = vpack.c.b16 %v303, %v301
        %v332 = vpack.c.b16 %v304, %v302
        %v333 = vpack.c.b16 %v307, %v305
        %v334 = vpack.c.b16 %v308, %v306
        %v335 = vpack.c.b16 %v311, %v309
        %v336 = vpack.c.b16 %v312, %v310
        %v337 = vpack.c.b16 %v315, %v313
        %v338 = vpack.c.b16 %v316, %v314
        %v339 = vpack.c.b16 %v319, %v317
        %v340 = vpack.c.b16 %v320, %v318
        %v341 = vpack.c.b16 %v323, %v321
        %v342 = vpack.c.b16 %v324, %v322
        %v343 = vpack.c.b16 %v327, %v325
        %v344 = vpack.c.b16 %v328, %v326
        %361 = vmatprep.subr.bf16.mxu0 %v344
        %362 = vmatpush1.bf16.msra.mxu0 %v343
        %363 = vmatprep.subr.bf16.mxu0 %v342
        %364 = vmatpush1.bf16.msra.mxu0 %v341
        %365 = vmatprep.subr.bf16.mxu0 %v340
        %366 = vmatpush1.bf16.msra.mxu0 %v339
        %367 = vmatprep.subr.bf16.mxu0 %v338
        %368 = vmatpush1.bf16.msra.mxu0 %v337
        %369 = vmatprep.subr.bf16.mxu0 %v336
        %370 = vmatpush1.bf16.msra.mxu0 %v335
        %371 = vmatprep.subr.bf16.mxu0 %v334
        %372 = vmatpush1.bf16.msra.mxu0 %v333
        %373 = vmatprep.subr.bf16.mxu0 %v332
        %374 = vmatpush1.bf16.msra.mxu0 %v331
        %375 = vmatprep.subr.bf16.mxu0 %v330
        %376 = vmatpush1.bf16.msra.mxu0 %v329
        %377 = vmatprep.subr.bf16.mxu0 0
        %378 = vmatpush2.bf16.msra.mxu0 0
        %379 = vmatprep.subr.bf16.mxu0 0
        %380 = vmatpush2.bf16.msra.mxu0 0
        %381 = vmatprep.subr.bf16.mxu0 0
        %382 = vmatpush2.bf16.msra.mxu0 0
        %383 = vmatprep.subr.bf16.mxu0 0
        %384 = vmatpush2.bf16.msra.mxu0 0
        %385 = vmatprep.subr.bf16.mxu0 0
        %386 = vmatpush2.bf16.msra.mxu0 0
        %387 = vmatprep.subr.bf16.mxu0 0
        %388 = vmatpush2.bf16.msra.mxu0 0
        %389 = vmatprep.subr.bf16.mxu0 0
        %390 = vmatpush2.bf16.msra.mxu0 0
        %391 = vmatprep.subr.bf16.mxu0 0
        %392 = vmatpush2.bf16.msra.mxu0 0
        %393 = vmatprep.mubr.bf16.mxu0 0
        %394 = vmatmul.mubr.bf16.gmra.mxu0 %v265
        %v395 = vpop.f32.mrf.mxu0
        %v396 = vadd.f32 0.0, %v395
        %v397 = vpop.f32.mrf.mxu0
        %v398 = vadd.f32 0.0, %v397
        %v399 = vpop.f32.mrf.mxu0
        %v400 = vadd.f32 0.0, %v399
        %v401 = vpop.f32.mrf.mxu0
        %v402 = vadd.f32 0.0, %v401
        %403 = vmatprep.mubr.bf16.mxu0 0
        %404 = vmatmul.mubr.bf16.gmra.mxu0 %v266
        %v405 = vpop.f32.mrf.mxu0
        %v406 = vadd.f32 0.0, %v405
        %v407 = vpop.f32.mrf.mxu0
        %v408 = vadd.f32 0.0, %v407
        %v409 = vpop.f32.mrf.mxu0
        %v410 = vadd.f32 0.0, %v409
        %v411 = vpop.f32.mrf.mxu0
        %v412 = vadd.f32 0.0, %v411
        %413 = vmatprep.mubr.bf16.mxu0 0
        %414 = vmatmul.mubr.bf16.gmra.mxu0 %v267
        %v415 = vpop.f32.mrf.mxu0
        %v416 = vadd.f32 0.0, %v415
        %v417 = vpop.f32.mrf.mxu0
        %v418 = vadd.f32 0.0, %v417
        %v419 = vpop.f32.mrf.mxu0
        %v420 = vadd.f32 0.0, %v419
        %v421 = vpop.f32.mrf.mxu0
        %v422 = vadd.f32 0.0, %v421
        %423 = vmatprep.mubr.bf16.mxu0 0
        %424 = vmatmul.mubr.bf16.gmra.mxu0 %v268
        %v425 = vpop.f32.mrf.mxu0
        %v426 = vadd.f32 0.0, %v425
        %v427 = vpop.f32.mrf.mxu0
        %v428 = vadd.f32 0.0, %v427
        %v429 = vpop.f32.mrf.mxu0
        %v430 = vadd.f32 0.0, %v429
        %v431 = vpop.f32.mrf.mxu0
        %v432 = vadd.f32 0.0, %v431
        %433 = vmatprep.mubr.bf16.mxu0 0
        %434 = vmatmul.mubr.bf16.gmra.mxu0 %v269
        %v435 = vpop.f32.mrf.mxu0
        %v436 = vadd.f32 0.0, %v435
        %v437 = vpop.f32.mrf.mxu0
        %v438 = vadd.f32 0.0, %v437
        %v439 = vpop.f32.mrf.mxu0
        %v440 = vadd.f32 0.0, %v439
        %v441 = vpop.f32.mrf.mxu0
        %v442 = vadd.f32 0.0, %v441
        %443 = vmatprep.mubr.bf16.mxu0 0
        %444 = vmatmul.mubr.bf16.gmra.mxu0 %v270
        %v445 = vpop.f32.mrf.mxu0
        %v446 = vadd.f32 0.0, %v445
        %v447 = vpop.f32.mrf.mxu0
        %v448 = vadd.f32 0.0, %v447
        %v449 = vpop.f32.mrf.mxu0
        %v450 = vadd.f32 0.0, %v449
        %v451 = vpop.f32.mrf.mxu0
        %v452 = vadd.f32 0.0, %v451
        %453 = vmatprep.mubr.bf16.mxu0 0
        %454 = vmatmul.mubr.bf16.gmra.mxu0 %v271
        %v455 = vpop.f32.mrf.mxu0
        %v456 = vadd.f32 0.0, %v455
        %v457 = vpop.f32.mrf.mxu0
        %v458 = vadd.f32 0.0, %v457
        %v459 = vpop.f32.mrf.mxu0
        %v460 = vadd.f32 0.0, %v459
        %v461 = vpop.f32.mrf.mxu0
        %v462 = vadd.f32 0.0, %v461
        %463 = vmatprep.mubr.bf16.mxu0 0
        %464 = vmatmul.mubr.bf16.gmra.mxu0 %v272
        %v465 = vpop.f32.mrf.mxu0
        %v466 = vadd.f32 0.0, %v465
        %v467 = vpop.f32.mrf.mxu0
        %v468 = vadd.f32 0.0, %v467
        %v469 = vpop.f32.mrf.mxu0
        %v470 = vadd.f32 0.0, %v469
        %v471 = vpop.f32.mrf.mxu0
        %v472 = vadd.f32 0.0, %v471
        %473 = vdwg.mxu0
        %474 = vadd.xlane.f32.xlu0 %v396
        %v475 = vpop.xlane.xlu0 %474
        %476 = vadd.xlane.f32.xlu0 %v400
        %v477 = vpop.xlane.xlu0 %476
        %478 = vadd.xlane.f32.xlu0 %v406
        %v479 = vpop.xlane.xlu0 %478
        %480 = vadd.xlane.f32.xlu0 %v410
        %v481 = vpop.xlane.xlu0 %480
        %482 = vadd.xlane.f32.xlu0 %v416
        %v483 = vpop.xlane.xlu0 %482
        %484 = vadd.xlane.f32.xlu0 %v420
        %v485 = vpop.xlane.xlu0 %484
        %486 = vadd.xlane.f32.xlu0 %v426
        %v487 = vpop.xlane.xlu0 %486
        %488 = vadd.xlane.f32.xlu0 %v430
        %v489 = vpop.xlane.xlu0 %488
        %490 = vadd.xlane.f32.xlu0 %v436
        %v491 = vpop.xlane.xlu0 %490
        %492 = vadd.xlane.f32.xlu0 %v440
        %v493 = vpop.xlane.xlu0 %492
        %494 = vadd.xlane.f32.xlu0 %v446
        %v495 = vpop.xlane.xlu0 %494
        %496 = vadd.xlane.f32.xlu0 %v450
        %v497 = vpop.xlane.xlu0 %496
        %498 = vadd.xlane.f32.xlu0 %v456
        %v499 = vpop.xlane.xlu0 %498
        %500 = vadd.xlane.f32.xlu0 %v460
        %v501 = vpop.xlane.xlu0 %500
        %502 = vadd.xlane.f32.xlu0 %v466
        %v503 = vpop.xlane.xlu0 %502
        %504 = vadd.xlane.f32.xlu0 %v470
        %v505 = vpop.xlane.xlu0 %504
        %v506 = vmul.f32 %v475, 0.0078125
        %v507 = vmul.f32 %v477, 0.0078125
        %v508 = vmul.f32 %v479, 0.0078125
        %v509 = vmul.f32 %v481, 0.0078125
        %v510 = vmul.f32 %v483, 0.0078125
        %v511 = vmul.f32 %v485, 0.0078125
        %v512 = vmul.f32 %v487, 0.0078125
        %v513 = vmul.f32 %v489, 0.0078125
        %v514 = vmul.f32 %v491, 0.0078125
        %v515 = vmul.f32 %v493, 0.0078125
        %v516 = vmul.f32 %v495, 0.0078125
        %v517 = vmul.f32 %v497, 0.0078125
        %v518 = vmul.f32 %v499, 0.0078125
        %v519 = vmul.f32 %v501, 0.0078125
        %v520 = vmul.f32 %v503, 0.0078125
        %v521 = vmul.f32 %v505, 0.0078125
        %v522 = vmul.f32 %v396, %v396
        %v523 = vmul.f32 %v400, %v400
        %v524 = vmul.f32 %v406, %v406
        %v525 = vmul.f32 %v410, %v410
        %v526 = vmul.f32 %v416, %v416
        %v527 = vmul.f32 %v420, %v420
        %v528 = vmul.f32 %v426, %v426
        %v529 = vmul.f32 %v430, %v430
        %v530 = vmul.f32 %v436, %v436
        %v531 = vmul.f32 %v440, %v440
        %v532 = vmul.f32 %v446, %v446
        %v533 = vmul.f32 %v450, %v450
        %v534 = vmul.f32 %v456, %v456
        %v535 = vmul.f32 %v460, %v460
        %v536 = vmul.f32 %v466, %v466
        %v537 = vmul.f32 %v470, %v470
        %538 = vadd.xlane.f32.xlu0 %v522
        %v539 = vpop.xlane.xlu0 %538
        %540 = vadd.xlane.f32.xlu0 %v523
        %v541 = vpop.xlane.xlu0 %540
        %542 = vadd.xlane.f32.xlu0 %v524
        %v543 = vpop.xlane.xlu0 %542
        %544 = vadd.xlane.f32.xlu0 %v525
        %v545 = vpop.xlane.xlu0 %544
        %546 = vadd.xlane.f32.xlu0 %v526
        %v547 = vpop.xlane.xlu0 %546
        %548 = vadd.xlane.f32.xlu0 %v527
        %v549 = vpop.xlane.xlu0 %548
        %550 = vadd.xlane.f32.xlu0 %v528
        %v551 = vpop.xlane.xlu0 %550
        %552 = vadd.xlane.f32.xlu0 %v529
        %v553 = vpop.xlane.xlu0 %552
        %554 = vadd.xlane.f32.xlu0 %v530
        %v555 = vpop.xlane.xlu0 %554
        %556 = vadd.xlane.f32.xlu0 %v531
        %v557 = vpop.xlane.xlu0 %556
        %558 = vadd.xlane.f32.xlu0 %v532
        %v559 = vpop.xlane.xlu0 %558
        %560 = vadd.xlane.f32.xlu0 %v533
        %v561 = vpop.xlane.xlu0 %560
        %562 = vadd.xlane.f32.xlu0 %v534
        %v563 = vpop.xlane.xlu0 %562
        %564 = vadd.xlane.f32.xlu0 %v535
        %v565 = vpop.xlane.xlu0 %564
        %566 = vadd.xlane.f32.xlu0 %v536
        %v567 = vpop.xlane.xlu0 %566
        %568 = vadd.xlane.f32.xlu0 %v537
        %v569 = vpop.xlane.xlu0 %568
        %v570 = vmul.f32 %v539, 0.0078125
        %v571 = vmul.f32 %v541, 0.0078125
        %v572 = vmul.f32 %v543, 0.0078125
        %v573 = vmul.f32 %v545, 0.0078125
        %v574 = vmul.f32 %v547, 0.0078125
        %v575 = vmul.f32 %v549, 0.0078125
        %v576 = vmul.f32 %v551, 0.0078125
        %v577 = vmul.f32 %v553, 0.0078125
        %v578 = vmul.f32 %v555, 0.0078125
        %v579 = vmul.f32 %v557, 0.0078125
        %v580 = vmul.f32 %v559, 0.0078125
        %v581 = vmul.f32 %v561, 0.0078125
        %v582 = vmul.f32 %v563, 0.0078125
        %v583 = vmul.f32 %v565, 0.0078125
        %v584 = vmul.f32 %v567, 0.0078125
        %v585 = vmul.f32 %v569, 0.0078125
        %v586 = vmul.f32 %v506, %v506
        %v587 = vmul.f32 %v507, %v507
        %v588 = vmul.f32 %v508, %v508
        %v589 = vmul.f32 %v509, %v509
        %v590 = vmul.f32 %v510, %v510
        %v591 = vmul.f32 %v511, %v511
        %v592 = vmul.f32 %v512, %v512
        %v593 = vmul.f32 %v513, %v513
        %v594 = vmul.f32 %v514, %v514
        %v595 = vmul.f32 %v515, %v515
        %v596 = vmul.f32 %v516, %v516
        %v597 = vmul.f32 %v517, %v517
        %v598 = vmul.f32 %v518, %v518
        %v599 = vmul.f32 %v519, %v519
        %v600 = vmul.f32 %v520, %v520
        %v601 = vmul.f32 %v521, %v521
        %v602 = vsub.f32 %v570, %v586
        %v603 = vsub.f32 %v571, %v587
        %v604 = vsub.f32 %v572, %v588
        %v605 = vsub.f32 %v573, %v589
        %v606 = vsub.f32 %v574, %v590
        %v607 = vsub.f32 %v575, %v591
        %v608 = vsub.f32 %v576, %v592
        %v609 = vsub.f32 %v577, %v593
        %v610 = vsub.f32 %v578, %v594
        %v611 = vsub.f32 %v579, %v595
        %v612 = vsub.f32 %v580, %v596
        %v613 = vsub.f32 %v581, %v597
        %v614 = vsub.f32 %v582, %v598
        %v615 = vsub.f32 %v583, %v599
        %v616 = vsub.f32 %v584, %v600
        %v617 = vsub.f32 %v585, %v601
        %v618 = vmax.f32 %v602, 0.0
        %v619 = vmax.f32 %v603, 0.0
        %v620 = vmax.f32 %v604, 0.0
        %v621 = vmax.f32 %v605, 0.0
        %v622 = vmax.f32 %v606, 0.0
        %v623 = vmax.f32 %v607, 0.0
        %v624 = vmax.f32 %v608, 0.0
        %v625 = vmax.f32 %v609, 0.0
        %v626 = vmax.f32 %v610, 0.0
        %v627 = vmax.f32 %v611, 0.0
        %v628 = vmax.f32 %v612, 0.0
        %v629 = vmax.f32 %v613, 0.0
        %v630 = vmax.f32 %v614, 0.0
        %v631 = vmax.f32 %v615, 0.0
        %v632 = vmax.f32 %v616, 0.0
        %v633 = vmax.f32 %v617, 0.0
        %v634 = vadd.f32 %v618, 1e-05
        %v635 = vadd.f32 %v619, 1e-05
        %v636 = vadd.f32 %v620, 1e-05
        %v637 = vadd.f32 %v621, 1e-05
        %v638 = vadd.f32 %v622, 1e-05
        %v639 = vadd.f32 %v623, 1e-05
        %v640 = vadd.f32 %v624, 1e-05
        %v641 = vadd.f32 %v625, 1e-05
        %v642 = vadd.f32 %v626, 1e-05
        %v643 = vadd.f32 %v627, 1e-05
        %v644 = vadd.f32 %v628, 1e-05
        %v645 = vadd.f32 %v629, 1e-05
        %v646 = vadd.f32 %v630, 1e-05
        %v647 = vadd.f32 %v631, 1e-05
        %v648 = vadd.f32 %v632, 1e-05
        %v649 = vadd.f32 %v633, 1e-05
        %v650 = vrsqrt.pop %v634
        %v651 = vrsqrt.pop %v635
        %v652 = vrsqrt.pop %v636
        %v653 = vrsqrt.pop %v637
        %v654 = vrsqrt.pop %v638
        %v655 = vrsqrt.pop %v639
        %v656 = vrsqrt.pop %v640
        %v657 = vrsqrt.pop %v641
        %v658 = vrsqrt.pop %v642
        %v659 = vrsqrt.pop %v643
        %v660 = vrsqrt.pop %v644
        %v661 = vrsqrt.pop %v645
        %v662 = vrsqrt.pop %v646
        %v663 = vrsqrt.pop %v647
        %v664 = vrsqrt.pop %v648
        %v665 = vrsqrt.pop %v649
        %v666 = vmul.f32 %v506, %v650
        %v667 = vmul.f32 %v507, %v651
        %v668 = vmul.f32 %v508, %v652
        %v669 = vmul.f32 %v509, %v653
        %v670 = vmul.f32 %v510, %v654
        %v671 = vmul.f32 %v511, %v655
        %v672 = vmul.f32 %v512, %v656
        %v673 = vmul.f32 %v513, %v657
        %v674 = vmul.f32 %v514, %v658
        %v675 = vmul.f32 %v515, %v659
        %v676 = vmul.f32 %v516, %v660
        %v677 = vmul.f32 %v517, %v661
        %v678 = vmul.f32 %v518, %v662
        %v679 = vmul.f32 %v519, %v663
        %v680 = vmul.f32 %v520, %v664
        %v681 = vmul.f32 %v521, %v665
        %v682 = vmul.f32 %v396, %v650
        %v683 = vmul.f32 %v400, %v651
        %v684 = vmul.f32 %v406, %v652
        %v685 = vmul.f32 %v410, %v653
        %v686 = vmul.f32 %v416, %v654
        %v687 = vmul.f32 %v420, %v655
        %v688 = vmul.f32 %v426, %v656
        %v689 = vmul.f32 %v430, %v657
        %v690 = vmul.f32 %v436, %v658
        %v691 = vmul.f32 %v440, %v659
        %v692 = vmul.f32 %v446, %v660
        %v693 = vmul.f32 %v450, %v661
        %v694 = vmul.f32 %v456, %v662
        %v695 = vmul.f32 %v460, %v663
        %v696 = vmul.f32 %v466, %v664
        %v697 = vmul.f32 %v470, %v665
        %v698 = vsub.f32 %v682, %v666
        %v699 = vsub.f32 %v683, %v667
        %v700 = vsub.f32 %v684, %v668
        %v701 = vsub.f32 %v685, %v669
        %v702 = vsub.f32 %v686, %v670
        %v703 = vsub.f32 %v687, %v671
        %v704 = vsub.f32 %v688, %v672
        %v705 = vsub.f32 %v689, %v673
        %v706 = vsub.f32 %v690, %v674
        %v707 = vsub.f32 %v691, %v675
        %v708 = vsub.f32 %v692, %v676
        %v709 = vsub.f32 %v693, %v677
        %v710 = vsub.f32 %v694, %v678
        %v711 = vsub.f32 %v695, %v679
        %v712 = vsub.f32 %v696, %v680
        %v713 = vsub.f32 %v697, %v681
        %v714 = vlaneseq
        %v715 = vshrl.u32 %v714, 7
        %v716 = vsub.s32 0, %v715
        %v717 = vrot.slane %v216, %v716
        %v718 = vmul.f32 %v698, %v717
        %v719 = vmul.f32 %v699, %v717
        %v720 = vmul.f32 %v700, %v717
        %v721 = vmul.f32 %v701, %v717
        %v722 = vmul.f32 %v702, %v717
        %v723 = vmul.f32 %v703, %v717
        %v724 = vmul.f32 %v704, %v717
        %v725 = vmul.f32 %v705, %v717
        %v726 = vmul.f32 %v706, %v717
        %v727 = vmul.f32 %v707, %v717
        %v728 = vmul.f32 %v708, %v717
        %v729 = vmul.f32 %v709, %v717
        %v730 = vmul.f32 %v710, %v717
        %v731 = vmul.f32 %v711, %v717
        %v732 = vmul.f32 %v712, %v717
        %v733 = vmul.f32 %v713, %v717
        %v734 = vlaneseq
        %v735 = vshrl.u32 %v734, 7
        %v736 = vsub.s32 1, %v735
        %v737 = vrot.slane %v216, %v736
        %v738 = vadd.f32 %v718, %v737
        %v739 = vadd.f32 %v719, %v737
        %v740 = vadd.f32 %v720, %v737
        %v741 = vadd.f32 %v721, %v737
        %v742 = vadd.f32 %v722, %v737
        %v743 = vadd.f32 %v723, %v737
        %v744 = vadd.f32 %v724, %v737
        %v745 = vadd.f32 %v725, %v737
        %v746 = vadd.f32 %v726, %v737
        %v747 = vadd.f32 %v727, %v737
        %v748 = vadd.f32 %v728, %v737
        %v749 = vadd.f32 %v729, %v737
        %v750 = vadd.f32 %v730, %v737
        %v751 = vadd.f32 %v731, %v737
        %v752 = vadd.f32 %v732, %v737
        %v753 = vadd.f32 %v733, %v737
        %v754 = vmax.f32 %v738, 0.0
        %v755 = vmax.f32 %v739, 0.0
        %v756 = vmax.f32 %v740, 0.0
        %v757 = vmax.f32 %v741, 0.0
        %v758 = vmax.f32 %v742, 0.0
        %v759 = vmax.f32 %v743, 0.0
        %v760 = vmax.f32 %v744, 0.0
        %v761 = vmax.f32 %v745, 0.0
        %v762 = vmax.f32 %v746, 0.0
        %v763 = vmax.f32 %v747, 0.0
        %v764 = vmax.f32 %v748, 0.0
        %v765 = vmax.f32 %v749, 0.0
        %v766 = vmax.f32 %v750, 0.0
        %v767 = vmax.f32 %v751, 0.0
        %v768 = vmax.f32 %v752, 0.0
        %v769 = vmax.f32 %v753, 0.0
        %v770 = vpack.c.bf16 %v755, %v754
        %v771 = vpack.c.bf16 %v757, %v756
        %v772 = vpack.c.bf16 %v759, %v758
        %v773 = vpack.c.bf16 %v761, %v760
        %v774 = vpack.c.bf16 %v763, %v762
        %v775 = vpack.c.bf16 %v765, %v764
        %v776 = vpack.c.bf16 %v767, %v766
        %v777 = vpack.c.bf16 %v769, %v768
        %v778 = vld [vmem:[%s2] sm:$0xf]
        %v779 = vld [vmem:[%s2 + $0x4] sm:$0xf]
        %v780 = vld [vmem:[%s2 + $0x8] sm:$0xf]
        %v781 = vld [vmem:[%s2 + $0xc] sm:$0xf]
        %v782 = vld [vmem:[%s2 + $0x10] sm:$0xf]
        %v783 = vld [vmem:[%s2 + $0x14] sm:$0xf]
        %v784 = vld [vmem:[%s2 + $0x18] sm:$0xf]
        %v785 = vld [vmem:[%s2 + $0x1c] sm:$0xf]
        %v786 = vld [vmem:[%s2 + $0x20] sm:$0xf]
        %v787 = vld [vmem:[%s2 + $0x24] sm:$0xf]
        %v788 = vld [vmem:[%s2 + $0x28] sm:$0xf]
        %v789 = vld [vmem:[%s2 + $0x2c] sm:$0xf]
        %v790 = vld [vmem:[%s2 + $0x30] sm:$0xf]
        %v791 = vld [vmem:[%s2 + $0x34] sm:$0xf]
        %v792 = vld [vmem:[%s2 + $0x38] sm:$0xf]
        %v793 = vld [vmem:[%s2 + $0x3c] sm:$0xf]
        %v810 = vunpack.c.l.b16 %v778
        %v811 = vunpack.c.l.b16 %v779
        %v812 = vunpack.c.l.b16 %v780
        %v813 = vunpack.c.l.b16 %v781
        %v814 = vunpack.c.l.b16 %v782
        %v815 = vunpack.c.l.b16 %v783
        %v816 = vunpack.c.l.b16 %v784
        %v817 = vunpack.c.l.b16 %v785
        %v818 = vunpack.c.l.b16 %v786
        %v819 = vunpack.c.l.b16 %v787
        %v820 = vunpack.c.l.b16 %v788
        %v821 = vunpack.c.l.b16 %v789
        %v822 = vunpack.c.l.b16 %v790
        %v823 = vunpack.c.l.b16 %v791
        %v824 = vunpack.c.l.b16 %v792
        %v825 = vunpack.c.l.b16 %v793
        %v826 = vpack.c.b16 %v811, %v810
        %v827 = vpack.c.b16 %v813, %v812
        %v828 = vpack.c.b16 %v815, %v814
        %v829 = vpack.c.b16 %v817, %v816
        %v830 = vpack.c.b16 %v819, %v818
        %v831 = vpack.c.b16 %v821, %v820
        %v832 = vpack.c.b16 %v823, %v822
        %v833 = vpack.c.b16 %v825, %v824
        %842 = vmatprep.subr.bf16.mxu0 0
        %843 = vmatpush1.bf16.msra.mxu0 %v833
        %844 = vmatprep.subr.bf16.mxu0 0
        %845 = vmatpush1.bf16.msra.mxu0 %v832
        %846 = vmatprep.subr.bf16.mxu0 0
        %847 = vmatpush1.bf16.msra.mxu0 %v831
        %848 = vmatprep.subr.bf16.mxu0 0
        %849 = vmatpush1.bf16.msra.mxu0 %v830
        %850 = vmatprep.subr.bf16.mxu0 0
        %851 = vmatpush1.bf16.msra.mxu0 %v829
        %852 = vmatprep.subr.bf16.mxu0 0
        %853 = vmatpush1.bf16.msra.mxu0 %v828
        %854 = vmatprep.subr.bf16.mxu0 0
        %855 = vmatpush1.bf16.msra.mxu0 %v827
        %856 = vmatprep.subr.bf16.mxu0 0
        %857 = vmatpush1.bf16.msra.mxu0 %v826
        %858 = vmatprep.subr.bf16.mxu0 0
        %859 = vmatpush2.bf16.msra.mxu0 0
        %860 = vmatprep.subr.bf16.mxu0 0
        %861 = vmatpush2.bf16.msra.mxu0 0
        %862 = vmatprep.subr.bf16.mxu0 0
        %863 = vmatpush2.bf16.msra.mxu0 0
        %864 = vmatprep.subr.bf16.mxu0 0
        %865 = vmatpush2.bf16.msra.mxu0 0
        %866 = vmatprep.subr.bf16.mxu0 0
        %867 = vmatpush2.bf16.msra.mxu0 0
        %868 = vmatprep.subr.bf16.mxu0 0
        %869 = vmatpush2.bf16.msra.mxu0 0
        %870 = vmatprep.subr.bf16.mxu0 0
        %871 = vmatpush2.bf16.msra.mxu0 0
        %872 = vmatprep.subr.bf16.mxu0 0
        %873 = vmatpush2.bf16.msra.mxu0 0
        %874 = vmatprep.mubr.bf16.mxu0 0
        %875 = vmatmul.mubr.bf16.gmra.mxu0 %v770
        %v876 = vpop.f32.mrf.mxu0
        %v877 = vadd.f32 0.0, %v876
        %v878 = vpop.f32.mrf.mxu0
        %v879 = vpop.f32.mrf.mxu0
        %v880 = vadd.f32 0.0, %v879
        %v881 = vpop.f32.mrf.mxu0
        %882 = vmatprep.mubr.bf16.mxu0 0
        %883 = vmatmul.mubr.bf16.gmra.mxu0 %v771
        %v884 = vpop.f32.mrf.mxu0
        %v885 = vadd.f32 0.0, %v884
        %v886 = vpop.f32.mrf.mxu0
        %v887 = vpop.f32.mrf.mxu0
        %v888 = vadd.f32 0.0, %v887
        %v889 = vpop.f32.mrf.mxu0
        %890 = vmatprep.mubr.bf16.mxu0 0
        %891 = vmatmul.mubr.bf16.gmra.mxu0 %v772
        %v892 = vpop.f32.mrf.mxu0
        %v893 = vadd.f32 0.0, %v892
        %v894 = vpop.f32.mrf.mxu0
        %v895 = vpop.f32.mrf.mxu0
        %v896 = vadd.f32 0.0, %v895
        %v897 = vpop.f32.mrf.mxu0
        %898 = vmatprep.mubr.bf16.mxu0 0
        %899 = vmatmul.mubr.bf16.gmra.mxu0 %v773
        %v900 = vpop.f32.mrf.mxu0
        %v901 = vadd.f32 0.0, %v900
        %v902 = vpop.f32.mrf.mxu0
        %v903 = vpop.f32.mrf.mxu0
        %v904 = vadd.f32 0.0, %v903
        %v905 = vpop.f32.mrf.mxu0
        %906 = vmatprep.mubr.bf16.mxu0 0
        %907 = vmatmul.mubr.bf16.gmra.mxu0 %v774
        %v908 = vpop.f32.mrf.mxu0
        %v909 = vadd.f32 0.0, %v908
        %v910 = vpop.f32.mrf.mxu0
        %v911 = vpop.f32.mrf.mxu0
        %v912 = vadd.f32 0.0, %v911
        %v913 = vpop.f32.mrf.mxu0
        %914 = vmatprep.mubr.bf16.mxu0 0
        %915 = vmatmul.mubr.bf16.gmra.mxu0 %v775
        %v916 = vpop.f32.mrf.mxu0
        %v917 = vadd.f32 0.0, %v916
        %v918 = vpop.f32.mrf.mxu0
        %v919 = vpop.f32.mrf.mxu0
        %v920 = vadd.f32 0.0, %v919
        %v921 = vpop.f32.mrf.mxu0
        %922 = vmatprep.mubr.bf16.mxu0 0
        %923 = vmatmul.mubr.bf16.gmra.mxu0 %v776
        %v924 = vpop.f32.mrf.mxu0
        %v925 = vadd.f32 0.0, %v924
        %v926 = vpop.f32.mrf.mxu0
        %v927 = vpop.f32.mrf.mxu0
        %v928 = vadd.f32 0.0, %v927
        %v929 = vpop.f32.mrf.mxu0
        %930 = vmatprep.mubr.bf16.mxu0 0
        %931 = vmatmul.mubr.bf16.gmra.mxu0 %v777
        %v932 = vpop.f32.mrf.mxu0
        %v933 = vadd.f32 0.0, %v932
        %v934 = vpop.f32.mrf.mxu0
        %v935 = vpop.f32.mrf.mxu0
        %v936 = vadd.f32 0.0, %v935
        %v937 = vpop.f32.mrf.mxu0
        %938 = vdwg.mxu0
        %939 = vadd.xlane.f32.xlu0 %v877
        %v940 = vpop.xlane.xlu0 %939
        %941 = vadd.xlane.f32.xlu0 %v880
        %v942 = vpop.xlane.xlu0 %941
        %943 = vadd.xlane.f32.xlu0 %v885
        %v944 = vpop.xlane.xlu0 %943
        %945 = vadd.xlane.f32.xlu0 %v888
        %v946 = vpop.xlane.xlu0 %945
        %947 = vadd.xlane.f32.xlu0 %v893
        %v948 = vpop.xlane.xlu0 %947
        %949 = vadd.xlane.f32.xlu0 %v896
        %v950 = vpop.xlane.xlu0 %949
        %951 = vadd.xlane.f32.xlu0 %v901
        %v952 = vpop.xlane.xlu0 %951
        %953 = vadd.xlane.f32.xlu0 %v904
        %v954 = vpop.xlane.xlu0 %953
        %955 = vadd.xlane.f32.xlu0 %v909
        %v956 = vpop.xlane.xlu0 %955
        %957 = vadd.xlane.f32.xlu0 %v912
        %v958 = vpop.xlane.xlu0 %957
        %959 = vadd.xlane.f32.xlu0 %v917
        %v960 = vpop.xlane.xlu0 %959
        %961 = vadd.xlane.f32.xlu0 %v920
        %v962 = vpop.xlane.xlu0 %961
        %963 = vadd.xlane.f32.xlu0 %v925
        %v964 = vpop.xlane.xlu0 %963
        %965 = vadd.xlane.f32.xlu0 %v928
        %v966 = vpop.xlane.xlu0 %965
        %967 = vadd.xlane.f32.xlu0 %v933
        %v968 = vpop.xlane.xlu0 %967
        %969 = vadd.xlane.f32.xlu0 %v936
        %v970 = vpop.xlane.xlu0 %969
        %v971 = vmul.f32 %v940, 0.0078125
        %v972 = vmul.f32 %v942, 0.0078125
        %v973 = vmul.f32 %v944, 0.0078125
        %v974 = vmul.f32 %v946, 0.0078125
        %v975 = vmul.f32 %v948, 0.0078125
        %v976 = vmul.f32 %v950, 0.0078125
        %v977 = vmul.f32 %v952, 0.0078125
        %v978 = vmul.f32 %v954, 0.0078125
        %v979 = vmul.f32 %v956, 0.0078125
        %v980 = vmul.f32 %v958, 0.0078125
        %v981 = vmul.f32 %v960, 0.0078125
        %v982 = vmul.f32 %v962, 0.0078125
        %v983 = vmul.f32 %v964, 0.0078125
        %v984 = vmul.f32 %v966, 0.0078125
        %v985 = vmul.f32 %v968, 0.0078125
        %v986 = vmul.f32 %v970, 0.0078125
        %v987 = vmul.f32 %v877, %v877
        %v988 = vmul.f32 %v880, %v880
        %v989 = vmul.f32 %v885, %v885
        %v990 = vmul.f32 %v888, %v888
        %v991 = vmul.f32 %v893, %v893
        %v992 = vmul.f32 %v896, %v896
        %v993 = vmul.f32 %v901, %v901
        %v994 = vmul.f32 %v904, %v904
        %v995 = vmul.f32 %v909, %v909
        %v996 = vmul.f32 %v912, %v912
        %v997 = vmul.f32 %v917, %v917
        %v998 = vmul.f32 %v920, %v920
        %v999 = vmul.f32 %v925, %v925
        %v1000 = vmul.f32 %v928, %v928
        %v1001 = vmul.f32 %v933, %v933
        %v1002 = vmul.f32 %v936, %v936
        %1003 = vadd.xlane.f32.xlu0 %v987
        %v1004 = vpop.xlane.xlu0 %1003
        %1005 = vadd.xlane.f32.xlu0 %v988
        %v1006 = vpop.xlane.xlu0 %1005
        %1007 = vadd.xlane.f32.xlu0 %v989
        %v1008 = vpop.xlane.xlu0 %1007
        %1009 = vadd.xlane.f32.xlu0 %v990
        %v1010 = vpop.xlane.xlu0 %1009
        %1011 = vadd.xlane.f32.xlu0 %v991
        %v1012 = vpop.xlane.xlu0 %1011
        %1013 = vadd.xlane.f32.xlu0 %v992
        %v1014 = vpop.xlane.xlu0 %1013
        %1015 = vadd.xlane.f32.xlu0 %v993
        %v1016 = vpop.xlane.xlu0 %1015
        %1017 = vadd.xlane.f32.xlu0 %v994
        %v1018 = vpop.xlane.xlu0 %1017
        %1019 = vadd.xlane.f32.xlu0 %v995
        %v1020 = vpop.xlane.xlu0 %1019
        %1021 = vadd.xlane.f32.xlu0 %v996
        %v1022 = vpop.xlane.xlu0 %1021
        %1023 = vadd.xlane.f32.xlu0 %v997
        %v1024 = vpop.xlane.xlu0 %1023
        %1025 = vadd.xlane.f32.xlu0 %v998
        %v1026 = vpop.xlane.xlu0 %1025
        %1027 = vadd.xlane.f32.xlu0 %v999
        %v1028 = vpop.xlane.xlu0 %1027
        %1029 = vadd.xlane.f32.xlu0 %v1000
        %v1030 = vpop.xlane.xlu0 %1029
        %1031 = vadd.xlane.f32.xlu0 %v1001
        %v1032 = vpop.xlane.xlu0 %1031
        %1033 = vadd.xlane.f32.xlu0 %v1002
        %v1034 = vpop.xlane.xlu0 %1033
        %v1035 = vmul.f32 %v1004, 0.0078125
        %v1036 = vmul.f32 %v1006, 0.0078125
        %v1037 = vmul.f32 %v1008, 0.0078125
        %v1038 = vmul.f32 %v1010, 0.0078125
        %v1039 = vmul.f32 %v1012, 0.0078125
        %v1040 = vmul.f32 %v1014, 0.0078125
        %v1041 = vmul.f32 %v1016, 0.0078125
        %v1042 = vmul.f32 %v1018, 0.0078125
        %v1043 = vmul.f32 %v1020, 0.0078125
        %v1044 = vmul.f32 %v1022, 0.0078125
        %v1045 = vmul.f32 %v1024, 0.0078125
        %v1046 = vmul.f32 %v1026, 0.0078125
        %v1047 = vmul.f32 %v1028, 0.0078125
        %v1048 = vmul.f32 %v1030, 0.0078125
        %v1049 = vmul.f32 %v1032, 0.0078125
        %v1050 = vmul.f32 %v1034, 0.0078125
        %v1051 = vmul.f32 %v971, %v971
        %v1052 = vmul.f32 %v972, %v972
        %v1053 = vmul.f32 %v973, %v973
        %v1054 = vmul.f32 %v974, %v974
        %v1055 = vmul.f32 %v975, %v975
        %v1056 = vmul.f32 %v976, %v976
        %v1057 = vmul.f32 %v977, %v977
        %v1058 = vmul.f32 %v978, %v978
        %v1059 = vmul.f32 %v979, %v979
        %v1060 = vmul.f32 %v980, %v980
        %v1061 = vmul.f32 %v981, %v981
        %v1062 = vmul.f32 %v982, %v982
        %v1063 = vmul.f32 %v983, %v983
        %v1064 = vmul.f32 %v984, %v984
        %v1065 = vmul.f32 %v985, %v985
        %v1066 = vmul.f32 %v986, %v986
        %v1067 = vsub.f32 %v1035, %v1051
        %v1068 = vsub.f32 %v1036, %v1052
        %v1069 = vsub.f32 %v1037, %v1053
        %v1070 = vsub.f32 %v1038, %v1054
        %v1071 = vsub.f32 %v1039, %v1055
        %v1072 = vsub.f32 %v1040, %v1056
        %v1073 = vsub.f32 %v1041, %v1057
        %v1074 = vsub.f32 %v1042, %v1058
        %v1075 = vsub.f32 %v1043, %v1059
        %v1076 = vsub.f32 %v1044, %v1060
        %v1077 = vsub.f32 %v1045, %v1061
        %v1078 = vsub.f32 %v1046, %v1062
        %v1079 = vsub.f32 %v1047, %v1063
        %v1080 = vsub.f32 %v1048, %v1064
        %v1081 = vsub.f32 %v1049, %v1065
        %v1082 = vsub.f32 %v1050, %v1066
        %v1083 = vmax.f32 %v1067, 0.0
        %v1084 = vmax.f32 %v1068, 0.0
        %v1085 = vmax.f32 %v1069, 0.0
        %v1086 = vmax.f32 %v1070, 0.0
        %v1087 = vmax.f32 %v1071, 0.0
        %v1088 = vmax.f32 %v1072, 0.0
        %v1089 = vmax.f32 %v1073, 0.0
        %v1090 = vmax.f32 %v1074, 0.0
        %v1091 = vmax.f32 %v1075, 0.0
        %v1092 = vmax.f32 %v1076, 0.0
        %v1093 = vmax.f32 %v1077, 0.0
        %v1094 = vmax.f32 %v1078, 0.0
        %v1095 = vmax.f32 %v1079, 0.0
        %v1096 = vmax.f32 %v1080, 0.0
        %v1097 = vmax.f32 %v1081, 0.0
        %v1098 = vmax.f32 %v1082, 0.0
        %v1099 = vadd.f32 %v1083, 1e-05
        %v1100 = vadd.f32 %v1084, 1e-05
        %v1101 = vadd.f32 %v1085, 1e-05
        %v1102 = vadd.f32 %v1086, 1e-05
        %v1103 = vadd.f32 %v1087, 1e-05
        %v1104 = vadd.f32 %v1088, 1e-05
        %v1105 = vadd.f32 %v1089, 1e-05
        %v1106 = vadd.f32 %v1090, 1e-05
        %v1107 = vadd.f32 %v1091, 1e-05
        %v1108 = vadd.f32 %v1092, 1e-05
        %v1109 = vadd.f32 %v1093, 1e-05
        %v1110 = vadd.f32 %v1094, 1e-05
        %v1111 = vadd.f32 %v1095, 1e-05
        %v1112 = vadd.f32 %v1096, 1e-05
        %v1113 = vadd.f32 %v1097, 1e-05
        %v1114 = vadd.f32 %v1098, 1e-05
        %v1115 = vrsqrt.pop %v1099
        %v1116 = vrsqrt.pop %v1100
        %v1117 = vrsqrt.pop %v1101
        %v1118 = vrsqrt.pop %v1102
        %v1119 = vrsqrt.pop %v1103
        %v1120 = vrsqrt.pop %v1104
        %v1121 = vrsqrt.pop %v1105
        %v1122 = vrsqrt.pop %v1106
        %v1123 = vrsqrt.pop %v1107
        %v1124 = vrsqrt.pop %v1108
        %v1125 = vrsqrt.pop %v1109
        %v1126 = vrsqrt.pop %v1110
        %v1127 = vrsqrt.pop %v1111
        %v1128 = vrsqrt.pop %v1112
        %v1129 = vrsqrt.pop %v1113
        %v1130 = vrsqrt.pop %v1114
        %v1131 = vmul.f32 %v971, %v1115
        %v1132 = vmul.f32 %v972, %v1116
        %v1133 = vmul.f32 %v973, %v1117
        %v1134 = vmul.f32 %v974, %v1118
        %v1135 = vmul.f32 %v975, %v1119
        %v1136 = vmul.f32 %v976, %v1120
        %v1137 = vmul.f32 %v977, %v1121
        %v1138 = vmul.f32 %v978, %v1122
        %v1139 = vmul.f32 %v979, %v1123
        %v1140 = vmul.f32 %v980, %v1124
        %v1141 = vmul.f32 %v981, %v1125
        %v1142 = vmul.f32 %v982, %v1126
        %v1143 = vmul.f32 %v983, %v1127
        %v1144 = vmul.f32 %v984, %v1128
        %v1145 = vmul.f32 %v985, %v1129
        %v1146 = vmul.f32 %v986, %v1130
        %v1147 = vmul.f32 %v877, %v1115
        %v1148 = vmul.f32 %v880, %v1116
        %v1149 = vmul.f32 %v885, %v1117
        %v1150 = vmul.f32 %v888, %v1118
        %v1151 = vmul.f32 %v893, %v1119
        %v1152 = vmul.f32 %v896, %v1120
        %v1153 = vmul.f32 %v901, %v1121
        %v1154 = vmul.f32 %v904, %v1122
        %v1155 = vmul.f32 %v909, %v1123
        %v1156 = vmul.f32 %v912, %v1124
        %v1157 = vmul.f32 %v917, %v1125
        %v1158 = vmul.f32 %v920, %v1126
        %v1159 = vmul.f32 %v925, %v1127
        %v1160 = vmul.f32 %v928, %v1128
        %v1161 = vmul.f32 %v933, %v1129
        %v1162 = vmul.f32 %v936, %v1130
        %v1163 = vsub.f32 %v1147, %v1131
        %v1164 = vsub.f32 %v1148, %v1132
        %v1165 = vsub.f32 %v1149, %v1133
        %v1166 = vsub.f32 %v1150, %v1134
        %v1167 = vsub.f32 %v1151, %v1135
        %v1168 = vsub.f32 %v1152, %v1136
        %v1169 = vsub.f32 %v1153, %v1137
        %v1170 = vsub.f32 %v1154, %v1138
        %v1171 = vsub.f32 %v1155, %v1139
        %v1172 = vsub.f32 %v1156, %v1140
        %v1173 = vsub.f32 %v1157, %v1141
        %v1174 = vsub.f32 %v1158, %v1142
        %v1175 = vsub.f32 %v1159, %v1143
        %v1176 = vsub.f32 %v1160, %v1144
        %v1177 = vsub.f32 %v1161, %v1145
        %v1178 = vsub.f32 %v1162, %v1146
        %v1179 = vlaneseq
        %v1180 = vshrl.u32 %v1179, 7
        %v1181 = vsub.s32 2, %v1180
        %v1182 = vrot.slane %v216, %v1181
        %v1183 = vmul.f32 %v1163, %v1182
        %v1184 = vmul.f32 %v1164, %v1182
        %v1185 = vmul.f32 %v1165, %v1182
        %v1186 = vmul.f32 %v1166, %v1182
        %v1187 = vmul.f32 %v1167, %v1182
        %v1188 = vmul.f32 %v1168, %v1182
        %v1189 = vmul.f32 %v1169, %v1182
        %v1190 = vmul.f32 %v1170, %v1182
        %v1191 = vmul.f32 %v1171, %v1182
        %v1192 = vmul.f32 %v1172, %v1182
        %v1193 = vmul.f32 %v1173, %v1182
        %v1194 = vmul.f32 %v1174, %v1182
        %v1195 = vmul.f32 %v1175, %v1182
        %v1196 = vmul.f32 %v1176, %v1182
        %v1197 = vmul.f32 %v1177, %v1182
        %v1198 = vmul.f32 %v1178, %v1182
        %v1199 = vlaneseq
        %v1200 = vshrl.u32 %v1199, 7
        %v1201 = vsub.s32 3, %v1200
        %v1202 = vrot.slane %v216, %v1201
        %v1203 = vadd.f32 %v1183, %v1202
        %v1204 = vadd.f32 %v1184, %v1202
        %v1205 = vadd.f32 %v1185, %v1202
        %v1206 = vadd.f32 %v1186, %v1202
        %v1207 = vadd.f32 %v1187, %v1202
        %v1208 = vadd.f32 %v1188, %v1202
        %v1209 = vadd.f32 %v1189, %v1202
        %v1210 = vadd.f32 %v1190, %v1202
        %v1211 = vadd.f32 %v1191, %v1202
        %v1212 = vadd.f32 %v1192, %v1202
        %v1213 = vadd.f32 %v1193, %v1202
        %v1214 = vadd.f32 %v1194, %v1202
        %v1215 = vadd.f32 %v1195, %v1202
        %v1216 = vadd.f32 %v1196, %v1202
        %v1217 = vadd.f32 %v1197, %v1202
        %v1218 = vadd.f32 %v1198, %v1202
        %1219 = vadd.xlane.f32.xlu0 %v398
        %v1220 = vpop.xlane.xlu0 %1219
        %1221 = vadd.xlane.f32.xlu0 %v402
        %v1222 = vpop.xlane.xlu0 %1221
        %1223 = vadd.xlane.f32.xlu0 %v408
        %v1224 = vpop.xlane.xlu0 %1223
        %1225 = vadd.xlane.f32.xlu0 %v412
        %v1226 = vpop.xlane.xlu0 %1225
        %1227 = vadd.xlane.f32.xlu0 %v418
        %v1228 = vpop.xlane.xlu0 %1227
        %1229 = vadd.xlane.f32.xlu0 %v422
        %v1230 = vpop.xlane.xlu0 %1229
        %1231 = vadd.xlane.f32.xlu0 %v428
        %v1232 = vpop.xlane.xlu0 %1231
        %1233 = vadd.xlane.f32.xlu0 %v432
        %v1234 = vpop.xlane.xlu0 %1233
        %1235 = vadd.xlane.f32.xlu0 %v438
        %v1236 = vpop.xlane.xlu0 %1235
        %1237 = vadd.xlane.f32.xlu0 %v442
        %v1238 = vpop.xlane.xlu0 %1237
        %1239 = vadd.xlane.f32.xlu0 %v448
        %v1240 = vpop.xlane.xlu0 %1239
        %1241 = vadd.xlane.f32.xlu0 %v452
        %v1242 = vpop.xlane.xlu0 %1241
        %1243 = vadd.xlane.f32.xlu0 %v458
        %v1244 = vpop.xlane.xlu0 %1243
        %1245 = vadd.xlane.f32.xlu0 %v462
        %v1246 = vpop.xlane.xlu0 %1245
        %1247 = vadd.xlane.f32.xlu0 %v468
        %v1248 = vpop.xlane.xlu0 %1247
        %1249 = vadd.xlane.f32.xlu0 %v472
        %v1250 = vpop.xlane.xlu0 %1249
        %v1251 = vmul.f32 %v1220, 0.0078125
        %v1252 = vmul.f32 %v1222, 0.0078125
        %v1253 = vmul.f32 %v1224, 0.0078125
        %v1254 = vmul.f32 %v1226, 0.0078125
        %v1255 = vmul.f32 %v1228, 0.0078125
        %v1256 = vmul.f32 %v1230, 0.0078125
        %v1257 = vmul.f32 %v1232, 0.0078125
        %v1258 = vmul.f32 %v1234, 0.0078125
        %v1259 = vmul.f32 %v1236, 0.0078125
        %v1260 = vmul.f32 %v1238, 0.0078125
        %v1261 = vmul.f32 %v1240, 0.0078125
        %v1262 = vmul.f32 %v1242, 0.0078125
        %v1263 = vmul.f32 %v1244, 0.0078125
        %v1264 = vmul.f32 %v1246, 0.0078125
        %v1265 = vmul.f32 %v1248, 0.0078125
        %v1266 = vmul.f32 %v1250, 0.0078125
        %v1267 = vmul.f32 %v398, %v398
        %v1268 = vmul.f32 %v402, %v402
        %v1269 = vmul.f32 %v408, %v408
        %v1270 = vmul.f32 %v412, %v412
        %v1271 = vmul.f32 %v418, %v418
        %v1272 = vmul.f32 %v422, %v422
        %v1273 = vmul.f32 %v428, %v428
        %v1274 = vmul.f32 %v432, %v432
        %v1275 = vmul.f32 %v438, %v438
        %v1276 = vmul.f32 %v442, %v442
        %v1277 = vmul.f32 %v448, %v448
        %v1278 = vmul.f32 %v452, %v452
        %v1279 = vmul.f32 %v458, %v458
        %v1280 = vmul.f32 %v462, %v462
        %v1281 = vmul.f32 %v468, %v468
        %v1282 = vmul.f32 %v472, %v472
        %1283 = vadd.xlane.f32.xlu0 %v1267
        %v1284 = vpop.xlane.xlu0 %1283
        %1285 = vadd.xlane.f32.xlu0 %v1268
        %v1286 = vpop.xlane.xlu0 %1285
        %1287 = vadd.xlane.f32.xlu0 %v1269
        %v1288 = vpop.xlane.xlu0 %1287
        %1289 = vadd.xlane.f32.xlu0 %v1270
        %v1290 = vpop.xlane.xlu0 %1289
        %1291 = vadd.xlane.f32.xlu0 %v1271
        %v1292 = vpop.xlane.xlu0 %1291
        %1293 = vadd.xlane.f32.xlu0 %v1272
        %v1294 = vpop.xlane.xlu0 %1293
        %1295 = vadd.xlane.f32.xlu0 %v1273
        %v1296 = vpop.xlane.xlu0 %1295
        %1297 = vadd.xlane.f32.xlu0 %v1274
        %v1298 = vpop.xlane.xlu0 %1297
        %1299 = vadd.xlane.f32.xlu0 %v1275
        %v1300 = vpop.xlane.xlu0 %1299
        %1301 = vadd.xlane.f32.xlu0 %v1276
        %v1302 = vpop.xlane.xlu0 %1301
        %1303 = vadd.xlane.f32.xlu0 %v1277
        %v1304 = vpop.xlane.xlu0 %1303
        %1305 = vadd.xlane.f32.xlu0 %v1278
        %v1306 = vpop.xlane.xlu0 %1305
        %1307 = vadd.xlane.f32.xlu0 %v1279
        %v1308 = vpop.xlane.xlu0 %1307
        %1309 = vadd.xlane.f32.xlu0 %v1280
        %v1310 = vpop.xlane.xlu0 %1309
        %1311 = vadd.xlane.f32.xlu0 %v1281
        %v1312 = vpop.xlane.xlu0 %1311
        %1313 = vadd.xlane.f32.xlu0 %v1282
        %v1314 = vpop.xlane.xlu0 %1313
        %v1315 = vmul.f32 %v1284, 0.0078125
        %v1316 = vmul.f32 %v1286, 0.0078125
        %v1317 = vmul.f32 %v1288, 0.0078125
        %v1318 = vmul.f32 %v1290, 0.0078125
        %v1319 = vmul.f32 %v1292, 0.0078125
        %v1320 = vmul.f32 %v1294, 0.0078125
        %v1321 = vmul.f32 %v1296, 0.0078125
        %v1322 = vmul.f32 %v1298, 0.0078125
        %v1323 = vmul.f32 %v1300, 0.0078125
        %v1324 = vmul.f32 %v1302, 0.0078125
        %v1325 = vmul.f32 %v1304, 0.0078125
        %v1326 = vmul.f32 %v1306, 0.0078125
        %v1327 = vmul.f32 %v1308, 0.0078125
        %v1328 = vmul.f32 %v1310, 0.0078125
        %v1329 = vmul.f32 %v1312, 0.0078125
        %v1330 = vmul.f32 %v1314, 0.0078125
        %v1331 = vmul.f32 %v1251, %v1251
        %v1332 = vmul.f32 %v1252, %v1252
        %v1333 = vmul.f32 %v1253, %v1253
        %v1334 = vmul.f32 %v1254, %v1254
        %v1335 = vmul.f32 %v1255, %v1255
        %v1336 = vmul.f32 %v1256, %v1256
        %v1337 = vmul.f32 %v1257, %v1257
        %v1338 = vmul.f32 %v1258, %v1258
        %v1339 = vmul.f32 %v1259, %v1259
        %v1340 = vmul.f32 %v1260, %v1260
        %v1341 = vmul.f32 %v1261, %v1261
        %v1342 = vmul.f32 %v1262, %v1262
        %v1343 = vmul.f32 %v1263, %v1263
        %v1344 = vmul.f32 %v1264, %v1264
        %v1345 = vmul.f32 %v1265, %v1265
        %v1346 = vmul.f32 %v1266, %v1266
        %v1347 = vsub.f32 %v1315, %v1331
        %v1348 = vsub.f32 %v1316, %v1332
        %v1349 = vsub.f32 %v1317, %v1333
        %v1350 = vsub.f32 %v1318, %v1334
        %v1351 = vsub.f32 %v1319, %v1335
        %v1352 = vsub.f32 %v1320, %v1336
        %v1353 = vsub.f32 %v1321, %v1337
        %v1354 = vsub.f32 %v1322, %v1338
        %v1355 = vsub.f32 %v1323, %v1339
        %v1356 = vsub.f32 %v1324, %v1340
        %v1357 = vsub.f32 %v1325, %v1341
        %v1358 = vsub.f32 %v1326, %v1342
        %v1359 = vsub.f32 %v1327, %v1343
        %v1360 = vsub.f32 %v1328, %v1344
        %v1361 = vsub.f32 %v1329, %v1345
        %v1362 = vsub.f32 %v1330, %v1346
        %v1363 = vmax.f32 %v1347, 0.0
        %v1364 = vmax.f32 %v1348, 0.0
        %v1365 = vmax.f32 %v1349, 0.0
        %v1366 = vmax.f32 %v1350, 0.0
        %v1367 = vmax.f32 %v1351, 0.0
        %v1368 = vmax.f32 %v1352, 0.0
        %v1369 = vmax.f32 %v1353, 0.0
        %v1370 = vmax.f32 %v1354, 0.0
        %v1371 = vmax.f32 %v1355, 0.0
        %v1372 = vmax.f32 %v1356, 0.0
        %v1373 = vmax.f32 %v1357, 0.0
        %v1374 = vmax.f32 %v1358, 0.0
        %v1375 = vmax.f32 %v1359, 0.0
        %v1376 = vmax.f32 %v1360, 0.0
        %v1377 = vmax.f32 %v1361, 0.0
        %v1378 = vmax.f32 %v1362, 0.0
        %v1379 = vadd.f32 %v1363, 1e-05
        %v1380 = vadd.f32 %v1364, 1e-05
        %v1381 = vadd.f32 %v1365, 1e-05
        %v1382 = vadd.f32 %v1366, 1e-05
        %v1383 = vadd.f32 %v1367, 1e-05
        %v1384 = vadd.f32 %v1368, 1e-05
        %v1385 = vadd.f32 %v1369, 1e-05
        %v1386 = vadd.f32 %v1370, 1e-05
        %v1387 = vadd.f32 %v1371, 1e-05
        %v1388 = vadd.f32 %v1372, 1e-05
        %v1389 = vadd.f32 %v1373, 1e-05
        %v1390 = vadd.f32 %v1374, 1e-05
        %v1391 = vadd.f32 %v1375, 1e-05
        %v1392 = vadd.f32 %v1376, 1e-05
        %v1393 = vadd.f32 %v1377, 1e-05
        %v1394 = vadd.f32 %v1378, 1e-05
        %v1395 = vrsqrt.pop %v1379
        %v1396 = vrsqrt.pop %v1380
        %v1397 = vrsqrt.pop %v1381
        %v1398 = vrsqrt.pop %v1382
        %v1399 = vrsqrt.pop %v1383
        %v1400 = vrsqrt.pop %v1384
        %v1401 = vrsqrt.pop %v1385
        %v1402 = vrsqrt.pop %v1386
        %v1403 = vrsqrt.pop %v1387
        %v1404 = vrsqrt.pop %v1388
        %v1405 = vrsqrt.pop %v1389
        %v1406 = vrsqrt.pop %v1390
        %v1407 = vrsqrt.pop %v1391
        %v1408 = vrsqrt.pop %v1392
        %v1409 = vrsqrt.pop %v1393
        %v1410 = vrsqrt.pop %v1394
        %v1411 = vmul.f32 %v1251, %v1395
        %v1412 = vmul.f32 %v1252, %v1396
        %v1413 = vmul.f32 %v1253, %v1397
        %v1414 = vmul.f32 %v1254, %v1398
        %v1415 = vmul.f32 %v1255, %v1399
        %v1416 = vmul.f32 %v1256, %v1400
        %v1417 = vmul.f32 %v1257, %v1401
        %v1418 = vmul.f32 %v1258, %v1402
        %v1419 = vmul.f32 %v1259, %v1403
        %v1420 = vmul.f32 %v1260, %v1404
        %v1421 = vmul.f32 %v1261, %v1405
        %v1422 = vmul.f32 %v1262, %v1406
        %v1423 = vmul.f32 %v1263, %v1407
        %v1424 = vmul.f32 %v1264, %v1408
        %v1425 = vmul.f32 %v1265, %v1409
        %v1426 = vmul.f32 %v1266, %v1410
        %v1427 = vmul.f32 %v398, %v1395
        %v1428 = vmul.f32 %v402, %v1396
        %v1429 = vmul.f32 %v408, %v1397
        %v1430 = vmul.f32 %v412, %v1398
        %v1431 = vmul.f32 %v418, %v1399
        %v1432 = vmul.f32 %v422, %v1400
        %v1433 = vmul.f32 %v428, %v1401
        %v1434 = vmul.f32 %v432, %v1402
        %v1435 = vmul.f32 %v438, %v1403
        %v1436 = vmul.f32 %v442, %v1404
        %v1437 = vmul.f32 %v448, %v1405
        %v1438 = vmul.f32 %v452, %v1406
        %v1439 = vmul.f32 %v458, %v1407
        %v1440 = vmul.f32 %v462, %v1408
        %v1441 = vmul.f32 %v468, %v1409
        %v1442 = vmul.f32 %v472, %v1410
        %v1443 = vsub.f32 %v1427, %v1411
        %v1444 = vsub.f32 %v1428, %v1412
        %v1445 = vsub.f32 %v1429, %v1413
        %v1446 = vsub.f32 %v1430, %v1414
        %v1447 = vsub.f32 %v1431, %v1415
        %v1448 = vsub.f32 %v1432, %v1416
        %v1449 = vsub.f32 %v1433, %v1417
        %v1450 = vsub.f32 %v1434, %v1418
        %v1451 = vsub.f32 %v1435, %v1419
        %v1452 = vsub.f32 %v1436, %v1420
        %v1453 = vsub.f32 %v1437, %v1421
        %v1454 = vsub.f32 %v1438, %v1422
        %v1455 = vsub.f32 %v1439, %v1423
        %v1456 = vsub.f32 %v1440, %v1424
        %v1457 = vsub.f32 %v1441, %v1425
        %v1458 = vsub.f32 %v1442, %v1426
        %v1459 = vlaneseq
        %v1460 = vshrl.u32 %v1459, 7
        %v1461 = vsub.s32 4, %v1460
        %v1462 = vrot.slane %v216, %v1461
        %v1463 = vmul.f32 %v1443, %v1462
        %v1464 = vmul.f32 %v1444, %v1462
        %v1465 = vmul.f32 %v1445, %v1462
        %v1466 = vmul.f32 %v1446, %v1462
        %v1467 = vmul.f32 %v1447, %v1462
        %v1468 = vmul.f32 %v1448, %v1462
        %v1469 = vmul.f32 %v1449, %v1462
        %v1470 = vmul.f32 %v1450, %v1462
        %v1471 = vmul.f32 %v1451, %v1462
        %v1472 = vmul.f32 %v1452, %v1462
        %v1473 = vmul.f32 %v1453, %v1462
        %v1474 = vmul.f32 %v1454, %v1462
        %v1475 = vmul.f32 %v1455, %v1462
        %v1476 = vmul.f32 %v1456, %v1462
        %v1477 = vmul.f32 %v1457, %v1462
        %v1478 = vmul.f32 %v1458, %v1462
        %v1479 = vlaneseq
        %v1480 = vshrl.u32 %v1479, 7
        %v1481 = vsub.s32 5, %v1480
        %v1482 = vrot.slane %v216, %v1481
        %v1483 = vadd.f32 %v1463, %v1482
        %v1484 = vadd.f32 %v1464, %v1482
        %v1485 = vadd.f32 %v1465, %v1482
        %v1486 = vadd.f32 %v1466, %v1482
        %v1487 = vadd.f32 %v1467, %v1482
        %v1488 = vadd.f32 %v1468, %v1482
        %v1489 = vadd.f32 %v1469, %v1482
        %v1490 = vadd.f32 %v1470, %v1482
        %v1491 = vadd.f32 %v1471, %v1482
        %v1492 = vadd.f32 %v1472, %v1482
        %v1493 = vadd.f32 %v1473, %v1482
        %v1494 = vadd.f32 %v1474, %v1482
        %v1495 = vadd.f32 %v1475, %v1482
        %v1496 = vadd.f32 %v1476, %v1482
        %v1497 = vadd.f32 %v1477, %v1482
        %v1498 = vadd.f32 %v1478, %v1482
        %v1499 = vadd.f32 %v1203, %v1483
        %v1500 = vadd.f32 %v1204, %v1484
        %v1501 = vadd.f32 %v1205, %v1485
        %v1502 = vadd.f32 %v1206, %v1486
        %v1503 = vadd.f32 %v1207, %v1487
        %v1504 = vadd.f32 %v1208, %v1488
        %v1505 = vadd.f32 %v1209, %v1489
        %v1506 = vadd.f32 %v1210, %v1490
        %v1507 = vadd.f32 %v1211, %v1491
        %v1508 = vadd.f32 %v1212, %v1492
        %v1509 = vadd.f32 %v1213, %v1493
        %v1510 = vadd.f32 %v1214, %v1494
        %v1511 = vadd.f32 %v1215, %v1495
        %v1512 = vadd.f32 %v1216, %v1496
        %v1513 = vadd.f32 %v1217, %v1497
        %v1514 = vadd.f32 %v1218, %v1498
        %v1515 = vmax.f32 %v1499, 0.0
        %v1516 = vmax.f32 %v1500, 0.0
        %v1517 = vmax.f32 %v1501, 0.0
        %v1518 = vmax.f32 %v1502, 0.0
        %v1519 = vmax.f32 %v1503, 0.0
        %v1520 = vmax.f32 %v1504, 0.0
        %v1521 = vmax.f32 %v1505, 0.0
        %v1522 = vmax.f32 %v1506, 0.0
        %v1523 = vmax.f32 %v1507, 0.0
        %v1524 = vmax.f32 %v1508, 0.0
        %v1525 = vmax.f32 %v1509, 0.0
        %v1526 = vmax.f32 %v1510, 0.0
        %v1527 = vmax.f32 %v1511, 0.0
        %v1528 = vmax.f32 %v1512, 0.0
        %v1529 = vmax.f32 %v1513, 0.0
        %v1530 = vmax.f32 %v1514, 0.0
        %1531 = vst [vmem:[%s191] sm:$0xff] %v1515
        %1532 = vst [vmem:[%s191 + $0x8] sm:$0xff] %v1516
        %1533 = vst [vmem:[%s191 + $0x10] sm:$0xff] %v1517
        %1534 = vst [vmem:[%s191 + $0x18] sm:$0xff] %v1518
        %1535 = vst [vmem:[%s191 + $0x20] sm:$0xff] %v1519
        %1536 = vst [vmem:[%s191 + $0x28] sm:$0xff] %v1520
        %1537 = vst [vmem:[%s191 + $0x30] sm:$0xff] %v1521
        %1538 = vst [vmem:[%s191 + $0x38] sm:$0xff] %v1522
        %1539 = vst [vmem:[%s191 + $0x40] sm:$0xff] %v1523
        %1540 = vst [vmem:[%s191 + $0x48] sm:$0xff] %v1524
        %1541 = vst [vmem:[%s191 + $0x50] sm:$0xff] %v1525
        %1542 = vst [vmem:[%s191 + $0x58] sm:$0xff] %v1526
        %1543 = vst [vmem:[%s191 + $0x60] sm:$0xff] %v1527
        %1544 = vst [vmem:[%s191 + $0x68] sm:$0xff] %v1528
        %1545 = vst [vmem:[%s191 + $0x70] sm:$0xff] %v1529
        %1546 = vst [vmem:[%s191 + $0x78] sm:$0xff] %v1530
        %s1547 = sand.u32 %s115, 1
        %s1548 = scalar_lea.sflag [#allocation3], %s1547
        %s1549 = sand.u32 %s115, 1
        %s1550 = smul.addr %s1549, 128
        %s1551 = scalar_lea.vmem [#allocation2], %s1550
        // Predicated region
        $region37: #{_lrb_call.1} parent=35 // pred_check
          %p1552 = pneg %p125
        $region38: #{_lrb_call.1} parent=35 // pred_check_branch
          %1554 = sbr.rel (%p1552) target = $region40
        $region39: #{_lrb_call.1} parent=35 // pred_region
          %s1555 = smul.u32 16, %s18
          %s1557 = ssub.s32 2048, 2048
          %1558 = vsyncadd %s1548, %s1557
          %s1559 = smul.addr %s1555, 128
          %s1560 = scalar_lea.hbm %s4, %s1559
          %s1561 = sshll.u32 %s1551, 4
          %s1562 = int_to_ptr.vmem [resolvable:$true] %s1561
          %1567 = dma.vmem_to_hbm [thread:$0]  %s1562, 2048, %s1560, %s1548, 128, 128, 8
        $region40: #{_lrb_call.1} parent=35 // pred_fallthru
          _
      $region36: #{_lrb_call.1} parent=5 // pred_fallthru
        _
      %p1568 = scmp.le.s32.totalorder 2, %s13
      // Predicated region
      $region41: #{_lrb_call.1} parent=5 // pred_check
        %p1569 = pneg %p1568
      $region42: #{_lrb_call.1} parent=5 // pred_check_branch
        %1571 = sbr.rel (%p1569) target = $region44
      $region43: #{_lrb_call.1} parent=5 // pred_region
        %s1572 = ssub.s32 %s13, 2
        // Predicated region
        $region45: #{_lrb_call.1} parent=43 // pred_check
          %p1573 = pneg %p131
        $region46: #{_lrb_call.1} parent=43 // pred_check_branch
          %1575 = sbr.rel (%p1573) target = $region48
        $region47: #{_lrb_call.1} parent=43 // pred_region
          %s1576 = sand.u32 %s116, 1
          %s1577 = scalar_lea.sflag [#allocation3], %s1576
          %s1578 = sand.u32 %s116, 1
          %s1579 = smul.addr %s1578, 128
          %s1580 = scalar_lea.vmem [#allocation2], %s1579
          %1581 = dma.done %s1577, 2048
        $region48: #{_lrb_call.1} parent=43 // pred_fallthru
          _
      $region44: #{_lrb_call.1} parent=5 // pred_fallthru
        _
    $region6: #{_lrb_call.1} parent=1 // loop_footer
      %s17 = sadd.s32 1, %s13
    $region7: #{_lrb_call.1} parent=1 // loop_footer_branch
      %12 = sbr.rel target = $region3
    $region8: #{_lrb_call.1} parent=1 // loop_exit
      _
    %1582 = vsyncpa [#allocation3], 1
    %s1583 = scalar_lea.sflag [#allocation3], 1
    %1584 = vsyncpa %s1583, 1

// kernel: _lrb_call.1
$region0: #{_lrb_call.1}
  #allocation0 [shape = 'u32[]', space=smem, size = 0x4, offset = 0x4, fixed_abs, tag = 'smem constant byte address 0x4 - core index']
  #allocation1 [shape = 'u32[144,128]{1,0:T(1,128)}', space=vmem, size = 0x12000, scoped, tag = 'internal scratch']
  %s0 = inlined_call_operand.vmem [shape: bf16[256,128], index: 0, kind: input, shape index: {}]
  %s1 = inlined_call_operand.vmem [shape: bf16[128,256], index: 1, kind: input, shape index: {}]
  %s2 = inlined_call_operand.vmem [shape: bf16[128,128], index: 2, kind: input, shape index: {}]
  %s3 = inlined_call_operand.vmem [shape: f32[8,128], index: 3, kind: input, shape index: {}]
  %s4 = inlined_call_operand.hbm [shape: f32[256,128], index: 4, kind: output, shape index: {}]
  %s5 = sld [smem:[#allocation0]]
  $region49: #{_lrb_call.1} parent=0
    _
  %s7 = ssub.s32 1, %s5
  %s8 = scalar_select 0, %s7, %s5
  $region1: #{_lrb_call.1} parent=0
    #allocation2 [shape = 'u8[131072]{0}', space=vmem, size = 0x20000, scoped, tag = 'output window, operand 0']
    #allocation3 [shape = 's32[2]{0}', space=sflag, size = 0x8, scoped, tag = 'scoped memory for _lrb_call.1']
    %9 = vsyncpa [#allocation3], 0
    %s10 = scalar_lea.sflag [#allocation3], 1
    %11 = vsyncpa %s10, 0
    loop: start=0, step=1, limit=4
    $region2: #{_lrb_call.1} parent=1 // loop_pre_header
      _
    $region3: #{_lrb_call.1} parent=1 // loop_header
      %s13 = sphi 0, %s17
      %p14 = scmp.ge.s32.totalorder %s13, 4
      %s23 = sphi 0, %s25
      %s26 = sphi 0, %s23
      %s27 = sphi 0, %s26
      %s43 = sphi 0, %s27
      %s47 = sphi 0, %s47
      %s49 = sphi 0, %s47
      %s50 = sphi 0, %s49
      %s64 = sphi 0, %s50
      %s68 = sphi 0, %s68
      %s70 = sphi 0, %s68
      %s71 = sphi 0, %s70
      %s85 = sphi 0, %s71
      %s89 = sphi 0, %s89
      %s91 = sphi 0, %s89
      %s92 = sphi 0, %s91
      %s106 = sphi 0, %s92
      %s112 = sphi 0, %s114
      %s115 = sphi 0, %s112
      %s116 = sphi 0, %s115
      %s132 = sphi 0, %s116
    $region4: #{_lrb_call.1} parent=1 // loop_header_branch
      %16 = sbr.rel (%p14) target = $region8
    $region5: #{_lrb_call.1} parent=1 // loop_body
      %s18 = ssub.s32 %s13, 1
      %s19 = ssub.s32 %s13, 2
      %s20 = sadd.s32 %s13, 1
      %s21 = ssub.s32 %s13, %s20
      %p22 = scmp.eq.s32.totalorder %s21, 0
      %s24 = sadd.s32 %s23, 1
      %s25 = scalar_select %p22, %s23, %s24
      %p28 = pneg %p22
      %p29 = scmp.eq.s32.totalorder %s13, 1
      %p30 = por %p28, %p29
      %p31 = scmp.ne.s32.totalorder %s23, %s26
      %p32 = scmp.eq.s32.totalorder %s13, 0
      %p33 = por %p31, %p32
      %p34 = scmp.ne.s32.totalorder %s23, %s26
      %p35 = scmp.eq.s32.totalorder %s18, 1
      %p36 = por %p34, %p35
      %p37 = scmp.ne.s32.totalorder %s26, %s27
      %p38 = scmp.eq.s32.totalorder %s18, 0
      %p39 = por %p37, %p38
      %p40 = scmp.ne.s32.totalorder %s26, %s27
      %p41 = scmp.eq.s32.totalorder %s19, 1
      %p42 = por %p40, %p41
      %p44 = scmp.ne.s32.totalorder %s27, %s43
      %p45 = scmp.eq.s32.totalorder %s19, 0
      %p46 = por %p44, %p45
      %s48 = sadd.s32 %s47, 1
      %p51 = scmp.eq.s32.totalorder %s13, 1
      %p52 = scmp.ne.s32.totalorder %s47, %s49
      %p53 = scmp.eq.s32.totalorder %s13, 0
      %p54 = por %p52, %p53
      %p55 = scmp.ne.s32.totalorder %s47, %s49
      %p56 = scmp.eq.s32.totalorder %s18, 1
      %p57 = por %p55, %p56
      %p58 = scmp.ne.s32.totalorder %s49, %s50
      %p59 = scmp.eq.s32.totalorder %s18, 0
      %p60 = por %p58, %p59
      %p61 = scmp.ne.s32.totalorder %s49, %s50
      %p62 = scmp.eq.s32.totalorder %s19, 1
      %p63 = por %p61, %p62
      %p65 = scmp.ne.s32.totalorder %s50, %s64
      %p66 = scmp.eq.s32.totalorder %s19, 0
      %p67 = por %p65, %p66
      %s69 = sadd.s32 %s68, 1
      %p72 = scmp.eq.s32.totalorder %s13, 1
      %p73 = scmp.ne.s32.totalorder %s68, %s70
      %p74 = scmp.eq.s32.totalorder %s13, 0
      %p75 = por %p73, %p74
      %p76 = scmp.ne.s32.totalorder %s68, %s70
      %p77 = scmp.eq.s32.totalorder %s18, 1
      %p78 = por %p76, %p77
      %p79 = scmp.ne.s32.totalorder %s70, %s71
      %p80 = scmp.eq.s32.totalorder %s18, 0
      %p81 = por %p79, %p80
      %p82 = scmp.ne.s32.totalorder %s70, %s71
      %p83 = scmp.eq.s32.totalorder %s19, 1
      %p84 = por %p82, %p83
      %p86 = scmp.ne.s32.totalorder %s71, %s85
      %p87 = scmp.eq.s32.totalorder %s19, 0
      %p88 = por %p86, %p87
      %s90 = sadd.s32 %s89, 1
      %p93 = scmp.eq.s32.totalorder %s13, 1
      %p94 = scmp.ne.s32.totalorder %s89, %s91
      %p95 = scmp.eq.s32.totalorder %s13, 0
      %p96 = por %p94, %p95
      %p97 = scmp.ne.s32.totalorder %s89, %s91
      %p98 = scmp.eq.s32.totalorder %s18, 1
      %p99 = por %p97, %p98
      %p100 = scmp.ne.s32.totalorder %s91, %s92
      %p101 = scmp.eq.s32.totalorder %s18, 0
      %p102 = por %p100, %p101
      %p103 = scmp.ne.s32.totalorder %s91, %s92
      %p104 = scmp.eq.s32.totalorder %s19, 1
      %p105 = por %p103, %p104
      %p107 = scmp.ne.s32.totalorder %s92, %s106
      %p108 = scmp.eq.s32.totalorder %s19, 0
      %p109 = por %p107, %p108
      %s110 = ssub.s32 %s13, %s20
      %p111 = scmp.eq.s32.totalorder %s110, 0
      %s113 = sadd.s32 %s112, 1
      %s114 = scalar_select %p111, %s112, %s113
      %p117 = pneg %p111
      %p118 = scmp.eq.s32.totalorder %s13, 1
      %p119 = por %p117, %p118
      %p120 = scmp.ne.s32.totalorder %s112, %s115
      %p121 = scmp.eq.s32.totalorder %s13, 0
      %p122 = por %p120, %p121
      %p123 = scmp.ne.s32.totalorder %s112, %s115
      %p124 = scmp.eq.s32.totalorder %s18, 1
      %p125 = por %p123, %p124
      %p126 = scmp.ne.s32.totalorder %s115, %s116
      %p127 = scmp.eq.s32.totalorder %s18, 0
      %p128 = por %p126, %p127
      %p129 = scmp.ne.s32.totalorder %s115, %s116
      %p130 = scmp.eq.s32.totalorder %s19, 1
      %p131 = por %p129, %p130
      %p133 = scmp.ne.s32.totalorder %s116, %s132
      %p134 = scmp.eq.s32.totalorder %s19, 0
      %p135 = por %p133, %p134
      %p136 = scmp.le.s32.totalorder 1, %s13
      %p137 = scmp.lt.s32.totalorder %s13, 3
      %p138 = pnand %p136, %p137
      %p139 = pneg %p138
      // Predicated region
      $region9: #{_lrb_call.1} parent=5 // pred_check
        _
      $region10: #{_lrb_call.1} parent=5 // pred_check_branch
        %141 = sbr.rel (%p138) target = $region12
      $region11: #{_lrb_call.1} parent=5 // pred_region
        %s142 = ssub.s32 %s13, 1
        // Predicated region
        $region13: #{_lrb_call.1} parent=11 // pred_check
          %p143 = pneg %p60
        $region14: #{_lrb_call.1} parent=11 // pred_check_branch
          %145 = sbr.rel (%p143) target = $region16
        $region15: #{_lrb_call.1} parent=11 // pred_region
          _
        $region16: #{_lrb_call.1} parent=11 // pred_fallthru
          _
        // Predicated region
        $region17: #{_lrb_call.1} parent=11 // pred_check
          %p146 = pneg %p81
        $region18: #{_lrb_call.1} parent=11 // pred_check_branch
          %148 = sbr.rel (%p146) target = $region20
        $region19: #{_lrb_call.1} parent=11 // pred_region
          _
        $region20: #{_lrb_call.1} parent=11 // pred_fallthru
          _
        // Predicated region
        $region21: #{_lrb_call.1} parent=11 // pred_check
          %p149 = pneg %p102
        $region22: #{_lrb_call.1} parent=11 // pred_check_branch
          %151 = sbr.rel (%p149) target = $region24
        $region23: #{_lrb_call.1} parent=11 // pred_region
          _
        $region24: #{_lrb_call.1} parent=11 // pred_fallthru
          _
      $region12: #{_lrb_call.1} parent=5 // pred_fallthru
        _
      %p152 = scmp.lt.s32.totalorder %s13, 2
      // Predicated region
      $region25: #{_lrb_call.1} parent=5 // pred_check
        %p153 = pneg %p152
      $region26: #{_lrb_call.1} parent=5 // pred_check_branch
        %155 = sbr.rel (%p153) target = $region28
      $region27: #{_lrb_call.1} parent=5 // pred_region
        // Predicated region
        $region29: #{_lrb_call.1} parent=27 // pred_check
          %p156 = pneg %p33
        $region30: #{_lrb_call.1} parent=27 // pred_check_branch
          %158 = sbr.rel (%p156) target = $region32
        $region31: #{_lrb_call.1} parent=27 // pred_region
          %s159 = smul.u32 16, %s13
          %p160 = scmp.lt.s32.totalorder %s159, 31
          %s161 = scalar_select %p160, %s159, 31
          %s162 = smul.addr %s161, 4
          %s163 = scalar_lea.vmem %s0, %s162
          %s164 = smul.u32 16, %s13
        $region32: #{_lrb_call.1} parent=27 // pred_fallthru
          _
      $region28: #{_lrb_call.1} parent=5 // pred_fallthru
        _
      %p165 = scmp.le.s32.totalorder 1, %s13
      %p166 = scmp.lt.s32.totalorder %s13, 3
      %p167 = pnand %p165, %p166
      %p168 = pneg %p167
      // Predicated region
      $region33: #{_lrb_call.1} parent=5 // pred_check
        _
      $region34: #{_lrb_call.1} parent=5 // pred_check_branch
        %170 = sbr.rel (%p167) target = $region36
      $region35: #{_lrb_call.1} parent=5 // pred_region
        %s171 = ssub.s32 %s13, 1
        %s172 = smul.u32 16, %s18
        %p173 = scmp.lt.s32.totalorder %s172, 31
        %s174 = scalar_select %p173, %s172, 31
        %s175 = smul.addr %s174, 4
        %s176 = scalar_lea.vmem %s0, %s175
        %p177 = pneg %p39
        %p178 = pneg %p36
        %p179 = pneg %p60
        %p180 = pneg %p57
        %p181 = pneg %p81
        %p182 = pneg %p78
        %p183 = pneg %p102
        %p184 = pneg %p99
        %p185 = pneg %p128
        %p186 = pneg %p125
        %s187 = sand.u32 %s115, 1
        %s188 = scalar_lea.sflag [#allocation3], %s187
        %s189 = sand.u32 %s115, 1
        %s190 = smul.addr %s189, 128
        %s191 = scalar_lea.vmem [#allocation2], %s190
        %s192 = smul.u32 16, %s18
        %p193 = scmp.lt.s32.totalorder %s192, 31
        %s194 = scalar_select %p193, %s192, 31
        %s195 = smul.addr %s194, 4
        %s196 = scalar_lea.vmem %s0, %s195
        %s197 = smul.u32 16, %s18
        %s198 = smul.u32 16, %s18
        %v200 = vld [vmem:[%s196] sm:$0xf]
        %v201 = vld [vmem:[%s196 + $0x4] sm:$0xf]
        %v202 = vld [vmem:[%s196 + $0x8] sm:$0xf]
        %v203 = vld [vmem:[%s196 + $0xc] sm:$0xf]
        %v204 = vld [vmem:[%s196 + $0x10] sm:$0xf]
        %v205 = vld [vmem:[%s196 + $0x14] sm:$0xf]
        %v206 = vld [vmem:[%s196 + $0x18] sm:$0xf]
        %v207 = vld [vmem:[%s196 + $0x1c] sm:$0xf]
        %v208 = vld [vmem:[%s196 + $0x20] sm:$0xf]
        %v209 = vld [vmem:[%s196 + $0x24] sm:$0xf]
        %v210 = vld [vmem:[%s196 + $0x28] sm:$0xf]
        %v211 = vld [vmem:[%s196 + $0x2c] sm:$0xf]
        %v212 = vld [vmem:[%s196 + $0x30] sm:$0xf]
        %v213 = vld [vmem:[%s196 + $0x34] sm:$0xf]
        %v214 = vld [vmem:[%s196 + $0x38] sm:$0xf]
        %v215 = vld [vmem:[%s196 + $0x3c] sm:$0xf]
        %v216 = vld [vmem:[%s3] sm:$0xff]
        %v217 = vld [vmem:[%s1] sm:$0xff]
        %v218 = vld [vmem:[%s1 + $0x8] sm:$0xff]
        %v219 = vld [vmem:[%s1 + $0x10] sm:$0xff]
        %v220 = vld [vmem:[%s1 + $0x18] sm:$0xff]
        %v221 = vld [vmem:[%s1 + $0x20] sm:$0xff]
        %v222 = vld [vmem:[%s1 + $0x28] sm:$0xff]
        %v223 = vld [vmem:[%s1 + $0x30] sm:$0xff]
        %v224 = vld [vmem:[%s1 + $0x38] sm:$0xff]
        %v225 = vld [vmem:[%s1 + $0x40] sm:$0xff]
        %v226 = vld [vmem:[%s1 + $0x48] sm:$0xff]
        %v227 = vld [vmem:[%s1 + $0x50] sm:$0xff]
        %v228 = vld [vmem:[%s1 + $0x58] sm:$0xff]
        %v229 = vld [vmem:[%s1 + $0x60] sm:$0xff]
        %v230 = vld [vmem:[%s1 + $0x68] sm:$0xff]
        %v231 = vld [vmem:[%s1 + $0x70] sm:$0xff]
        %v232 = vld [vmem:[%s1 + $0x78] sm:$0xff]
        %v249 = vunpack.c.l.b16 %v200
        %v250 = vunpack.c.l.b16 %v201
        %v251 = vunpack.c.l.b16 %v202
        %v252 = vunpack.c.l.b16 %v203
        %v253 = vunpack.c.l.b16 %v204
        %v254 = vunpack.c.l.b16 %v205
        %v255 = vunpack.c.l.b16 %v206
        %v256 = vunpack.c.l.b16 %v207
        %v257 = vunpack.c.l.b16 %v208
        %v258 = vunpack.c.l.b16 %v209
        %v259 = vunpack.c.l.b16 %v210
        %v260 = vunpack.c.l.b16 %v211
        %v261 = vunpack.c.l.b16 %v212
        %v262 = vunpack.c.l.b16 %v213
        %v263 = vunpack.c.l.b16 %v214
        %v264 = vunpack.c.l.b16 %v215
        %v265 = vpack.c.b16 %v250, %v249
        %v266 = vpack.c.b16 %v252, %v251
        %v267 = vpack.c.b16 %v254, %v253
        %v268 = vpack.c.b16 %v256, %v255
        %v269 = vpack.c.b16 %v258, %v257
        %v270 = vpack.c.b16 %v260, %v259
        %v271 = vpack.c.b16 %v262, %v261
        %v272 = vpack.c.b16 %v264, %v263
        %v297 = vunpack.c.l.b16 %v217
        %v298 = vunpack.c.h.b16 %v217
        %v299 = vunpack.c.l.b16 %v218
        %v300 = vunpack.c.h.b16 %v218
        %v301 = vunpack.c.l.b16 %v219
        %v302 = vunpack.c.h.b16 %v219
        %v303 = vunpack.c.l.b16 %v220
        %v304 = vunpack.c.h.b16 %v220
        %v305 = vunpack.c.l.b16 %v221
        %v306 = vunpack.c.h.b16 %v221
        %v307 = vunpack.c.l.b16 %v222
        %v308 = vunpack.c.h.b16 %v222
        %v309 = vunpack.c.l.b16 %v223
        %v310 = vunpack.c.h.b16 %v223
        %v311 = vunpack.c.l.b16 %v224
        %v312 = vunpack.c.h.b16 %v224
        %v313 = vunpack.c.l.b16 %v225
        %v314 = vunpack.c.h.b16 %v225
        %v315 = vunpack.c.l.b16 %v226
        %v316 = vunpack.c.h.b16 %v226
        %v317 = vunpack.c.l.b16 %v227
        %v318 = vunpack.c.h.b16 %v227
        %v319 = vunpack.c.l.b16 %v228
        %v320 = vunpack.c.h.b16 %v228
        %v321 = vunpack.c.l.b16 %v229
        %v322 = vunpack.c.h.b16 %v229
        %v323 = vunpack.c.l.b16 %v230
        %v324 = vunpack.c.h.b16 %v230
        %v325 = vunpack.c.l.b16 %v231
        %v326 = vunpack.c.h.b16 %v231
        %v327 = vunpack.c.l.b16 %v232
        %v328 = vunpack.c.h.b16 %v232
        %v329 = vpack.c.b16 %v299, %v297
        %v330 = vpack.c.b16 %v300, %v298
        %v331 = vpack.c.b16 %v303, %v301
        %v332 = vpack.c.b16 %v304, %v302
        %v333 = vpack.c.b16 %v307, %v305
        %v334 = vpack.c.b16 %v308, %v306
        %v335 = vpack.c.b16 %v311, %v309
        %v336 = vpack.c.b16 %v312, %v310
        %v337 = vpack.c.b16 %v315, %v313
        %v338 = vpack.c.b16 %v316, %v314
        %v339 = vpack.c.b16 %v319, %v317
        %v340 = vpack.c.b16 %v320, %v318
        %v341 = vpack.c.b16 %v323, %v321
        %v342 = vpack.c.b16 %v324, %v322
        %v343 = vpack.c.b16 %v327, %v325
        %v344 = vpack.c.b16 %v328, %v326
        %361 = vmatprep.subr.bf16.mxu0 %v344
        %362 = vmatpush1.bf16.msra.mxu0 %v343
        %363 = vmatprep.subr.bf16.mxu0 %v342
        %364 = vmatpush1.bf16.msra.mxu0 %v341
        %365 = vmatprep.subr.bf16.mxu0 %v340
        %366 = vmatpush1.bf16.msra.mxu0 %v339
        %367 = vmatprep.subr.bf16.mxu0 %v338
        %368 = vmatpush1.bf16.msra.mxu0 %v337
        %369 = vmatprep.subr.bf16.mxu0 %v336
        %370 = vmatpush1.bf16.msra.mxu0 %v335
        %371 = vmatprep.subr.bf16.mxu0 %v334
        %372 = vmatpush1.bf16.msra.mxu0 %v333
        %373 = vmatprep.subr.bf16.mxu0 %v332
        %374 = vmatpush1.bf16.msra.mxu0 %v331
        %375 = vmatprep.subr.bf16.mxu0 %v330
        %376 = vmatpush1.bf16.msra.mxu0 %v329
        %377 = vmatprep.subr.bf16.mxu0 0
        %378 = vmatpush2.bf16.msra.mxu0 0
        %379 = vmatprep.subr.bf16.mxu0 0
        %380 = vmatpush2.bf16.msra.mxu0 0
        %381 = vmatprep.subr.bf16.mxu0 0
        %382 = vmatpush2.bf16.msra.mxu0 0
        %383 = vmatprep.subr.bf16.mxu0 0
        %384 = vmatpush2.bf16.msra.mxu0 0
        %385 = vmatprep.subr.bf16.mxu0 0
        %386 = vmatpush2.bf16.msra.mxu0 0
        %387 = vmatprep.subr.bf16.mxu0 0
        %388 = vmatpush2.bf16.msra.mxu0 0
        %389 = vmatprep.subr.bf16.mxu0 0
        %390 = vmatpush2.bf16.msra.mxu0 0
        %391 = vmatprep.subr.bf16.mxu0 0
        %392 = vmatpush2.bf16.msra.mxu0 0
        %393 = vmatprep.mubr.bf16.mxu0 0
        %394 = vmatmul.mubr.bf16.gmra.mxu0 %v265
        %v395 = vpop.f32.mrf.mxu0
        %v396 = vadd.f32 0.0, %v395
        %v397 = vpop.f32.mrf.mxu0
        %v398 = vadd.f32 0.0, %v397
        %v399 = vpop.f32.mrf.mxu0
        %v400 = vadd.f32 0.0, %v399
        %v401 = vpop.f32.mrf.mxu0
        %v402 = vadd.f32 0.0, %v401
        %403 = vmatprep.mubr.bf16.mxu0 0
        %404 = vmatmul.mubr.bf16.gmra.mxu0 %v266
        %v405 = vpop.f32.mrf.mxu0
        %v406 = vadd.f32 0.0, %v405
        %v407 = vpop.f32.mrf.mxu0
        %v408 = vadd.f32 0.0, %v407
        %v409 = vpop.f32.mrf.mxu0
        %v410 = vadd.f32 0.0, %v409
        %v411 = vpop.f32.mrf.mxu0
        %v412 = vadd.f32 0.0, %v411
        %413 = vmatprep.mubr.bf16.mxu0 0
        %414 = vmatmul.mubr.bf16.gmra.mxu0 %v267
        %v415 = vpop.f32.mrf.mxu0
        %v416 = vadd.f32 0.0, %v415
        %v417 = vpop.f32.mrf.mxu0
        %v418 = vadd.f32 0.0, %v417
        %v419 = vpop.f32.mrf.mxu0
        %v420 = vadd.f32 0.0, %v419
        %v421 = vpop.f32.mrf.mxu0
        %v422 = vadd.f32 0.0, %v421
        %423 = vmatprep.mubr.bf16.mxu0 0
        %424 = vmatmul.mubr.bf16.gmra.mxu0 %v268
        %v425 = vpop.f32.mrf.mxu0
        %v426 = vadd.f32 0.0, %v425
        %v427 = vpop.f32.mrf.mxu0
        %v428 = vadd.f32 0.0, %v427
        %v429 = vpop.f32.mrf.mxu0
        %v430 = vadd.f32 0.0, %v429
        %v431 = vpop.f32.mrf.mxu0
        %v432 = vadd.f32 0.0, %v431
        %433 = vmatprep.mubr.bf16.mxu0 0
        %434 = vmatmul.mubr.bf16.gmra.mxu0 %v269
        %v435 = vpop.f32.mrf.mxu0
        %v436 = vadd.f32 0.0, %v435
        %v437 = vpop.f32.mrf.mxu0
        %v438 = vadd.f32 0.0, %v437
        %v439 = vpop.f32.mrf.mxu0
        %v440 = vadd.f32 0.0, %v439
        %v441 = vpop.f32.mrf.mxu0
        %v442 = vadd.f32 0.0, %v441
        %443 = vmatprep.mubr.bf16.mxu0 0
        %444 = vmatmul.mubr.bf16.gmra.mxu0 %v270
        %v445 = vpop.f32.mrf.mxu0
        %v446 = vadd.f32 0.0, %v445
        %v447 = vpop.f32.mrf.mxu0
        %v448 = vadd.f32 0.0, %v447
        %v449 = vpop.f32.mrf.mxu0
        %v450 = vadd.f32 0.0, %v449
        %v451 = vpop.f32.mrf.mxu0
        %v452 = vadd.f32 0.0, %v451
        %453 = vmatprep.mubr.bf16.mxu0 0
        %454 = vmatmul.mubr.bf16.gmra.mxu0 %v271
        %v455 = vpop.f32.mrf.mxu0
        %v456 = vadd.f32 0.0, %v455
        %v457 = vpop.f32.mrf.mxu0
        %v458 = vadd.f32 0.0, %v457
        %v459 = vpop.f32.mrf.mxu0
        %v460 = vadd.f32 0.0, %v459
        %v461 = vpop.f32.mrf.mxu0
        %v462 = vadd.f32 0.0, %v461
        %463 = vmatprep.mubr.bf16.mxu0 0
        %464 = vmatmul.mubr.bf16.gmra.mxu0 %v272
        %v465 = vpop.f32.mrf.mxu0
        %v466 = vadd.f32 0.0, %v465
        %v467 = vpop.f32.mrf.mxu0
        %v468 = vadd.f32 0.0, %v467
        %v469 = vpop.f32.mrf.mxu0
        %v470 = vadd.f32 0.0, %v469
        %v471 = vpop.f32.mrf.mxu0
        %v472 = vadd.f32 0.0, %v471
        %473 = vdwg.mxu0
        %474 = vadd.xlane.f32.xlu0 %v396
        %v475 = vpop.xlane.xlu0 %474
        %476 = vadd.xlane.f32.xlu0 %v400
        %v477 = vpop.xlane.xlu0 %476
        %478 = vadd.xlane.f32.xlu0 %v406
        %v479 = vpop.xlane.xlu0 %478
        %480 = vadd.xlane.f32.xlu0 %v410
        %v481 = vpop.xlane.xlu0 %480
        %482 = vadd.xlane.f32.xlu0 %v416
        %v483 = vpop.xlane.xlu0 %482
        %484 = vadd.xlane.f32.xlu0 %v420
        %v485 = vpop.xlane.xlu0 %484
        %486 = vadd.xlane.f32.xlu0 %v426
        %v487 = vpop.xlane.xlu0 %486
        %488 = vadd.xlane.f32.xlu0 %v430
        %v489 = vpop.xlane.xlu0 %488
        %490 = vadd.xlane.f32.xlu0 %v436
        %v491 = vpop.xlane.xlu0 %490
        %492 = vadd.xlane.f32.xlu0 %v440
        %v493 = vpop.xlane.xlu0 %492
        %494 = vadd.xlane.f32.xlu0 %v446
        %v495 = vpop.xlane.xlu0 %494
        %496 = vadd.xlane.f32.xlu0 %v450
        %v497 = vpop.xlane.xlu0 %496
        %498 = vadd.xlane.f32.xlu0 %v456
        %v499 = vpop.xlane.xlu0 %498
        %500 = vadd.xlane.f32.xlu0 %v460
        %v501 = vpop.xlane.xlu0 %500
        %502 = vadd.xlane.f32.xlu0 %v466
        %v503 = vpop.xlane.xlu0 %502
        %504 = vadd.xlane.f32.xlu0 %v470
        %v505 = vpop.xlane.xlu0 %504
        %v506 = vmul.f32 %v475, 0.0078125
        %v507 = vmul.f32 %v477, 0.0078125
        %v508 = vmul.f32 %v479, 0.0078125
        %v509 = vmul.f32 %v481, 0.0078125
        %v510 = vmul.f32 %v483, 0.0078125
        %v511 = vmul.f32 %v485, 0.0078125
        %v512 = vmul.f32 %v487, 0.0078125
        %v513 = vmul.f32 %v489, 0.0078125
        %v514 = vmul.f32 %v491, 0.0078125
        %v515 = vmul.f32 %v493, 0.0078125
        %v516 = vmul.f32 %v495, 0.0078125
        %v517 = vmul.f32 %v497, 0.0078125
        %v518 = vmul.f32 %v499, 0.0078125
        %v519 = vmul.f32 %v501, 0.0078125
        %v520 = vmul.f32 %v503, 0.0078125
        %v521 = vmul.f32 %v505, 0.0078125
        %v522 = vmul.f32 %v396, %v396
        %v523 = vmul.f32 %v400, %v400
        %v524 = vmul.f32 %v406, %v406
        %v525 = vmul.f32 %v410, %v410
        %v526 = vmul.f32 %v416, %v416
        %v527 = vmul.f32 %v420, %v420
        %v528 = vmul.f32 %v426, %v426
        %v529 = vmul.f32 %v430, %v430
        %v530 = vmul.f32 %v436, %v436
        %v531 = vmul.f32 %v440, %v440
        %v532 = vmul.f32 %v446, %v446
        %v533 = vmul.f32 %v450, %v450
        %v534 = vmul.f32 %v456, %v456
        %v535 = vmul.f32 %v460, %v460
        %v536 = vmul.f32 %v466, %v466
        %v537 = vmul.f32 %v470, %v470
        %538 = vadd.xlane.f32.xlu0 %v522
        %v539 = vpop.xlane.xlu0 %538
        %540 = vadd.xlane.f32.xlu0 %v523
        %v541 = vpop.xlane.xlu0 %540
        %542 = vadd.xlane.f32.xlu0 %v524
        %v543 = vpop.xlane.xlu0 %542
        %544 = vadd.xlane.f32.xlu0 %v525
        %v545 = vpop.xlane.xlu0 %544
        %546 = vadd.xlane.f32.xlu0 %v526
        %v547 = vpop.xlane.xlu0 %546
        %548 = vadd.xlane.f32.xlu0 %v527
        %v549 = vpop.xlane.xlu0 %548
        %550 = vadd.xlane.f32.xlu0 %v528
        %v551 = vpop.xlane.xlu0 %550
        %552 = vadd.xlane.f32.xlu0 %v529
        %v553 = vpop.xlane.xlu0 %552
        %554 = vadd.xlane.f32.xlu0 %v530
        %v555 = vpop.xlane.xlu0 %554
        %556 = vadd.xlane.f32.xlu0 %v531
        %v557 = vpop.xlane.xlu0 %556
        %558 = vadd.xlane.f32.xlu0 %v532
        %v559 = vpop.xlane.xlu0 %558
        %560 = vadd.xlane.f32.xlu0 %v533
        %v561 = vpop.xlane.xlu0 %560
        %562 = vadd.xlane.f32.xlu0 %v534
        %v563 = vpop.xlane.xlu0 %562
        %564 = vadd.xlane.f32.xlu0 %v535
        %v565 = vpop.xlane.xlu0 %564
        %566 = vadd.xlane.f32.xlu0 %v536
        %v567 = vpop.xlane.xlu0 %566
        %568 = vadd.xlane.f32.xlu0 %v537
        %v569 = vpop.xlane.xlu0 %568
        %v570 = vmul.f32 %v539, 0.0078125
        %v571 = vmul.f32 %v541, 0.0078125
        %v572 = vmul.f32 %v543, 0.0078125
        %v573 = vmul.f32 %v545, 0.0078125
        %v574 = vmul.f32 %v547, 0.0078125
        %v575 = vmul.f32 %v549, 0.0078125
        %v576 = vmul.f32 %v551, 0.0078125
        %v577 = vmul.f32 %v553, 0.0078125
        %v578 = vmul.f32 %v555, 0.0078125
        %v579 = vmul.f32 %v557, 0.0078125
        %v580 = vmul.f32 %v559, 0.0078125
        %v581 = vmul.f32 %v561, 0.0078125
        %v582 = vmul.f32 %v563, 0.0078125
        %v583 = vmul.f32 %v565, 0.0078125
        %v584 = vmul.f32 %v567, 0.0078125
        %v585 = vmul.f32 %v569, 0.0078125
        %v586 = vmul.f32 %v506, %v506
        %v587 = vmul.f32 %v507, %v507
        %v588 = vmul.f32 %v508, %v508
        %v589 = vmul.f32 %v509, %v509
        %v590 = vmul.f32 %v510, %v510
        %v591 = vmul.f32 %v511, %v511
        %v592 = vmul.f32 %v512, %v512
        %v593 = vmul.f32 %v513, %v513
        %v594 = vmul.f32 %v514, %v514
        %v595 = vmul.f32 %v515, %v515
        %v596 = vmul.f32 %v516, %v516
        %v597 = vmul.f32 %v517, %v517
        %v598 = vmul.f32 %v518, %v518
        %v599 = vmul.f32 %v519, %v519
        %v600 = vmul.f32 %v520, %v520
        %v601 = vmul.f32 %v521, %v521
        %v602 = vsub.f32 %v570, %v586
        %v603 = vsub.f32 %v571, %v587
        %v604 = vsub.f32 %v572, %v588
        %v605 = vsub.f32 %v573, %v589
        %v606 = vsub.f32 %v574, %v590
        %v607 = vsub.f32 %v575, %v591
        %v608 = vsub.f32 %v576, %v592
        %v609 = vsub.f32 %v577, %v593
        %v610 = vsub.f32 %v578, %v594
        %v611 = vsub.f32 %v579, %v595
        %v612 = vsub.f32 %v580, %v596
        %v613 = vsub.f32 %v581, %v597
        %v614 = vsub.f32 %v582, %v598
        %v615 = vsub.f32 %v583, %v599
        %v616 = vsub.f32 %v584, %v600
        %v617 = vsub.f32 %v585, %v601
        %v618 = vmax.f32 %v602, 0.0
        %v619 = vmax.f32 %v603, 0.0
        %v620 = vmax.f32 %v604, 0.0
        %v621 = vmax.f32 %v605, 0.0
        %v622 = vmax.f32 %v606, 0.0
        %v623 = vmax.f32 %v607, 0.0
        %v624 = vmax.f32 %v608, 0.0
        %v625 = vmax.f32 %v609, 0.0
        %v626 = vmax.f32 %v610, 0.0
        %v627 = vmax.f32 %v611, 0.0
        %v628 = vmax.f32 %v612, 0.0
        %v629 = vmax.f32 %v613, 0.0
        %v630 = vmax.f32 %v614, 0.0
        %v631 = vmax.f32 %v615, 0.0
        %v632 = vmax.f32 %v616, 0.0
        %v633 = vmax.f32 %v617, 0.0
        %v634 = vadd.f32 %v618, 1e-05
        %v635 = vadd.f32 %v619, 1e-05
        %v636 = vadd.f32 %v620, 1e-05
        %v637 = vadd.f32 %v621, 1e-05
        %v638 = vadd.f32 %v622, 1e-05
        %v639 = vadd.f32 %v623, 1e-05
        %v640 = vadd.f32 %v624, 1e-05
        %v641 = vadd.f32 %v625, 1e-05
        %v642 = vadd.f32 %v626, 1e-05
        %v643 = vadd.f32 %v627, 1e-05
        %v644 = vadd.f32 %v628, 1e-05
        %v645 = vadd.f32 %v629, 1e-05
        %v646 = vadd.f32 %v630, 1e-05
        %v647 = vadd.f32 %v631, 1e-05
        %v648 = vadd.f32 %v632, 1e-05
        %v649 = vadd.f32 %v633, 1e-05
        %v650 = vrsqrt.pop %v634
        %v651 = vrsqrt.pop %v635
        %v652 = vrsqrt.pop %v636
        %v653 = vrsqrt.pop %v637
        %v654 = vrsqrt.pop %v638
        %v655 = vrsqrt.pop %v639
        %v656 = vrsqrt.pop %v640
        %v657 = vrsqrt.pop %v641
        %v658 = vrsqrt.pop %v642
        %v659 = vrsqrt.pop %v643
        %v660 = vrsqrt.pop %v644
        %v661 = vrsqrt.pop %v645
        %v662 = vrsqrt.pop %v646
        %v663 = vrsqrt.pop %v647
        %v664 = vrsqrt.pop %v648
        %v665 = vrsqrt.pop %v649
        %v666 = vmul.f32 %v506, %v650
        %v667 = vmul.f32 %v507, %v651
        %v668 = vmul.f32 %v508, %v652
        %v669 = vmul.f32 %v509, %v653
        %v670 = vmul.f32 %v510, %v654
        %v671 = vmul.f32 %v511, %v655
        %v672 = vmul.f32 %v512, %v656
        %v673 = vmul.f32 %v513, %v657
        %v674 = vmul.f32 %v514, %v658
        %v675 = vmul.f32 %v515, %v659
        %v676 = vmul.f32 %v516, %v660
        %v677 = vmul.f32 %v517, %v661
        %v678 = vmul.f32 %v518, %v662
        %v679 = vmul.f32 %v519, %v663
        %v680 = vmul.f32 %v520, %v664
        %v681 = vmul.f32 %v521, %v665
        %v682 = vmul.f32 %v396, %v650
        %v683 = vmul.f32 %v400, %v651
        %v684 = vmul.f32 %v406, %v652
        %v685 = vmul.f32 %v410, %v653
        %v686 = vmul.f32 %v416, %v654
        %v687 = vmul.f32 %v420, %v655
        %v688 = vmul.f32 %v426, %v656
        %v689 = vmul.f32 %v430, %v657
        %v690 = vmul.f32 %v436, %v658
        %v691 = vmul.f32 %v440, %v659
        %v692 = vmul.f32 %v446, %v660
        %v693 = vmul.f32 %v450, %v661
        %v694 = vmul.f32 %v456, %v662
        %v695 = vmul.f32 %v460, %v663
        %v696 = vmul.f32 %v466, %v664
        %v697 = vmul.f32 %v470, %v665
        %v698 = vsub.f32 %v682, %v666
        %v699 = vsub.f32 %v683, %v667
        %v700 = vsub.f32 %v684, %v668
        %v701 = vsub.f32 %v685, %v669
        %v702 = vsub.f32 %v686, %v670
        %v703 = vsub.f32 %v687, %v671
        %v704 = vsub.f32 %v688, %v672
        %v705 = vsub.f32 %v689, %v673
        %v706 = vsub.f32 %v690, %v674
        %v707 = vsub.f32 %v691, %v675
        %v708 = vsub.f32 %v692, %v676
        %v709 = vsub.f32 %v693, %v677
        %v710 = vsub.f32 %v694, %v678
        %v711 = vsub.f32 %v695, %v679
        %v712 = vsub.f32 %v696, %v680
        %v713 = vsub.f32 %v697, %v681
        %v714 = vlaneseq
        %v715 = vshrl.u32 %v714, 7
        %v716 = vsub.s32 0, %v715
        %v717 = vrot.slane %v216, %v716
        %v718 = vmul.f32 %v698, %v717
        %v719 = vmul.f32 %v699, %v717
        %v720 = vmul.f32 %v700, %v717
        %v721 = vmul.f32 %v701, %v717
        %v722 = vmul.f32 %v702, %v717
        %v723 = vmul.f32 %v703, %v717
        %v724 = vmul.f32 %v704, %v717
        %v725 = vmul.f32 %v705, %v717
        %v726 = vmul.f32 %v706, %v717
        %v727 = vmul.f32 %v707, %v717
        %v728 = vmul.f32 %v708, %v717
        %v729 = vmul.f32 %v709, %v717
        %v730 = vmul.f32 %v710, %v717
        %v731 = vmul.f32 %v711, %v717
        %v732 = vmul.f32 %v712, %v717
        %v733 = vmul.f32 %v713, %v717
        %v734 = vlaneseq
        %v735 = vshrl.u32 %v734, 7
        %v736 = vsub.s32 1, %v735
        %v737 = vrot.slane %v216, %v736
        %v738 = vadd.f32 %v718, %v737
        %v739 = vadd.f32 %v719, %v737
        %v740 = vadd.f32 %v720, %v737
        %v741 = vadd.f32 %v721, %v737
        %v742 = vadd.f32 %v722, %v737
        %v743 = vadd.f32 %v723, %v737
        %v744 = vadd.f32 %v724, %v737
        %v745 = vadd.f32 %v725, %v737
        %v746 = vadd.f32 %v726, %v737
        %v747 = vadd.f32 %v727, %v737
        %v748 = vadd.f32 %v728, %v737
        %v749 = vadd.f32 %v729, %v737
        %v750 = vadd.f32 %v730, %v737
        %v751 = vadd.f32 %v731, %v737
        %v752 = vadd.f32 %v732, %v737
        %v753 = vadd.f32 %v733, %v737
        %v754 = vmax.f32 %v738, 0.0
        %v755 = vmax.f32 %v739, 0.0
        %v756 = vmax.f32 %v740, 0.0
        %v757 = vmax.f32 %v741, 0.0
        %v758 = vmax.f32 %v742, 0.0
        %v759 = vmax.f32 %v743, 0.0
        %v760 = vmax.f32 %v744, 0.0
        %v761 = vmax.f32 %v745, 0.0
        %v762 = vmax.f32 %v746, 0.0
        %v763 = vmax.f32 %v747, 0.0
        %v764 = vmax.f32 %v748, 0.0
        %v765 = vmax.f32 %v749, 0.0
        %v766 = vmax.f32 %v750, 0.0
        %v767 = vmax.f32 %v751, 0.0
        %v768 = vmax.f32 %v752, 0.0
        %v769 = vmax.f32 %v753, 0.0
        %v770 = vpack.c.bf16 %v755, %v754
        %v771 = vpack.c.bf16 %v757, %v756
        %v772 = vpack.c.bf16 %v759, %v758
        %v773 = vpack.c.bf16 %v761, %v760
        %v774 = vpack.c.bf16 %v763, %v762
        %v775 = vpack.c.bf16 %v765, %v764
        %v776 = vpack.c.bf16 %v767, %v766
        %v777 = vpack.c.bf16 %v769, %v768
        %v778 = vld [vmem:[%s2] sm:$0xf]
        %v779 = vld [vmem:[%s2 + $0x4] sm:$0xf]
        %v780 = vld [vmem:[%s2 + $0x8] sm:$0xf]
        %v781 = vld [vmem:[%s2 + $0xc] sm:$0xf]
        %v782 = vld [vmem:[%s2 + $0x10] sm:$0xf]
        %v783 = vld [vmem:[%s2 + $0x14] sm:$0xf]
        %v784 = vld [vmem:[%s2 + $0x18] sm:$0xf]
        %v785 = vld [vmem:[%s2 + $0x1c] sm:$0xf]
        %v786 = vld [vmem:[%s2 + $0x20] sm:$0xf]
        %v787 = vld [vmem:[%s2 + $0x24] sm:$0xf]
        %v788 = vld [vmem:[%s2 + $0x28] sm:$0xf]
        %v789 = vld [vmem:[%s2 + $0x2c] sm:$0xf]
        %v790 = vld [vmem:[%s2 + $0x30] sm:$0xf]
        %v791 = vld [vmem:[%s2 + $0x34] sm:$0xf]
        %v792 = vld [vmem:[%s2 + $0x38] sm:$0xf]
        %v793 = vld [vmem:[%s2 + $0x3c] sm:$0xf]
        %v810 = vunpack.c.l.b16 %v778
        %v811 = vunpack.c.l.b16 %v779
        %v812 = vunpack.c.l.b16 %v780
        %v813 = vunpack.c.l.b16 %v781
        %v814 = vunpack.c.l.b16 %v782
        %v815 = vunpack.c.l.b16 %v783
        %v816 = vunpack.c.l.b16 %v784
        %v817 = vunpack.c.l.b16 %v785
        %v818 = vunpack.c.l.b16 %v786
        %v819 = vunpack.c.l.b16 %v787
        %v820 = vunpack.c.l.b16 %v788
        %v821 = vunpack.c.l.b16 %v789
        %v822 = vunpack.c.l.b16 %v790
        %v823 = vunpack.c.l.b16 %v791
        %v824 = vunpack.c.l.b16 %v792
        %v825 = vunpack.c.l.b16 %v793
        %v826 = vpack.c.b16 %v811, %v810
        %v827 = vpack.c.b16 %v813, %v812
        %v828 = vpack.c.b16 %v815, %v814
        %v829 = vpack.c.b16 %v817, %v816
        %v830 = vpack.c.b16 %v819, %v818
        %v831 = vpack.c.b16 %v821, %v820
        %v832 = vpack.c.b16 %v823, %v822
        %v833 = vpack.c.b16 %v825, %v824
        %842 = vmatprep.subr.bf16.mxu0 0
        %843 = vmatpush1.bf16.msra.mxu0 %v833
        %844 = vmatprep.subr.bf16.mxu0 0
        %845 = vmatpush1.bf16.msra.mxu0 %v832
        %846 = vmatprep.subr.bf16.mxu0 0
        %847 = vmatpush1.bf16.msra.mxu0 %v831
        %848 = vmatprep.subr.bf16.mxu0 0
        %849 = vmatpush1.bf16.msra.mxu0 %v830
        %850 = vmatprep.subr.bf16.mxu0 0
        %851 = vmatpush1.bf16.msra.mxu0 %v829
        %852 = vmatprep.subr.bf16.mxu0 0
        %853 = vmatpush1.bf16.msra.mxu0 %v828
        %854 = vmatprep.subr.bf16.mxu0 0
        %855 = vmatpush1.bf16.msra.mxu0 %v827
        %856 = vmatprep.subr.bf16.mxu0 0
        %857 = vmatpush1.bf16.msra.mxu0 %v826
        %858 = vmatprep.subr.bf16.mxu0 0
        %859 = vmatpush2.bf16.msra.mxu0 0
        %860 = vmatprep.subr.bf16.mxu0 0
        %861 = vmatpush2.bf16.msra.mxu0 0
        %862 = vmatprep.subr.bf16.mxu0 0
        %863 = vmatpush2.bf16.msra.mxu0 0
        %864 = vmatprep.subr.bf16.mxu0 0
        %865 = vmatpush2.bf16.msra.mxu0 0
        %866 = vmatprep.subr.bf16.mxu0 0
        %867 = vmatpush2.bf16.msra.mxu0 0
        %868 = vmatprep.subr.bf16.mxu0 0
        %869 = vmatpush2.bf16.msra.mxu0 0
        %870 = vmatprep.subr.bf16.mxu0 0
        %871 = vmatpush2.bf16.msra.mxu0 0
        %872 = vmatprep.subr.bf16.mxu0 0
        %873 = vmatpush2.bf16.msra.mxu0 0
        %874 = vmatprep.mubr.bf16.mxu0 0
        %875 = vmatmul.mubr.bf16.gmra.mxu0 %v770
        %v876 = vpop.f32.mrf.mxu0
        %v877 = vadd.f32 0.0, %v876
        %v878 = vpop.f32.mrf.mxu0
        %v879 = vpop.f32.mrf.mxu0
        %v880 = vadd.f32 0.0, %v879
        %v881 = vpop.f32.mrf.mxu0
        %882 = vmatprep.mubr.bf16.mxu0 0
        %883 = vmatmul.mubr.bf16.gmra.mxu0 %v771
        %v884 = vpop.f32.mrf.mxu0
        %v885 = vadd.f32 0.0, %v884
        %v886 = vpop.f32.mrf.mxu0
        %v887 = vpop.f32.mrf.mxu0
        %v888 = vadd.f32 0.0, %v887
        %v889 = vpop.f32.mrf.mxu0
        %890 = vmatprep.mubr.bf16.mxu0 0
        %891 = vmatmul.mubr.bf16.gmra.mxu0 %v772
        %v892 = vpop.f32.mrf.mxu0
        %v893 = vadd.f32 0.0, %v892
        %v894 = vpop.f32.mrf.mxu0
        %v895 = vpop.f32.mrf.mxu0
        %v896 = vadd.f32 0.0, %v895
        %v897 = vpop.f32.mrf.mxu0
        %898 = vmatprep.mubr.bf16.mxu0 0
        %899 = vmatmul.mubr.bf16.gmra.mxu0 %v773
        %v900 = vpop.f32.mrf.mxu0
        %v901 = vadd.f32 0.0, %v900
        %v902 = vpop.f32.mrf.mxu0
        %v903 = vpop.f32.mrf.mxu0
        %v904 = vadd.f32 0.0, %v903
        %v905 = vpop.f32.mrf.mxu0
        %906 = vmatprep.mubr.bf16.mxu0 0
        %907 = vmatmul.mubr.bf16.gmra.mxu0 %v774
        %v908 = vpop.f32.mrf.mxu0
        %v909 = vadd.f32 0.0, %v908
        %v910 = vpop.f32.mrf.mxu0
        %v911 = vpop.f32.mrf.mxu0
        %v912 = vadd.f32 0.0, %v911
        %v913 = vpop.f32.mrf.mxu0
        %914 = vmatprep.mubr.bf16.mxu0 0
        %915 = vmatmul.mubr.bf16.gmra.mxu0 %v775
        %v916 = vpop.f32.mrf.mxu0
        %v917 = vadd.f32 0.0, %v916
        %v918 = vpop.f32.mrf.mxu0
        %v919 = vpop.f32.mrf.mxu0
        %v920 = vadd.f32 0.0, %v919
        %v921 = vpop.f32.mrf.mxu0
        %922 = vmatprep.mubr.bf16.mxu0 0
        %923 = vmatmul.mubr.bf16.gmra.mxu0 %v776
        %v924 = vpop.f32.mrf.mxu0
        %v925 = vadd.f32 0.0, %v924
        %v926 = vpop.f32.mrf.mxu0
        %v927 = vpop.f32.mrf.mxu0
        %v928 = vadd.f32 0.0, %v927
        %v929 = vpop.f32.mrf.mxu0
        %930 = vmatprep.mubr.bf16.mxu0 0
        %931 = vmatmul.mubr.bf16.gmra.mxu0 %v777
        %v932 = vpop.f32.mrf.mxu0
        %v933 = vadd.f32 0.0, %v932
        %v934 = vpop.f32.mrf.mxu0
        %v935 = vpop.f32.mrf.mxu0
        %v936 = vadd.f32 0.0, %v935
        %v937 = vpop.f32.mrf.mxu0
        %938 = vdwg.mxu0
        %939 = vadd.xlane.f32.xlu0 %v877
        %v940 = vpop.xlane.xlu0 %939
        %941 = vadd.xlane.f32.xlu0 %v880
        %v942 = vpop.xlane.xlu0 %941
        %943 = vadd.xlane.f32.xlu0 %v885
        %v944 = vpop.xlane.xlu0 %943
        %945 = vadd.xlane.f32.xlu0 %v888
        %v946 = vpop.xlane.xlu0 %945
        %947 = vadd.xlane.f32.xlu0 %v893
        %v948 = vpop.xlane.xlu0 %947
        %949 = vadd.xlane.f32.xlu0 %v896
        %v950 = vpop.xlane.xlu0 %949
        %951 = vadd.xlane.f32.xlu0 %v901
        %v952 = vpop.xlane.xlu0 %951
        %953 = vadd.xlane.f32.xlu0 %v904
        %v954 = vpop.xlane.xlu0 %953
        %955 = vadd.xlane.f32.xlu0 %v909
        %v956 = vpop.xlane.xlu0 %955
        %957 = vadd.xlane.f32.xlu0 %v912
        %v958 = vpop.xlane.xlu0 %957
        %959 = vadd.xlane.f32.xlu0 %v917
        %v960 = vpop.xlane.xlu0 %959
        %961 = vadd.xlane.f32.xlu0 %v920
        %v962 = vpop.xlane.xlu0 %961
        %963 = vadd.xlane.f32.xlu0 %v925
        %v964 = vpop.xlane.xlu0 %963
        %965 = vadd.xlane.f32.xlu0 %v928
        %v966 = vpop.xlane.xlu0 %965
        %967 = vadd.xlane.f32.xlu0 %v933
        %v968 = vpop.xlane.xlu0 %967
        %969 = vadd.xlane.f32.xlu0 %v936
        %v970 = vpop.xlane.xlu0 %969
        %v971 = vmul.f32 %v940, 0.0078125
        %v972 = vmul.f32 %v942, 0.0078125
        %v973 = vmul.f32 %v944, 0.0078125
        %v974 = vmul.f32 %v946, 0.0078125
        %v975 = vmul.f32 %v948, 0.0078125
        %v976 = vmul.f32 %v950, 0.0078125
        %v977 = vmul.f32 %v952, 0.0078125
        %v978 = vmul.f32 %v954, 0.0078125
        %v979 = vmul.f32 %v956, 0.0078125
        %v980 = vmul.f32 %v958, 0.0078125
        %v981 = vmul.f32 %v960, 0.0078125
        %v982 = vmul.f32 %v962, 0.0078125
        %v983 = vmul.f32 %v964, 0.0078125
        %v984 = vmul.f32 %v966, 0.0078125
        %v985 = vmul.f32 %v968, 0.0078125
        %v986 = vmul.f32 %v970, 0.0078125
        %v987 = vmul.f32 %v877, %v877
        %v988 = vmul.f32 %v880, %v880
        %v989 = vmul.f32 %v885, %v885
        %v990 = vmul.f32 %v888, %v888
        %v991 = vmul.f32 %v893, %v893
        %v992 = vmul.f32 %v896, %v896
        %v993 = vmul.f32 %v901, %v901
        %v994 = vmul.f32 %v904, %v904
        %v995 = vmul.f32 %v909, %v909
        %v996 = vmul.f32 %v912, %v912
        %v997 = vmul.f32 %v917, %v917
        %v998 = vmul.f32 %v920, %v920
        %v999 = vmul.f32 %v925, %v925
        %v1000 = vmul.f32 %v928, %v928
        %v1001 = vmul.f32 %v933, %v933
        %v1002 = vmul.f32 %v936, %v936
        %1003 = vadd.xlane.f32.xlu0 %v987
        %v1004 = vpop.xlane.xlu0 %1003
        %1005 = vadd.xlane.f32.xlu0 %v988
        %v1006 = vpop.xlane.xlu0 %1005
        %1007 = vadd.xlane.f32.xlu0 %v989
        %v1008 = vpop.xlane.xlu0 %1007
        %1009 = vadd.xlane.f32.xlu0 %v990
        %v1010 = vpop.xlane.xlu0 %1009
        %1011 = vadd.xlane.f32.xlu0 %v991
        %v1012 = vpop.xlane.xlu0 %1011
        %1013 = vadd.xlane.f32.xlu0 %v992
        %v1014 = vpop.xlane.xlu0 %1013
        %1015 = vadd.xlane.f32.xlu0 %v993
        %v1016 = vpop.xlane.xlu0 %1015
        %1017 = vadd.xlane.f32.xlu0 %v994
        %v1018 = vpop.xlane.xlu0 %1017
        %1019 = vadd.xlane.f32.xlu0 %v995
        %v1020 = vpop.xlane.xlu0 %1019
        %1021 = vadd.xlane.f32.xlu0 %v996
        %v1022 = vpop.xlane.xlu0 %1021
        %1023 = vadd.xlane.f32.xlu0 %v997
        %v1024 = vpop.xlane.xlu0 %1023
        %1025 = vadd.xlane.f32.xlu0 %v998
        %v1026 = vpop.xlane.xlu0 %1025
        %1027 = vadd.xlane.f32.xlu0 %v999
        %v1028 = vpop.xlane.xlu0 %1027
        %1029 = vadd.xlane.f32.xlu0 %v1000
        %v1030 = vpop.xlane.xlu0 %1029
        %1031 = vadd.xlane.f32.xlu0 %v1001
        %v1032 = vpop.xlane.xlu0 %1031
        %1033 = vadd.xlane.f32.xlu0 %v1002
        %v1034 = vpop.xlane.xlu0 %1033
        %v1035 = vmul.f32 %v1004, 0.0078125
        %v1036 = vmul.f32 %v1006, 0.0078125
        %v1037 = vmul.f32 %v1008, 0.0078125
        %v1038 = vmul.f32 %v1010, 0.0078125
        %v1039 = vmul.f32 %v1012, 0.0078125
        %v1040 = vmul.f32 %v1014, 0.0078125
        %v1041 = vmul.f32 %v1016, 0.0078125
        %v1042 = vmul.f32 %v1018, 0.0078125
        %v1043 = vmul.f32 %v1020, 0.0078125
        %v1044 = vmul.f32 %v1022, 0.0078125
        %v1045 = vmul.f32 %v1024, 0.0078125
        %v1046 = vmul.f32 %v1026, 0.0078125
        %v1047 = vmul.f32 %v1028, 0.0078125
        %v1048 = vmul.f32 %v1030, 0.0078125
        %v1049 = vmul.f32 %v1032, 0.0078125
        %v1050 = vmul.f32 %v1034, 0.0078125
        %v1051 = vmul.f32 %v971, %v971
        %v1052 = vmul.f32 %v972, %v972
        %v1053 = vmul.f32 %v973, %v973
        %v1054 = vmul.f32 %v974, %v974
        %v1055 = vmul.f32 %v975, %v975
        %v1056 = vmul.f32 %v976, %v976
        %v1057 = vmul.f32 %v977, %v977
        %v1058 = vmul.f32 %v978, %v978
        %v1059 = vmul.f32 %v979, %v979
        %v1060 = vmul.f32 %v980, %v980
        %v1061 = vmul.f32 %v981, %v981
        %v1062 = vmul.f32 %v982, %v982
        %v1063 = vmul.f32 %v983, %v983
        %v1064 = vmul.f32 %v984, %v984
        %v1065 = vmul.f32 %v985, %v985
        %v1066 = vmul.f32 %v986, %v986
        %v1067 = vsub.f32 %v1035, %v1051
        %v1068 = vsub.f32 %v1036, %v1052
        %v1069 = vsub.f32 %v1037, %v1053
        %v1070 = vsub.f32 %v1038, %v1054
        %v1071 = vsub.f32 %v1039, %v1055
        %v1072 = vsub.f32 %v1040, %v1056
        %v1073 = vsub.f32 %v1041, %v1057
        %v1074 = vsub.f32 %v1042, %v1058
        %v1075 = vsub.f32 %v1043, %v1059
        %v1076 = vsub.f32 %v1044, %v1060
        %v1077 = vsub.f32 %v1045, %v1061
        %v1078 = vsub.f32 %v1046, %v1062
        %v1079 = vsub.f32 %v1047, %v1063
        %v1080 = vsub.f32 %v1048, %v1064
        %v1081 = vsub.f32 %v1049, %v1065
        %v1082 = vsub.f32 %v1050, %v1066
        %v1083 = vmax.f32 %v1067, 0.0
        %v1084 = vmax.f32 %v1068, 0.0
        %v1085 = vmax.f32 %v1069, 0.0
        %v1086 = vmax.f32 %v1070, 0.0
        %v1087 = vmax.f32 %v1071, 0.0
        %v1088 = vmax.f32 %v1072, 0.0
        %v1089 = vmax.f32 %v1073, 0.0
        %v1090 = vmax.f32 %v1074, 0.0
        %v1091 = vmax.f32 %v1075, 0.0
        %v1092 = vmax.f32 %v1076, 0.0
        %v1093 = vmax.f32 %v1077, 0.0
        %v1094 = vmax.f32 %v1078, 0.0
        %v1095 = vmax.f32 %v1079, 0.0
        %v1096 = vmax.f32 %v1080, 0.0
        %v1097 = vmax.f32 %v1081, 0.0
        %v1098 = vmax.f32 %v1082, 0.0
        %v1099 = vadd.f32 %v1083, 1e-05
        %v1100 = vadd.f32 %v1084, 1e-05
        %v1101 = vadd.f32 %v1085, 1e-05
        %v1102 = vadd.f32 %v1086, 1e-05
        %v1103 = vadd.f32 %v1087, 1e-05
        %v1104 = vadd.f32 %v1088, 1e-05
        %v1105 = vadd.f32 %v1089, 1e-05
        %v1106 = vadd.f32 %v1090, 1e-05
        %v1107 = vadd.f32 %v1091, 1e-05
        %v1108 = vadd.f32 %v1092, 1e-05
        %v1109 = vadd.f32 %v1093, 1e-05
        %v1110 = vadd.f32 %v1094, 1e-05
        %v1111 = vadd.f32 %v1095, 1e-05
        %v1112 = vadd.f32 %v1096, 1e-05
        %v1113 = vadd.f32 %v1097, 1e-05
        %v1114 = vadd.f32 %v1098, 1e-05
        %v1115 = vrsqrt.pop %v1099
        %v1116 = vrsqrt.pop %v1100
        %v1117 = vrsqrt.pop %v1101
        %v1118 = vrsqrt.pop %v1102
        %v1119 = vrsqrt.pop %v1103
        %v1120 = vrsqrt.pop %v1104
        %v1121 = vrsqrt.pop %v1105
        %v1122 = vrsqrt.pop %v1106
        %v1123 = vrsqrt.pop %v1107
        %v1124 = vrsqrt.pop %v1108
        %v1125 = vrsqrt.pop %v1109
        %v1126 = vrsqrt.pop %v1110
        %v1127 = vrsqrt.pop %v1111
        %v1128 = vrsqrt.pop %v1112
        %v1129 = vrsqrt.pop %v1113
        %v1130 = vrsqrt.pop %v1114
        %v1131 = vmul.f32 %v971, %v1115
        %v1132 = vmul.f32 %v972, %v1116
        %v1133 = vmul.f32 %v973, %v1117
        %v1134 = vmul.f32 %v974, %v1118
        %v1135 = vmul.f32 %v975, %v1119
        %v1136 = vmul.f32 %v976, %v1120
        %v1137 = vmul.f32 %v977, %v1121
        %v1138 = vmul.f32 %v978, %v1122
        %v1139 = vmul.f32 %v979, %v1123
        %v1140 = vmul.f32 %v980, %v1124
        %v1141 = vmul.f32 %v981, %v1125
        %v1142 = vmul.f32 %v982, %v1126
        %v1143 = vmul.f32 %v983, %v1127
        %v1144 = vmul.f32 %v984, %v1128
        %v1145 = vmul.f32 %v985, %v1129
        %v1146 = vmul.f32 %v986, %v1130
        %v1147 = vmul.f32 %v877, %v1115
        %v1148 = vmul.f32 %v880, %v1116
        %v1149 = vmul.f32 %v885, %v1117
        %v1150 = vmul.f32 %v888, %v1118
        %v1151 = vmul.f32 %v893, %v1119
        %v1152 = vmul.f32 %v896, %v1120
        %v1153 = vmul.f32 %v901, %v1121
        %v1154 = vmul.f32 %v904, %v1122
        %v1155 = vmul.f32 %v909, %v1123
        %v1156 = vmul.f32 %v912, %v1124
        %v1157 = vmul.f32 %v917, %v1125
        %v1158 = vmul.f32 %v920, %v1126
        %v1159 = vmul.f32 %v925, %v1127
        %v1160 = vmul.f32 %v928, %v1128
        %v1161 = vmul.f32 %v933, %v1129
        %v1162 = vmul.f32 %v936, %v1130
        %v1163 = vsub.f32 %v1147, %v1131
        %v1164 = vsub.f32 %v1148, %v1132
        %v1165 = vsub.f32 %v1149, %v1133
        %v1166 = vsub.f32 %v1150, %v1134
        %v1167 = vsub.f32 %v1151, %v1135
        %v1168 = vsub.f32 %v1152, %v1136
        %v1169 = vsub.f32 %v1153, %v1137
        %v1170 = vsub.f32 %v1154, %v1138
        %v1171 = vsub.f32 %v1155, %v1139
        %v1172 = vsub.f32 %v1156, %v1140
        %v1173 = vsub.f32 %v1157, %v1141
        %v1174 = vsub.f32 %v1158, %v1142
        %v1175 = vsub.f32 %v1159, %v1143
        %v1176 = vsub.f32 %v1160, %v1144
        %v1177 = vsub.f32 %v1161, %v1145
        %v1178 = vsub.f32 %v1162, %v1146
        %v1179 = vlaneseq
        %v1180 = vshrl.u32 %v1179, 7
        %v1181 = vsub.s32 2, %v1180
        %v1182 = vrot.slane %v216, %v1181
        %v1183 = vmul.f32 %v1163, %v1182
        %v1184 = vmul.f32 %v1164, %v1182
        %v1185 = vmul.f32 %v1165, %v1182
        %v1186 = vmul.f32 %v1166, %v1182
        %v1187 = vmul.f32 %v1167, %v1182
        %v1188 = vmul.f32 %v1168, %v1182
        %v1189 = vmul.f32 %v1169, %v1182
        %v1190 = vmul.f32 %v1170, %v1182
        %v1191 = vmul.f32 %v1171, %v1182
        %v1192 = vmul.f32 %v1172, %v1182
        %v1193 = vmul.f32 %v1173, %v1182
        %v1194 = vmul.f32 %v1174, %v1182
        %v1195 = vmul.f32 %v1175, %v1182
        %v1196 = vmul.f32 %v1176, %v1182
        %v1197 = vmul.f32 %v1177, %v1182
        %v1198 = vmul.f32 %v1178, %v1182
        %v1199 = vlaneseq
        %v1200 = vshrl.u32 %v1199, 7
        %v1201 = vsub.s32 3, %v1200
        %v1202 = vrot.slane %v216, %v1201
        %v1203 = vadd.f32 %v1183, %v1202
        %v1204 = vadd.f32 %v1184, %v1202
        %v1205 = vadd.f32 %v1185, %v1202
        %v1206 = vadd.f32 %v1186, %v1202
        %v1207 = vadd.f32 %v1187, %v1202
        %v1208 = vadd.f32 %v1188, %v1202
        %v1209 = vadd.f32 %v1189, %v1202
        %v1210 = vadd.f32 %v1190, %v1202
        %v1211 = vadd.f32 %v1191, %v1202
        %v1212 = vadd.f32 %v1192, %v1202
        %v1213 = vadd.f32 %v1193, %v1202
        %v1214 = vadd.f32 %v1194, %v1202
        %v1215 = vadd.f32 %v1195, %v1202
        %v1216 = vadd.f32 %v1196, %v1202
        %v1217 = vadd.f32 %v1197, %v1202
        %v1218 = vadd.f32 %v1198, %v1202
        %1219 = vadd.xlane.f32.xlu0 %v398
        %v1220 = vpop.xlane.xlu0 %1219
        %1221 = vadd.xlane.f32.xlu0 %v402
        %v1222 = vpop.xlane.xlu0 %1221
        %1223 = vadd.xlane.f32.xlu0 %v408
        %v1224 = vpop.xlane.xlu0 %1223
        %1225 = vadd.xlane.f32.xlu0 %v412
        %v1226 = vpop.xlane.xlu0 %1225
        %1227 = vadd.xlane.f32.xlu0 %v418
        %v1228 = vpop.xlane.xlu0 %1227
        %1229 = vadd.xlane.f32.xlu0 %v422
        %v1230 = vpop.xlane.xlu0 %1229
        %1231 = vadd.xlane.f32.xlu0 %v428
        %v1232 = vpop.xlane.xlu0 %1231
        %1233 = vadd.xlane.f32.xlu0 %v432
        %v1234 = vpop.xlane.xlu0 %1233
        %1235 = vadd.xlane.f32.xlu0 %v438
        %v1236 = vpop.xlane.xlu0 %1235
        %1237 = vadd.xlane.f32.xlu0 %v442
        %v1238 = vpop.xlane.xlu0 %1237
        %1239 = vadd.xlane.f32.xlu0 %v448
        %v1240 = vpop.xlane.xlu0 %1239
        %1241 = vadd.xlane.f32.xlu0 %v452
        %v1242 = vpop.xlane.xlu0 %1241
        %1243 = vadd.xlane.f32.xlu0 %v458
        %v1244 = vpop.xlane.xlu0 %1243
        %1245 = vadd.xlane.f32.xlu0 %v462
        %v1246 = vpop.xlane.xlu0 %1245
        %1247 = vadd.xlane.f32.xlu0 %v468
        %v1248 = vpop.xlane.xlu0 %1247
        %1249 = vadd.xlane.f32.xlu0 %v472
        %v1250 = vpop.xlane.xlu0 %1249
        %v1251 = vmul.f32 %v1220, 0.0078125
        %v1252 = vmul.f32 %v1222, 0.0078125
        %v1253 = vmul.f32 %v1224, 0.0078125
        %v1254 = vmul.f32 %v1226, 0.0078125
        %v1255 = vmul.f32 %v1228, 0.0078125
        %v1256 = vmul.f32 %v1230, 0.0078125
        %v1257 = vmul.f32 %v1232, 0.0078125
        %v1258 = vmul.f32 %v1234, 0.0078125
        %v1259 = vmul.f32 %v1236, 0.0078125
        %v1260 = vmul.f32 %v1238, 0.0078125
        %v1261 = vmul.f32 %v1240, 0.0078125
        %v1262 = vmul.f32 %v1242, 0.0078125
        %v1263 = vmul.f32 %v1244, 0.0078125
        %v1264 = vmul.f32 %v1246, 0.0078125
        %v1265 = vmul.f32 %v1248, 0.0078125
        %v1266 = vmul.f32 %v1250, 0.0078125
        %v1267 = vmul.f32 %v398, %v398
        %v1268 = vmul.f32 %v402, %v402
        %v1269 = vmul.f32 %v408, %v408
        %v1270 = vmul.f32 %v412, %v412
        %v1271 = vmul.f32 %v418, %v418
        %v1272 = vmul.f32 %v422, %v422
        %v1273 = vmul.f32 %v428, %v428
        %v1274 = vmul.f32 %v432, %v432
        %v1275 = vmul.f32 %v438, %v438
        %v1276 = vmul.f32 %v442, %v442
        %v1277 = vmul.f32 %v448, %v448
        %v1278 = vmul.f32 %v452, %v452
        %v1279 = vmul.f32 %v458, %v458
        %v1280 = vmul.f32 %v462, %v462
        %v1281 = vmul.f32 %v468, %v468
        %v1282 = vmul.f32 %v472, %v472
        %1283 = vadd.xlane.f32.xlu0 %v1267
        %v1284 = vpop.xlane.xlu0 %1283
        %1285 = vadd.xlane.f32.xlu0 %v1268
        %v1286 = vpop.xlane.xlu0 %1285
        %1287 = vadd.xlane.f32.xlu0 %v1269
        %v1288 = vpop.xlane.xlu0 %1287
        %1289 = vadd.xlane.f32.xlu0 %v1270
        %v1290 = vpop.xlane.xlu0 %1289
        %1291 = vadd.xlane.f32.xlu0 %v1271
        %v1292 = vpop.xlane.xlu0 %1291
        %1293 = vadd.xlane.f32.xlu0 %v1272
        %v1294 = vpop.xlane.xlu0 %1293
        %1295 = vadd.xlane.f32.xlu0 %v1273
        %v1296 = vpop.xlane.xlu0 %1295
        %1297 = vadd.xlane.f32.xlu0 %v1274
        %v1298 = vpop.xlane.xlu0 %1297
        %1299 = vadd.xlane.f32.xlu0 %v1275
        %v1300 = vpop.xlane.xlu0 %1299
        %1301 = vadd.xlane.f32.xlu0 %v1276
        %v1302 = vpop.xlane.xlu0 %1301
        %1303 = vadd.xlane.f32.xlu0 %v1277
        %v1304 = vpop.xlane.xlu0 %1303
        %1305 = vadd.xlane.f32.xlu0 %v1278
        %v1306 = vpop.xlane.xlu0 %1305
        %1307 = vadd.xlane.f32.xlu0 %v1279
        %v1308 = vpop.xlane.xlu0 %1307
        %1309 = vadd.xlane.f32.xlu0 %v1280
        %v1310 = vpop.xlane.xlu0 %1309
        %1311 = vadd.xlane.f32.xlu0 %v1281
        %v1312 = vpop.xlane.xlu0 %1311
        %1313 = vadd.xlane.f32.xlu0 %v1282
        %v1314 = vpop.xlane.xlu0 %1313
        %v1315 = vmul.f32 %v1284, 0.0078125
        %v1316 = vmul.f32 %v1286, 0.0078125
        %v1317 = vmul.f32 %v1288, 0.0078125
        %v1318 = vmul.f32 %v1290, 0.0078125
        %v1319 = vmul.f32 %v1292, 0.0078125
        %v1320 = vmul.f32 %v1294, 0.0078125
        %v1321 = vmul.f32 %v1296, 0.0078125
        %v1322 = vmul.f32 %v1298, 0.0078125
        %v1323 = vmul.f32 %v1300, 0.0078125
        %v1324 = vmul.f32 %v1302, 0.0078125
        %v1325 = vmul.f32 %v1304, 0.0078125
        %v1326 = vmul.f32 %v1306, 0.0078125
        %v1327 = vmul.f32 %v1308, 0.0078125
        %v1328 = vmul.f32 %v1310, 0.0078125
        %v1329 = vmul.f32 %v1312, 0.0078125
        %v1330 = vmul.f32 %v1314, 0.0078125
        %v1331 = vmul.f32 %v1251, %v1251
        %v1332 = vmul.f32 %v1252, %v1252
        %v1333 = vmul.f32 %v1253, %v1253
        %v1334 = vmul.f32 %v1254, %v1254
        %v1335 = vmul.f32 %v1255, %v1255
        %v1336 = vmul.f32 %v1256, %v1256
        %v1337 = vmul.f32 %v1257, %v1257
        %v1338 = vmul.f32 %v1258, %v1258
        %v1339 = vmul.f32 %v1259, %v1259
        %v1340 = vmul.f32 %v1260, %v1260
        %v1341 = vmul.f32 %v1261, %v1261
        %v1342 = vmul.f32 %v1262, %v1262
        %v1343 = vmul.f32 %v1263, %v1263
        %v1344 = vmul.f32 %v1264, %v1264
        %v1345 = vmul.f32 %v1265, %v1265
        %v1346 = vmul.f32 %v1266, %v1266
        %v1347 = vsub.f32 %v1315, %v1331
        %v1348 = vsub.f32 %v1316, %v1332
        %v1349 = vsub.f32 %v1317, %v1333
        %v1350 = vsub.f32 %v1318, %v1334
        %v1351 = vsub.f32 %v1319, %v1335
        %v1352 = vsub.f32 %v1320, %v1336
        %v1353 = vsub.f32 %v1321, %v1337
        %v1354 = vsub.f32 %v1322, %v1338
        %v1355 = vsub.f32 %v1323, %v1339
        %v1356 = vsub.f32 %v1324, %v1340
        %v1357 = vsub.f32 %v1325, %v1341
        %v1358 = vsub.f32 %v1326, %v1342
        %v1359 = vsub.f32 %v1327, %v1343
        %v1360 = vsub.f32 %v1328, %v1344
        %v1361 = vsub.f32 %v1329, %v1345
        %v1362 = vsub.f32 %v1330, %v1346
        %v1363 = vmax.f32 %v1347, 0.0
        %v1364 = vmax.f32 %v1348, 0.0
        %v1365 = vmax.f32 %v1349, 0.0
        %v1366 = vmax.f32 %v1350, 0.0
        %v1367 = vmax.f32 %v1351, 0.0
        %v1368 = vmax.f32 %v1352, 0.0
        %v1369 = vmax.f32 %v1353, 0.0
        %v1370 = vmax.f32 %v1354, 0.0
        %v1371 = vmax.f32 %v1355, 0.0
        %v1372 = vmax.f32 %v1356, 0.0
        %v1373 = vmax.f32 %v1357, 0.0
        %v1374 = vmax.f32 %v1358, 0.0
        %v1375 = vmax.f32 %v1359, 0.0
        %v1376 = vmax.f32 %v1360, 0.0
        %v1377 = vmax.f32 %v1361, 0.0
        %v1378 = vmax.f32 %v1362, 0.0
        %v1379 = vadd.f32 %v1363, 1e-05
        %v1380 = vadd.f32 %v1364, 1e-05
        %v1381 = vadd.f32 %v1365, 1e-05
        %v1382 = vadd.f32 %v1366, 1e-05
        %v1383 = vadd.f32 %v1367, 1e-05
        %v1384 = vadd.f32 %v1368, 1e-05
        %v1385 = vadd.f32 %v1369, 1e-05
        %v1386 = vadd.f32 %v1370, 1e-05
        %v1387 = vadd.f32 %v1371, 1e-05
        %v1388 = vadd.f32 %v1372, 1e-05
        %v1389 = vadd.f32 %v1373, 1e-05
        %v1390 = vadd.f32 %v1374, 1e-05
        %v1391 = vadd.f32 %v1375, 1e-05
        %v1392 = vadd.f32 %v1376, 1e-05
        %v1393 = vadd.f32 %v1377, 1e-05
        %v1394 = vadd.f32 %v1378, 1e-05
        %v1395 = vrsqrt.pop %v1379
        %v1396 = vrsqrt.pop %v1380
        %v1397 = vrsqrt.pop %v1381
        %v1398 = vrsqrt.pop %v1382
        %v1399 = vrsqrt.pop %v1383
        %v1400 = vrsqrt.pop %v1384
        %v1401 = vrsqrt.pop %v1385
        %v1402 = vrsqrt.pop %v1386
        %v1403 = vrsqrt.pop %v1387
        %v1404 = vrsqrt.pop %v1388
        %v1405 = vrsqrt.pop %v1389
        %v1406 = vrsqrt.pop %v1390
        %v1407 = vrsqrt.pop %v1391
        %v1408 = vrsqrt.pop %v1392
        %v1409 = vrsqrt.pop %v1393
        %v1410 = vrsqrt.pop %v1394
        %v1411 = vmul.f32 %v1251, %v1395
        %v1412 = vmul.f32 %v1252, %v1396
        %v1413 = vmul.f32 %v1253, %v1397
        %v1414 = vmul.f32 %v1254, %v1398
        %v1415 = vmul.f32 %v1255, %v1399
        %v1416 = vmul.f32 %v1256, %v1400
        %v1417 = vmul.f32 %v1257, %v1401
        %v1418 = vmul.f32 %v1258, %v1402
        %v1419 = vmul.f32 %v1259, %v1403
        %v1420 = vmul.f32 %v1260, %v1404
        %v1421 = vmul.f32 %v1261, %v1405
        %v1422 = vmul.f32 %v1262, %v1406
        %v1423 = vmul.f32 %v1263, %v1407
        %v1424 = vmul.f32 %v1264, %v1408
        %v1425 = vmul.f32 %v1265, %v1409
        %v1426 = vmul.f32 %v1266, %v1410
        %v1427 = vmul.f32 %v398, %v1395
        %v1428 = vmul.f32 %v402, %v1396
        %v1429 = vmul.f32 %v408, %v1397
        %v1430 = vmul.f32 %v412, %v1398
        %v1431 = vmul.f32 %v418, %v1399
        %v1432 = vmul.f32 %v422, %v1400
        %v1433 = vmul.f32 %v428, %v1401
        %v1434 = vmul.f32 %v432, %v1402
        %v1435 = vmul.f32 %v438, %v1403
        %v1436 = vmul.f32 %v442, %v1404
        %v1437 = vmul.f32 %v448, %v1405
        %v1438 = vmul.f32 %v452, %v1406
        %v1439 = vmul.f32 %v458, %v1407
        %v1440 = vmul.f32 %v462, %v1408
        %v1441 = vmul.f32 %v468, %v1409
        %v1442 = vmul.f32 %v472, %v1410
        %v1443 = vsub.f32 %v1427, %v1411
        %v1444 = vsub.f32 %v1428, %v1412
        %v1445 = vsub.f32 %v1429, %v1413
        %v1446 = vsub.f32 %v1430, %v1414
        %v1447 = vsub.f32 %v1431, %v1415
        %v1448 = vsub.f32 %v1432, %v1416
        %v1449 = vsub.f32 %v1433, %v1417
        %v1450 = vsub.f32 %v1434, %v1418
        %v1451 = vsub.f32 %v1435, %v1419
        %v1452 = vsub.f32 %v1436, %v1420
        %v1453 = vsub.f32 %v1437, %v1421
        %v1454 = vsub.f32 %v1438, %v1422
        %v1455 = vsub.f32 %v1439, %v1423
        %v1456 = vsub.f32 %v1440, %v1424
        %v1457 = vsub.f32 %v1441, %v1425
        %v1458 = vsub.f32 %v1442, %v1426
        %v1459 = vlaneseq
        %v1460 = vshrl.u32 %v1459, 7
        %v1461 = vsub.s32 4, %v1460
        %v1462 = vrot.slane %v216, %v1461
        %v1463 = vmul.f32 %v1443, %v1462
        %v1464 = vmul.f32 %v1444, %v1462
        %v1465 = vmul.f32 %v1445, %v1462
        %v1466 = vmul.f32 %v1446, %v1462
        %v1467 = vmul.f32 %v1447, %v1462
        %v1468 = vmul.f32 %v1448, %v1462
        %v1469 = vmul.f32 %v1449, %v1462
        %v1470 = vmul.f32 %v1450, %v1462
        %v1471 = vmul.f32 %v1451, %v1462
        %v1472 = vmul.f32 %v1452, %v1462
        %v1473 = vmul.f32 %v1453, %v1462
        %v1474 = vmul.f32 %v1454, %v1462
        %v1475 = vmul.f32 %v1455, %v1462
        %v1476 = vmul.f32 %v1456, %v1462
        %v1477 = vmul.f32 %v1457, %v1462
        %v1478 = vmul.f32 %v1458, %v1462
        %v1479 = vlaneseq
        %v1480 = vshrl.u32 %v1479, 7
        %v1481 = vsub.s32 5, %v1480
        %v1482 = vrot.slane %v216, %v1481
        %v1483 = vadd.f32 %v1463, %v1482
        %v1484 = vadd.f32 %v1464, %v1482
        %v1485 = vadd.f32 %v1465, %v1482
        %v1486 = vadd.f32 %v1466, %v1482
        %v1487 = vadd.f32 %v1467, %v1482
        %v1488 = vadd.f32 %v1468, %v1482
        %v1489 = vadd.f32 %v1469, %v1482
        %v1490 = vadd.f32 %v1470, %v1482
        %v1491 = vadd.f32 %v1471, %v1482
        %v1492 = vadd.f32 %v1472, %v1482
        %v1493 = vadd.f32 %v1473, %v1482
        %v1494 = vadd.f32 %v1474, %v1482
        %v1495 = vadd.f32 %v1475, %v1482
        %v1496 = vadd.f32 %v1476, %v1482
        %v1497 = vadd.f32 %v1477, %v1482
        %v1498 = vadd.f32 %v1478, %v1482
        %v1499 = vadd.f32 %v1203, %v1483
        %v1500 = vadd.f32 %v1204, %v1484
        %v1501 = vadd.f32 %v1205, %v1485
        %v1502 = vadd.f32 %v1206, %v1486
        %v1503 = vadd.f32 %v1207, %v1487
        %v1504 = vadd.f32 %v1208, %v1488
        %v1505 = vadd.f32 %v1209, %v1489
        %v1506 = vadd.f32 %v1210, %v1490
        %v1507 = vadd.f32 %v1211, %v1491
        %v1508 = vadd.f32 %v1212, %v1492
        %v1509 = vadd.f32 %v1213, %v1493
        %v1510 = vadd.f32 %v1214, %v1494
        %v1511 = vadd.f32 %v1215, %v1495
        %v1512 = vadd.f32 %v1216, %v1496
        %v1513 = vadd.f32 %v1217, %v1497
        %v1514 = vadd.f32 %v1218, %v1498
        %v1515 = vmax.f32 %v1499, 0.0
        %v1516 = vmax.f32 %v1500, 0.0
        %v1517 = vmax.f32 %v1501, 0.0
        %v1518 = vmax.f32 %v1502, 0.0
        %v1519 = vmax.f32 %v1503, 0.0
        %v1520 = vmax.f32 %v1504, 0.0
        %v1521 = vmax.f32 %v1505, 0.0
        %v1522 = vmax.f32 %v1506, 0.0
        %v1523 = vmax.f32 %v1507, 0.0
        %v1524 = vmax.f32 %v1508, 0.0
        %v1525 = vmax.f32 %v1509, 0.0
        %v1526 = vmax.f32 %v1510, 0.0
        %v1527 = vmax.f32 %v1511, 0.0
        %v1528 = vmax.f32 %v1512, 0.0
        %v1529 = vmax.f32 %v1513, 0.0
        %v1530 = vmax.f32 %v1514, 0.0
        %1531 = vst [vmem:[%s191] sm:$0xff] %v1515
        %1532 = vst [vmem:[%s191 + $0x8] sm:$0xff] %v1516
        %1533 = vst [vmem:[%s191 + $0x10] sm:$0xff] %v1517
        %1534 = vst [vmem:[%s191 + $0x18] sm:$0xff] %v1518
        %1535 = vst [vmem:[%s191 + $0x20] sm:$0xff] %v1519
        %1536 = vst [vmem:[%s191 + $0x28] sm:$0xff] %v1520
        %1537 = vst [vmem:[%s191 + $0x30] sm:$0xff] %v1521
        %1538 = vst [vmem:[%s191 + $0x38] sm:$0xff] %v1522
        %1539 = vst [vmem:[%s191 + $0x40] sm:$0xff] %v1523
        %1540 = vst [vmem:[%s191 + $0x48] sm:$0xff] %v1524
        %1541 = vst [vmem:[%s191 + $0x50] sm:$0xff] %v1525
        %1542 = vst [vmem:[%s191 + $0x58] sm:$0xff] %v1526
        %1543 = vst [vmem:[%s191 + $0x60] sm:$0xff] %v1527
        %1544 = vst [vmem:[%s191 + $0x68] sm:$0xff] %v1528
        %1545 = vst [vmem:[%s191 + $0x70] sm:$0xff] %v1529
        %1546 = vst [vmem:[%s191 + $0x78] sm:$0xff] %v1530
        %s1547 = sand.u32 %s115, 1
        %s1548 = scalar_lea.sflag [#allocation3], %s1547
        %s1549 = sand.u32 %s115, 1
        %s1550 = smul.addr %s1549, 128
        %s1551 = scalar_lea.vmem [#allocation2], %s1550
        // Predicated region
        $region37: #{_lrb_call.1} parent=35 // pred_check
          %p1552 = pneg %p125
        $region38: #{_lrb_call.1} parent=35 // pred_check_branch
          %1554 = sbr.rel (%p1552) target = $region40
        $region39: #{_lrb_call.1} parent=35 // pred_region
          %s1555 = smul.u32 16, %s18
          %s1557 = ssub.s32 2048, 2048
          %1558 = vsyncadd %s1548, %s1557
          %s1559 = smul.addr %s1555, 128
          %s1560 = scalar_lea.hbm %s4, %s1559
          %s1561 = sshll.u32 %s1551, 4
          %s1562 = int_to_ptr.vmem [resolvable:$true] %s1561
          %1567 = dma.vmem_to_hbm [thread:$0]  %s1562, 2048, %s1560, %s1548, 128, 128, 8
        $region40: #{_lrb_call.1} parent=35 // pred_fallthru
          _
      $region36: #{_lrb_call.1} parent=5 // pred_fallthru
        _
      %p1568 = scmp.le.s32.totalorder 2, %s13
      // Predicated region
      $region41: #{_lrb_call.1} parent=5 // pred_check
        %p1569 = pneg %p1568
      $region42: #{_lrb_call.1} parent=5 // pred_check_branch
        %1571 = sbr.rel (%p1569) target = $region44
      $region43: #{_lrb_call.1} parent=5 // pred_region
        %s1572 = ssub.s32 %s13, 2
        // Predicated region
        $region45: #{_lrb_call.1} parent=43 // pred_check
          %p1573 = pneg %p131
        $region46: #{_lrb_call.1} parent=43 // pred_check_branch
          %1575 = sbr.rel (%p1573) target = $region48
        $region47: #{_lrb_call.1} parent=43 // pred_region
          %s1576 = sand.u32 %s116, 1
          %s1577 = scalar_lea.sflag [#allocation3], %s1576
          %s1578 = sand.u32 %s116, 1
          %s1579 = smul.addr %s1578, 128
          %s1580 = scalar_lea.vmem [#allocation2], %s1579
          %1581 = dma.done %s1577, 2048
        $region48: #{_lrb_call.1} parent=43 // pred_fallthru
          _
      $region44: #{_lrb_call.1} parent=5 // pred_fallthru
        _
    $region6: #{_lrb_call.1} parent=1 // loop_footer
      %s17 = sadd.s32 1, %s13
    $region7: #{_lrb_call.1} parent=1 // loop_footer_branch
      %12 = sbr.rel target = $region3
    $region8: #{_lrb_call.1} parent=1 // loop_exit
      _
    %1582 = vsyncpa [#allocation3], 1
    %s1583 = scalar_lea.sflag [#allocation3], 1
    %1584 = vsyncpa %s1583, 1

</llo_original>
